<compile_context>
chip_gen: v6e
topology: v6e:2x2x1
jax: 0.10.0
libtpu: 0.0.40
codegen_flags: <defaults>
</compile_context>

<pallas_src>
import numpy as np
import jax
import jax.numpy as jnp
from jax.experimental import pallas as pl
from jax.experimental.pallas import tpu as pltpu

_B = 8  # images per grid step; must stay a multiple of 8 (sublane tile)


# ----------------------------------------------------------------------------
# Fused kernel: whole forward pass for a block of _B images.
# Activation layout inside the kernel: 2-D slabs (H * _B, W*C) with
# row = h*_B + b  and  lane = w*C + c.
# ----------------------------------------------------------------------------
def _cnn_fused_kernel(x_ref, m1e_ref, m1o_ref, b1_ref, m2e_ref, m2o_ref, b2_ref,
                      wfc1_ref, bfc1_ref, wfc2_ref, bfc2_ref, o_ref):
    B = _B
    f32 = jnp.float32

    # ---- Conv1 (1->10, k=5): 5 row-matmuls with K=32.  The width direction of
    #      the 2x2 max-pool is folded into even/odd-column weight matrices. ----
    x2 = x_ref[...].reshape(32 * B, 32)                      # row = h_in*B + b, lane = w_in
    ze = jnp.dot(x2[0:28 * B, :], m1e_ref[0], preferred_element_type=f32)
    zo = jnp.dot(x2[0:28 * B, :], m1o_ref[0], preferred_element_type=f32)
    for di in range(1, 5):
        xd = x2[di * B:(di + 28) * B, :]                     # (28*B, 32)
        ze = ze + jnp.dot(xd, m1e_ref[di], preferred_element_type=f32)
        zo = zo + jnp.dot(xd, m1o_ref[di], preferred_element_type=f32)
    z = jnp.maximum(ze, zo).reshape(14, 2 * B, 140)          # max-pool over width
    z = jnp.maximum(z[:, :B, :], z[:, B:, :])                # max-pool over height
    h1 = jnp.maximum(z.reshape(14 * B, 140) + b1_ref[...], 0.0)   # bias + ReLU

    # ---- Conv2 (10->20, k=5): 5 row-matmuls with K=140, lane = w*20 + c_out ----
    # TODO(synk): nn.Dropout() is identity in eval mode; training-mode RNG masking not implemented.
    z2e = jnp.dot(h1[0:10 * B, :], m2e_ref[0], preferred_element_type=f32)
    z2o = jnp.dot(h1[0:10 * B, :], m2o_ref[0], preferred_element_type=f32)
    for di in range(1, 5):
        hd = h1[di * B:(di + 10) * B, :]                     # (10*B, 140)
        z2e = z2e + jnp.dot(hd, m2e_ref[di], preferred_element_type=f32)
        z2o = z2o + jnp.dot(hd, m2o_ref[di], preferred_element_type=f32)
    z2 = jnp.maximum(z2e, z2o).reshape(5, 2 * B, 100)        # pool over width
    z2 = jnp.maximum(z2[:, :B, :], z2[:, B:, :])             # pool over height
    h2 = jnp.maximum(z2.reshape(5 * B, 100) + b2_ref[...], 0.0)   # (5*B, 100)

    # ---- FC layers: flatten in (C,H,W) order folded into permuted fc1 weights ----
    s = jnp.dot(h2[0:B, :], wfc1_ref[0], preferred_element_type=f32)
    for h in range(1, 5):
        s = s + jnp.dot(h2[h * B:(h + 1) * B, :], wfc1_ref[h],
                        preferred_element_type=f32)
    s = s + bfc1_ref[...]
    hid = 1.0 / (1.0 + jnp.exp(-s))                          # sigmoid
    o_ref[...] = (jnp.dot(hid, wfc2_ref[...], preferred_element_type=f32)
                  + bfc2_ref[...])                           # (B, 128), lane-dense


# ----------------------------------------------------------------------------
# One-time weight preparation (host side, pure relayout of the PyTorch weights).
# ----------------------------------------------------------------------------
def prepare_params(w1, b1, w2, b2, fc1_w, fc1_b, fc2_w, fc2_b):
    w1 = np.asarray(w1, np.float32)        # (10, 1, 5, 5)   (co, ci, kh, kw)
    w2 = np.asarray(w2, np.float32)        # (20, 10, 5, 5)
    fc1_w = np.asarray(fc1_w, np.float32)  # (64, 500)
    fc2_w = np.asarray(fc2_w, np.float32)  # (36, 64)

    # Conv1: out[h, w, co] with lane = w*10+co; even / odd output columns.
    m1e = np.zeros((5, 32, 140), np.float32)
    m1o = np.zeros((5, 32, 140), np.float32)
    for di in range(5):
        for w in range(14):
            for dj in range(5):
                m1e[di, 2 * w + dj, w * 10:(w + 1) * 10] = w1[:, 0, di, dj]
                m1o[di, 2 * w + 1 + dj, w * 10:(w + 1) * 10] = w1[:, 0, di, dj]

    # Conv2: input lane = j*10+ci, output lane = w*20+co.
    m2e = np.zeros((5, 140, 100), np.float32)
    m2o = np.zeros((5, 140, 100), np.float32)
    for di in range(5):
        for w in range(5):
            for dj in range(5):
                for ci in range(10):
                    m2e[di, (2 * w + dj) * 10 + ci, w * 20:(w + 1) * 20] = w2[:, ci, di, dj]
                    m2o[di, (2 * w + 1 + dj) * 10 + ci, w * 20:(w + 1) * 20] = w2[:, ci, di, dj]

    # FC1 with the (C,H,W) flatten order folded in: split per conv-output row h.
    wfc1 = np.zeros((5, 100, 64), np.float32)
    for h in range(5):
        for w in range(5):
            for co in range(20):
                wfc1[h, w * 20 + co, :] = fc1_w[:, co * 25 + h * 5 + w]

    # FC2 padded to 128 output lanes (extra columns are zero -> sliced off later).
    wfc2 = np.zeros((64, 128), np.float32)
    wfc2[:, :36] = fc2_w.T
    bfc2 = np.zeros((1, 128), np.float32)
    bfc2[0, :36] = np.asarray(fc2_b, np.float32)

    return dict(
        m1e=jnp.asarray(m1e), m1o=jnp.asarray(m1o),
        b1=jnp.asarray(np.tile(np.asarray(b1, np.float32), 14).reshape(1, 140)),
        m2e=jnp.asarray(m2e), m2o=jnp.asarray(m2o),
        b2=jnp.asarray(np.tile(np.asarray(b2, np.float32), 5).reshape(1, 100)),
        wfc1=jnp.asarray(wfc1),
        bfc1=jnp.asarray(np.asarray(fc1_b, np.float32).reshape(1, 64)),
        wfc2=jnp.asarray(wfc2), bfc2=jnp.asarray(bfc2),
    )


# ----------------------------------------------------------------------------
# Wrapper: layout plumbing only (transpose, batch padding, output slice).
# ----------------------------------------------------------------------------
def cnn_forward(x_nchw, p):
    n = x_nchw.shape[0]
    nb = ((n + _B - 1) // _B) * _B
    x = jnp.transpose(x_nchw[:, 0, :, :], (1, 0, 2))         # (H=32, N, W=32)
    if nb != n:
        x = jnp.pad(x, ((0, 0), (0, nb - n), (0, 0)))

    out = pl.pallas_call(
        _cnn_fused_kernel,
        out_shape=jax.ShapeDtypeStruct((nb, 128), jnp.float32),
        grid=(nb // _B,),
        in_specs=[
            pl.BlockSpec((32, _B, 32), lambda i: (0, i, 0)),      # input images
            pl.BlockSpec((5, 32, 140), lambda i: (0, 0, 0)),      # conv1 even-w
            pl.BlockSpec((5, 32, 140), lambda i: (0, 0, 0)),      # conv1 odd-w
            pl.BlockSpec((1, 140), lambda i: (0, 0)),             # conv1 bias
            pl.BlockSpec((5, 140, 100), lambda i: (0, 0, 0)),     # conv2 even-w
            pl.BlockSpec((5, 140, 100), lambda i: (0, 0, 0)),     # conv2 odd-w
            pl.BlockSpec((1, 100), lambda i: (0, 0)),             # conv2 bias
            pl.BlockSpec((5, 100, 64), lambda i: (0, 0, 0)),      # fc1 (permuted)
            pl.BlockSpec((1, 64), lambda i: (0, 0)),              # fc1 bias
            pl.BlockSpec((64, 128), lambda i: (0, 0)),            # fc2 (padded)
            pl.BlockSpec((1, 128), lambda i: (0, 0)),             # fc2 bias (padded)
        ],
        out_specs=pl.BlockSpec((_B, 128), lambda i: (i, 0)),
        compiler_params=pltpu.CompilerParams(dimension_semantics=("parallel",)),
    )(x, p['m1e'], p['m1o'], p['b1'], p['m2e'], p['m2o'], p['b2'],
      p['wfc1'], p['bfc1'], p['wfc2'], p['bfc2'])
    return out[:n, :36]


# ----------------------------------------------------------------------------
# Pure-JAX reference (PyTorch conventions) for correctness checking.
# ----------------------------------------------------------------------------
def reference_forward(x, w1, b1, w2, b2, fc1_w, fc1_b, fc2_w, fc2_b):
    dn = ('NCHW', 'OIHW', 'NCHW')
    y = jax.lax.conv_general_dilated(x, w1, (1, 1), 'VALID', dimension_numbers=dn)
    y = y + b1.reshape(1, -1, 1, 1)
    y = jax.lax.reduce_window(y, -jnp.inf, jax.lax.max, (1, 1, 2, 2), (1, 1, 2, 2), 'VALID')
    y = jnp.maximum(y, 0.0)
    y = jax.lax.conv_general_dilated(y, w2, (1, 1), 'VALID', dimension_numbers=dn)
    y = y + b2.reshape(1, -1, 1, 1)
    y = jax.lax.reduce_window(y, -jnp.inf, jax.lax.max, (1, 1, 2, 2), (1, 1, 2, 2), 'VALID')
    y = jnp.maximum(y, 0.0)
    y = y.reshape(y.shape[0], -1)                    # (C, H, W) flatten order
    y = jax.nn.sigmoid(y @ fc1_w.T + fc1_b)
    return y @ fc2_w.T + fc2_b


if __name__ == "__main__":
    key = jax.random.PRNGKey(0)
    kx, k1, k2, k3, k4, k5, k6, k7, k8 = jax.random.split(key, 9)

    n = 16
    x = jax.random.normal(kx, (n, 1, 32, 32), jnp.float32)
    w1 = jax.random.normal(k1, (10, 1, 5, 5), jnp.float32) * 0.1     # (out, in, kh, kw)
    b1 = jax.random.normal(k2, (10,), jnp.float32) * 0.1
    w2 = jax.random.normal(k3, (20, 10, 5, 5), jnp.float32) * 0.1
    b2 = jax.random.normal(k4, (20,), jnp.float32) * 0.1
    fc1_w = jax.random.normal(k5, (64, 500), jnp.float32) * 0.05     # (out, in)
    fc1_b = jax.random.normal(k6, (64,), jnp.float32) * 0.05
    fc2_w = jax.random.normal(k7, (36, 64), jnp.float32) * 0.05
    fc2_b = jax.random.normal(k8, (36,), jnp.float32) * 0.05

    params = prepare_params(w1, b1, w2, b2, fc1_w, fc1_b, fc2_w, fc2_b)

    out = jax.block_until_ready(cnn_forward(x, params))
    assert out.shape == (n, 36) and out.dtype == jnp.float32

    ref = reference_forward(x, w1, b1, w2, b2, fc1_w, fc1_b, fc2_w, fc2_b)
    max_err = float(jnp.max(jnp.abs(out - ref)))
    assert max_err < 2e-2, f"mismatch vs reference: {max_err}"

    print("KERNEL_OK")
</pallas_src>

<mosaic_0001>
module attributes {stable_mosaic.version = 11 : i64} {
  func.func @_cnn_fused_kernel(%arg0: i32, %arg1: memref<32x8x32xf32, #tpu.memory_space<vmem>>, %arg2: memref<5x32x140xf32, #tpu.memory_space<vmem>>, %arg3: memref<5x32x140xf32, #tpu.memory_space<vmem>>, %arg4: memref<1x140xf32, #tpu.memory_space<vmem>>, %arg5: memref<5x140x100xf32, #tpu.memory_space<vmem>>, %arg6: memref<5x140x100xf32, #tpu.memory_space<vmem>>, %arg7: memref<1x100xf32, #tpu.memory_space<vmem>>, %arg8: memref<5x100x64xf32, #tpu.memory_space<vmem>>, %arg9: memref<1x64xf32, #tpu.memory_space<vmem>>, %arg10: memref<64x128xf32, #tpu.memory_space<vmem>>, %arg11: memref<1x128xf32, #tpu.memory_space<vmem>>, %arg12: memref<8x128xf32, #tpu.memory_space<vmem>>) attributes {dimension_semantics = [#tpu.dimension_semantics<parallel>], iteration_bounds = array<i64: 2>, scalar_prefetch = 0 : i64, scratch_operands = 0 : i64, tpu.core_type = #tpu.core_type<tc>, window_params = [{transform_indices = @transform_0, window_bounds = array<i64: 32, 8, 32>}, {pipeline_mode = #tpu.pipeline_mode<synchronous>, transform_indices = @transform_1, window_bounds = array<i64: 5, 32, 140>}, {pipeline_mode = #tpu.pipeline_mode<synchronous>, transform_indices = @transform_2, window_bounds = array<i64: 5, 32, 140>}, {pipeline_mode = #tpu.pipeline_mode<synchronous>, transform_indices = @transform_3, window_bounds = array<i64: 1, 140>}, {pipeline_mode = #tpu.pipeline_mode<synchronous>, transform_indices = @transform_4, window_bounds = array<i64: 5, 140, 100>}, {pipeline_mode = #tpu.pipeline_mode<synchronous>, transform_indices = @transform_5, window_bounds = array<i64: 5, 140, 100>}, {pipeline_mode = #tpu.pipeline_mode<synchronous>, transform_indices = @transform_6, window_bounds = array<i64: 1, 100>}, {pipeline_mode = #tpu.pipeline_mode<synchronous>, transform_indices = @transform_7, window_bounds = array<i64: 5, 100, 64>}, {pipeline_mode = #tpu.pipeline_mode<synchronous>, transform_indices = @transform_8, window_bounds = array<i64: 1, 64>}, {pipeline_mode = #tpu.pipeline_mode<synchronous>, transform_indices = @transform_9, window_bounds = array<i64: 64, 128>}, {pipeline_mode = #tpu.pipeline_mode<synchronous>, transform_indices = @transform_10, window_bounds = array<i64: 1, 128>}, {transform_indices = @transform_11, window_bounds = array<i64: 8, 128>}]} {
    %c0 = arith.constant 0 : index
    %c0_0 = arith.constant 0 : index
    %c0_1 = arith.constant 0 : index
    %0 = vector.load %arg1[%c0, %c0_0, %c0_1] : memref<32x8x32xf32, #tpu.memory_space<vmem>>, vector<32x8x32xf32>
    %1 = vector.shape_cast %0 : vector<32x8x32xf32> to vector<256x32xf32>
    %2 = vector.extract_strided_slice %1 {offsets = [0, 0], sizes = [224, 32], strides = [1, 1]} : vector<256x32xf32> to vector<224x32xf32>
    %c0_2 = arith.constant 0 : index
    %c0_3 = arith.constant 0 : index
    %c0_4 = arith.constant 0 : index
    %3 = vector.load %arg2[%c0_2, %c0_3, %c0_4] : memref<5x32x140xf32, #tpu.memory_space<vmem>>, vector<1x32x140xf32>
    %4 = vector.shape_cast %3 : vector<1x32x140xf32> to vector<32x140xf32>
    %cst = arith.constant dense<0.000000e+00> : vector<224x140xf32>
    %5 = tpu.matmul %2, %4, %cst {dimension_numbers = #tpu.dot_dimension_numbers<[1], [0], [0], [1], [0, 0, 1, 1], [], []>} : vector<224x32xf32>, vector<32x140xf32>, vector<224x140xf32> -> vector<224x140xf32>
    %6 = vector.extract_strided_slice %1 {offsets = [0, 0], sizes = [224, 32], strides = [1, 1]} : vector<256x32xf32> to vector<224x32xf32>
    %c0_5 = arith.constant 0 : index
    %c0_6 = arith.constant 0 : index
    %c0_7 = arith.constant 0 : index
    %7 = vector.load %arg3[%c0_5, %c0_6, %c0_7] : memref<5x32x140xf32, #tpu.memory_space<vmem>>, vector<1x32x140xf32>
    %8 = vector.shape_cast %7 : vector<1x32x140xf32> to vector<32x140xf32>
    %cst_8 = arith.constant dense<0.000000e+00> : vector<224x140xf32>
    %9 = tpu.matmul %6, %8, %cst_8 {dimension_numbers = #tpu.dot_dimension_numbers<[1], [0], [0], [1], [0, 0, 1, 1], [], []>} : vector<224x32xf32>, vector<32x140xf32>, vector<224x140xf32> -> vector<224x140xf32>
    %10 = vector.extract_strided_slice %1 {offsets = [8, 0], sizes = [224, 32], strides = [1, 1]} : vector<256x32xf32> to vector<224x32xf32>
    %c1 = arith.constant 1 : index
    %c0_9 = arith.constant 0 : index
    %c0_10 = arith.constant 0 : index
    %11 = vector.load %arg2[%c1, %c0_9, %c0_10] : memref<5x32x140xf32, #tpu.memory_space<vmem>>, vector<1x32x140xf32>
    %12 = vector.shape_cast %11 : vector<1x32x140xf32> to vector<32x140xf32>
    %cst_11 = arith.constant dense<0.000000e+00> : vector<224x140xf32>
    %13 = tpu.matmul %10, %12, %cst_11 {dimension_numbers = #tpu.dot_dimension_numbers<[1], [0], [0], [1], [0, 0, 1, 1], [], []>} : vector<224x32xf32>, vector<32x140xf32>, vector<224x140xf32> -> vector<224x140xf32>
    %14 = arith.addf %5, %13 : vector<224x140xf32>
    %c1_12 = arith.constant 1 : index
    %c0_13 = arith.constant 0 : index
    %c0_14 = arith.constant 0 : index
    %15 = vector.load %arg3[%c1_12, %c0_13, %c0_14] : memref<5x32x140xf32, #tpu.memory_space<vmem>>, vector<1x32x140xf32>
    %16 = vector.shape_cast %15 : vector<1x32x140xf32> to vector<32x140xf32>
    %cst_15 = arith.constant dense<0.000000e+00> : vector<224x140xf32>
    %17 = tpu.matmul %10, %16, %cst_15 {dimension_numbers = #tpu.dot_dimension_numbers<[1], [0], [0], [1], [0, 0, 1, 1], [], []>} : vector<224x32xf32>, vector<32x140xf32>, vector<224x140xf32> -> vector<224x140xf32>
    %18 = arith.addf %9, %17 : vector<224x140xf32>
    %19 = vector.extract_strided_slice %1 {offsets = [16, 0], sizes = [224, 32], strides = [1, 1]} : vector<256x32xf32> to vector<224x32xf32>
    %c2 = arith.constant 2 : index
    %c0_16 = arith.constant 0 : index
    %c0_17 = arith.constant 0 : index
    %20 = vector.load %arg2[%c2, %c0_16, %c0_17] : memref<5x32x140xf32, #tpu.memory_space<vmem>>, vector<1x32x140xf32>
    %21 = vector.shape_cast %20 : vector<1x32x140xf32> to vector<32x140xf32>
    %cst_18 = arith.constant dense<0.000000e+00> : vector<224x140xf32>
    %22 = tpu.matmul %19, %21, %cst_18 {dimension_numbers = #tpu.dot_dimension_numbers<[1], [0], [0], [1], [0, 0, 1, 1], [], []>} : vector<224x32xf32>, vector<32x140xf32>, vector<224x140xf32> -> vector<224x140xf32>
    %23 = arith.addf %14, %22 : vector<224x140xf32>
    %c2_19 = arith.constant 2 : index
    %c0_20 = arith.constant 0 : index
    %c0_21 = arith.constant 0 : index
    %24 = vector.load %arg3[%c2_19, %c0_20, %c0_21] : memref<5x32x140xf32, #tpu.memory_space<vmem>>, vector<1x32x140xf32>
    %25 = vector.shape_cast %24 : vector<1x32x140xf32> to vector<32x140xf32>
    %cst_22 = arith.constant dense<0.000000e+00> : vector<224x140xf32>
    %26 = tpu.matmul %19, %25, %cst_22 {dimension_numbers = #tpu.dot_dimension_numbers<[1], [0], [0], [1], [0, 0, 1, 1], [], []>} : vector<224x32xf32>, vector<32x140xf32>, vector<224x140xf32> -> vector<224x140xf32>
    %27 = arith.addf %18, %26 : vector<224x140xf32>
    %28 = vector.extract_strided_slice %1 {offsets = [24, 0], sizes = [224, 32], strides = [1, 1]} : vector<256x32xf32> to vector<224x32xf32>
    %c3 = arith.constant 3 : index
    %c0_23 = arith.constant 0 : index
    %c0_24 = arith.constant 0 : index
    %29 = vector.load %arg2[%c3, %c0_23, %c0_24] : memref<5x32x140xf32, #tpu.memory_space<vmem>>, vector<1x32x140xf32>
    %30 = vector.shape_cast %29 : vector<1x32x140xf32> to vector<32x140xf32>
    %cst_25 = arith.constant dense<0.000000e+00> : vector<224x140xf32>
    %31 = tpu.matmul %28, %30, %cst_25 {dimension_numbers = #tpu.dot_dimension_numbers<[1], [0], [0], [1], [0, 0, 1, 1], [], []>} : vector<224x32xf32>, vector<32x140xf32>, vector<224x140xf32> -> vector<224x140xf32>
    %32 = arith.addf %23, %31 : vector<224x140xf32>
    %c3_26 = arith.constant 3 : index
    %c0_27 = arith.constant 0 : index
    %c0_28 = arith.constant 0 : index
    %33 = vector.load %arg3[%c3_26, %c0_27, %c0_28] : memref<5x32x140xf32, #tpu.memory_space<vmem>>, vector<1x32x140xf32>
    %34 = vector.shape_cast %33 : vector<1x32x140xf32> to vector<32x140xf32>
    %cst_29 = arith.constant dense<0.000000e+00> : vector<224x140xf32>
    %35 = tpu.matmul %28, %34, %cst_29 {dimension_numbers = #tpu.dot_dimension_numbers<[1], [0], [0], [1], [0, 0, 1, 1], [], []>} : vector<224x32xf32>, vector<32x140xf32>, vector<224x140xf32> -> vector<224x140xf32>
    %36 = arith.addf %27, %35 : vector<224x140xf32>
    %37 = vector.extract_strided_slice %1 {offsets = [32, 0], sizes = [224, 32], strides = [1, 1]} : vector<256x32xf32> to vector<224x32xf32>
    %c4 = arith.constant 4 : index
    %c0_30 = arith.constant 0 : index
    %c0_31 = arith.constant 0 : index
    %38 = vector.load %arg2[%c4, %c0_30, %c0_31] : memref<5x32x140xf32, #tpu.memory_space<vmem>>, vector<1x32x140xf32>
    %39 = vector.shape_cast %38 : vector<1x32x140xf32> to vector<32x140xf32>
    %cst_32 = arith.constant dense<0.000000e+00> : vector<224x140xf32>
    %40 = tpu.matmul %37, %39, %cst_32 {dimension_numbers = #tpu.dot_dimension_numbers<[1], [0], [0], [1], [0, 0, 1, 1], [], []>} : vector<224x32xf32>, vector<32x140xf32>, vector<224x140xf32> -> vector<224x140xf32>
    %41 = arith.addf %32, %40 : vector<224x140xf32>
    %c4_33 = arith.constant 4 : index
    %c0_34 = arith.constant 0 : index
    %c0_35 = arith.constant 0 : index
    %42 = vector.load %arg3[%c4_33, %c0_34, %c0_35] : memref<5x32x140xf32, #tpu.memory_space<vmem>>, vector<1x32x140xf32>
    %43 = vector.shape_cast %42 : vector<1x32x140xf32> to vector<32x140xf32>
    %cst_36 = arith.constant dense<0.000000e+00> : vector<224x140xf32>
    %44 = tpu.matmul %37, %43, %cst_36 {dimension_numbers = #tpu.dot_dimension_numbers<[1], [0], [0], [1], [0, 0, 1, 1], [], []>} : vector<224x32xf32>, vector<32x140xf32>, vector<224x140xf32> -> vector<224x140xf32>
    %45 = arith.addf %36, %44 : vector<224x140xf32>
    %46 = arith.maximumf %41, %45 : vector<224x140xf32>
    %47 = vector.shape_cast %46 : vector<224x140xf32> to vector<14x16x140xf32>
    %48 = vector.extract_strided_slice %47 {offsets = [0, 0, 0], sizes = [14, 8, 140], strides = [1, 1, 1]} : vector<14x16x140xf32> to vector<14x8x140xf32>
    %49 = vector.extract_strided_slice %47 {offsets = [0, 8, 0], sizes = [14, 8, 140], strides = [1, 1, 1]} : vector<14x16x140xf32> to vector<14x8x140xf32>
    %50 = arith.maximumf %48, %49 : vector<14x8x140xf32>
    %51 = vector.shape_cast %50 : vector<14x8x140xf32> to vector<112x140xf32>
    %c0_37 = arith.constant 0 : index
    %c0_38 = arith.constant 0 : index
    %52 = vector.load %arg4[%c0_37, %c0_38] : memref<1x140xf32, #tpu.memory_space<vmem>>, vector<1x140xf32>
    %53 = vector.broadcast %52 : vector<1x140xf32> to vector<112x140xf32>
    %54 = arith.addf %51, %53 : vector<112x140xf32>
    %cst_39 = arith.constant 0.000000e+00 : f32
    %55 = vector.broadcast %cst_39 : f32 to vector<112x140xf32>
    %56 = arith.maximumf %54, %55 : vector<112x140xf32>
    %57 = vector.extract_strided_slice %56 {offsets = [0, 0], sizes = [80, 140], strides = [1, 1]} : vector<112x140xf32> to vector<80x140xf32>
    %c0_40 = arith.constant 0 : index
    %c0_41 = arith.constant 0 : index
    %c0_42 = arith.constant 0 : index
    %58 = vector.load %arg5[%c0_40, %c0_41, %c0_42] : memref<5x140x100xf32, #tpu.memory_space<vmem>>, vector<1x140x100xf32>
    %59 = vector.shape_cast %58 : vector<1x140x100xf32> to vector<140x100xf32>
    %cst_43 = arith.constant dense<0.000000e+00> : vector<80x100xf32>
    %60 = tpu.matmul %57, %59, %cst_43 {dimension_numbers = #tpu.dot_dimension_numbers<[1], [0], [0], [1], [0, 0, 1, 1], [], []>} : vector<80x140xf32>, vector<140x100xf32>, vector<80x100xf32> -> vector<80x100xf32>
    %61 = vector.extract_strided_slice %56 {offsets = [0, 0], sizes = [80, 140], strides = [1, 1]} : vector<112x140xf32> to vector<80x140xf32>
    %c0_44 = arith.constant 0 : index
    %c0_45 = arith.constant 0 : index
    %c0_46 = arith.constant 0 : index
    %62 = vector.load %arg6[%c0_44, %c0_45, %c0_46] : memref<5x140x100xf32, #tpu.memory_space<vmem>>, vector<1x140x100xf32>
    %63 = vector.shape_cast %62 : vector<1x140x100xf32> to vector<140x100xf32>
    %cst_47 = arith.constant dense<0.000000e+00> : vector<80x100xf32>
    %64 = tpu.matmul %61, %63, %cst_47 {dimension_numbers = #tpu.dot_dimension_numbers<[1], [0], [0], [1], [0, 0, 1, 1], [], []>} : vector<80x140xf32>, vector<140x100xf32>, vector<80x100xf32> -> vector<80x100xf32>
    %65 = vector.extract_strided_slice %56 {offsets = [8, 0], sizes = [80, 140], strides = [1, 1]} : vector<112x140xf32> to vector<80x140xf32>
    %c1_48 = arith.constant 1 : index
    %c0_49 = arith.constant 0 : index
    %c0_50 = arith.constant 0 : index
    %66 = vector.load %arg5[%c1_48, %c0_49, %c0_50] : memref<5x140x100xf32, #tpu.memory_space<vmem>>, vector<1x140x100xf32>
    %67 = vector.shape_cast %66 : vector<1x140x100xf32> to vector<140x100xf32>
    %cst_51 = arith.constant dense<0.000000e+00> : vector<80x100xf32>
    %68 = tpu.matmul %65, %67, %cst_51 {dimension_numbers = #tpu.dot_dimension_numbers<[1], [0], [0], [1], [0, 0, 1, 1], [], []>} : vector<80x140xf32>, vector<140x100xf32>, vector<80x100xf32> -> vector<80x100xf32>
    %69 = arith.addf %60, %68 : vector<80x100xf32>
    %c1_52 = arith.constant 1 : index
    %c0_53 = arith.constant 0 : index
    %c0_54 = arith.constant 0 : index
    %70 = vector.load %arg6[%c1_52, %c0_53, %c0_54] : memref<5x140x100xf32, #tpu.memory_space<vmem>>, vector<1x140x100xf32>
    %71 = vector.shape_cast %70 : vector<1x140x100xf32> to vector<140x100xf32>
    %cst_55 = arith.constant dense<0.000000e+00> : vector<80x100xf32>
    %72 = tpu.matmul %65, %71, %cst_55 {dimension_numbers = #tpu.dot_dimension_numbers<[1], [0], [0], [1], [0, 0, 1, 1], [], []>} : vector<80x140xf32>, vector<140x100xf32>, vector<80x100xf32> -> vector<80x100xf32>
    %73 = arith.addf %64, %72 : vector<80x100xf32>
    %74 = vector.extract_strided_slice %56 {offsets = [16, 0], sizes = [80, 140], strides = [1, 1]} : vector<112x140xf32> to vector<80x140xf32>
    %c2_56 = arith.constant 2 : index
    %c0_57 = arith.constant 0 : index
    %c0_58 = arith.constant 0 : index
    %75 = vector.load %arg5[%c2_56, %c0_57, %c0_58] : memref<5x140x100xf32, #tpu.memory_space<vmem>>, vector<1x140x100xf32>
    %76 = vector.shape_cast %75 : vector<1x140x100xf32> to vector<140x100xf32>
    %cst_59 = arith.constant dense<0.000000e+00> : vector<80x100xf32>
    %77 = tpu.matmul %74, %76, %cst_59 {dimension_numbers = #tpu.dot_dimension_numbers<[1], [0], [0], [1], [0, 0, 1, 1], [], []>} : vector<80x140xf32>, vector<140x100xf32>, vector<80x100xf32> -> vector<80x100xf32>
    %78 = arith.addf %69, %77 : vector<80x100xf32>
    %c2_60 = arith.constant 2 : index
    %c0_61 = arith.constant 0 : index
    %c0_62 = arith.constant 0 : index
    %79 = vector.load %arg6[%c2_60, %c0_61, %c0_62] : memref<5x140x100xf32, #tpu.memory_space<vmem>>, vector<1x140x100xf32>
    %80 = vector.shape_cast %79 : vector<1x140x100xf32> to vector<140x100xf32>
    %cst_63 = arith.constant dense<0.000000e+00> : vector<80x100xf32>
    %81 = tpu.matmul %74, %80, %cst_63 {dimension_numbers = #tpu.dot_dimension_numbers<[1], [0], [0], [1], [0, 0, 1, 1], [], []>} : vector<80x140xf32>, vector<140x100xf32>, vector<80x100xf32> -> vector<80x100xf32>
    %82 = arith.addf %73, %81 : vector<80x100xf32>
    %83 = vector.extract_strided_slice %56 {offsets = [24, 0], sizes = [80, 140], strides = [1, 1]} : vector<112x140xf32> to vector<80x140xf32>
    %c3_64 = arith.constant 3 : index
    %c0_65 = arith.constant 0 : index
    %c0_66 = arith.constant 0 : index
    %84 = vector.load %arg5[%c3_64, %c0_65, %c0_66] : memref<5x140x100xf32, #tpu.memory_space<vmem>>, vector<1x140x100xf32>
    %85 = vector.shape_cast %84 : vector<1x140x100xf32> to vector<140x100xf32>
    %cst_67 = arith.constant dense<0.000000e+00> : vector<80x100xf32>
    %86 = tpu.matmul %83, %85, %cst_67 {dimension_numbers = #tpu.dot_dimension_numbers<[1], [0], [0], [1], [0, 0, 1, 1], [], []>} : vector<80x140xf32>, vector<140x100xf32>, vector<80x100xf32> -> vector<80x100xf32>
    %87 = arith.addf %78, %86 : vector<80x100xf32>
    %c3_68 = arith.constant 3 : index
    %c0_69 = arith.constant 0 : index
    %c0_70 = arith.constant 0 : index
    %88 = vector.load %arg6[%c3_68, %c0_69, %c0_70] : memref<5x140x100xf32, #tpu.memory_space<vmem>>, vector<1x140x100xf32>
    %89 = vector.shape_cast %88 : vector<1x140x100xf32> to vector<140x100xf32>
    %cst_71 = arith.constant dense<0.000000e+00> : vector<80x100xf32>
    %90 = tpu.matmul %83, %89, %cst_71 {dimension_numbers = #tpu.dot_dimension_numbers<[1], [0], [0], [1], [0, 0, 1, 1], [], []>} : vector<80x140xf32>, vector<140x100xf32>, vector<80x100xf32> -> vector<80x100xf32>
    %91 = arith.addf %82, %90 : vector<80x100xf32>
    %92 = vector.extract_strided_slice %56 {offsets = [32, 0], sizes = [80, 140], strides = [1, 1]} : vector<112x140xf32> to vector<80x140xf32>
    %c4_72 = arith.constant 4 : index
    %c0_73 = arith.constant 0 : index
    %c0_74 = arith.constant 0 : index
    %93 = vector.load %arg5[%c4_72, %c0_73, %c0_74] : memref<5x140x100xf32, #tpu.memory_space<vmem>>, vector<1x140x100xf32>
    %94 = vector.shape_cast %93 : vector<1x140x100xf32> to vector<140x100xf32>
    %cst_75 = arith.constant dense<0.000000e+00> : vector<80x100xf32>
    %95 = tpu.matmul %92, %94, %cst_75 {dimension_numbers = #tpu.dot_dimension_numbers<[1], [0], [0], [1], [0, 0, 1, 1], [], []>} : vector<80x140xf32>, vector<140x100xf32>, vector<80x100xf32> -> vector<80x100xf32>
    %96 = arith.addf %87, %95 : vector<80x100xf32>
    %c4_76 = arith.constant 4 : index
    %c0_77 = arith.constant 0 : index
    %c0_78 = arith.constant 0 : index
    %97 = vector.load %arg6[%c4_76, %c0_77, %c0_78] : memref<5x140x100xf32, #tpu.memory_space<vmem>>, vector<1x140x100xf32>
    %98 = vector.shape_cast %97 : vector<1x140x100xf32> to vector<140x100xf32>
    %cst_79 = arith.constant dense<0.000000e+00> : vector<80x100xf32>
    %99 = tpu.matmul %92, %98, %cst_79 {dimension_numbers = #tpu.dot_dimension_numbers<[1], [0], [0], [1], [0, 0, 1, 1], [], []>} : vector<80x140xf32>, vector<140x100xf32>, vector<80x100xf32> -> vector<80x100xf32>
    %100 = arith.addf %91, %99 : vector<80x100xf32>
    %101 = arith.maximumf %96, %100 : vector<80x100xf32>
    %102 = vector.shape_cast %101 : vector<80x100xf32> to vector<5x16x100xf32>
    %103 = vector.extract_strided_slice %102 {offsets = [0, 0, 0], sizes = [5, 8, 100], strides = [1, 1, 1]} : vector<5x16x100xf32> to vector<5x8x100xf32>
    %104 = vector.extract_strided_slice %102 {offsets = [0, 8, 0], sizes = [5, 8, 100], strides = [1, 1, 1]} : vector<5x16x100xf32> to vector<5x8x100xf32>
    %105 = arith.maximumf %103, %104 : vector<5x8x100xf32>
    %106 = vector.shape_cast %105 : vector<5x8x100xf32> to vector<40x100xf32>
    %c0_80 = arith.constant 0 : index
    %c0_81 = arith.constant 0 : index
    %107 = vector.load %arg7[%c0_80, %c0_81] : memref<1x100xf32, #tpu.memory_space<vmem>>, vector<1x100xf32>
    %108 = vector.broadcast %107 : vector<1x100xf32> to vector<40x100xf32>
    %109 = arith.addf %106, %108 : vector<40x100xf32>
    %cst_82 = arith.constant 0.000000e+00 : f32
    %110 = vector.broadcast %cst_82 : f32 to vector<40x100xf32>
    %111 = arith.maximumf %109, %110 : vector<40x100xf32>
    %112 = vector.extract_strided_slice %111 {offsets = [0, 0], sizes = [8, 100], strides = [1, 1]} : vector<40x100xf32> to vector<8x100xf32>
    %c0_83 = arith.constant 0 : index
    %c0_84 = arith.constant 0 : index
    %c0_85 = arith.constant 0 : index
    %113 = vector.load %arg8[%c0_83, %c0_84, %c0_85] : memref<5x100x64xf32, #tpu.memory_space<vmem>>, vector<1x100x64xf32>
    %114 = vector.shape_cast %113 : vector<1x100x64xf32> to vector<100x64xf32>
    %cst_86 = arith.constant dense<0.000000e+00> : vector<8x64xf32>
    %115 = tpu.matmul %112, %114, %cst_86 {dimension_numbers = #tpu.dot_dimension_numbers<[1], [0], [0], [1], [0, 0, 1, 1], [], []>} : vector<8x100xf32>, vector<100x64xf32>, vector<8x64xf32> -> vector<8x64xf32>
    %116 = vector.extract_strided_slice %111 {offsets = [8, 0], sizes = [8, 100], strides = [1, 1]} : vector<40x100xf32> to vector<8x100xf32>
    %c1_87 = arith.constant 1 : index
    %c0_88 = arith.constant 0 : index
    %c0_89 = arith.constant 0 : index
    %117 = vector.load %arg8[%c1_87, %c0_88, %c0_89] : memref<5x100x64xf32, #tpu.memory_space<vmem>>, vector<1x100x64xf32>
    %118 = vector.shape_cast %117 : vector<1x100x64xf32> to vector<100x64xf32>
    %cst_90 = arith.constant dense<0.000000e+00> : vector<8x64xf32>
    %119 = tpu.matmul %116, %118, %cst_90 {dimension_numbers = #tpu.dot_dimension_numbers<[1], [0], [0], [1], [0, 0, 1, 1], [], []>} : vector<8x100xf32>, vector<100x64xf32>, vector<8x64xf32> -> vector<8x64xf32>
    %120 = arith.addf %115, %119 : vector<8x64xf32>
    %121 = vector.extract_strided_slice %111 {offsets = [16, 0], sizes = [8, 100], strides = [1, 1]} : vector<40x100xf32> to vector<8x100xf32>
    %c2_91 = arith.constant 2 : index
    %c0_92 = arith.constant 0 : index
    %c0_93 = arith.constant 0 : index
    %122 = vector.load %arg8[%c2_91, %c0_92, %c0_93] : memref<5x100x64xf32, #tpu.memory_space<vmem>>, vector<1x100x64xf32>
    %123 = vector.shape_cast %122 : vector<1x100x64xf32> to vector<100x64xf32>
    %cst_94 = arith.constant dense<0.000000e+00> : vector<8x64xf32>
    %124 = tpu.matmul %121, %123, %cst_94 {dimension_numbers = #tpu.dot_dimension_numbers<[1], [0], [0], [1], [0, 0, 1, 1], [], []>} : vector<8x100xf32>, vector<100x64xf32>, vector<8x64xf32> -> vector<8x64xf32>
    %125 = arith.addf %120, %124 : vector<8x64xf32>
    %126 = vector.extract_strided_slice %111 {offsets = [24, 0], sizes = [8, 100], strides = [1, 1]} : vector<40x100xf32> to vector<8x100xf32>
    %c3_95 = arith.constant 3 : index
    %c0_96 = arith.constant 0 : index
    %c0_97 = arith.constant 0 : index
    %127 = vector.load %arg8[%c3_95, %c0_96, %c0_97] : memref<5x100x64xf32, #tpu.memory_space<vmem>>, vector<1x100x64xf32>
    %128 = vector.shape_cast %127 : vector<1x100x64xf32> to vector<100x64xf32>
    %cst_98 = arith.constant dense<0.000000e+00> : vector<8x64xf32>
    %129 = tpu.matmul %126, %128, %cst_98 {dimension_numbers = #tpu.dot_dimension_numbers<[1], [0], [0], [1], [0, 0, 1, 1], [], []>} : vector<8x100xf32>, vector<100x64xf32>, vector<8x64xf32> -> vector<8x64xf32>
    %130 = arith.addf %125, %129 : vector<8x64xf32>
    %131 = vector.extract_strided_slice %111 {offsets = [32, 0], sizes = [8, 100], strides = [1, 1]} : vector<40x100xf32> to vector<8x100xf32>
    %c4_99 = arith.constant 4 : index
    %c0_100 = arith.constant 0 : index
    %c0_101 = arith.constant 0 : index
    %132 = vector.load %arg8[%c4_99, %c0_100, %c0_101] : memref<5x100x64xf32, #tpu.memory_space<vmem>>, vector<1x100x64xf32>
    %133 = vector.shape_cast %132 : vector<1x100x64xf32> to vector<100x64xf32>
    %cst_102 = arith.constant dense<0.000000e+00> : vector<8x64xf32>
    %134 = tpu.matmul %131, %133, %cst_102 {dimension_numbers = #tpu.dot_dimension_numbers<[1], [0], [0], [1], [0, 0, 1, 1], [], []>} : vector<8x100xf32>, vector<100x64xf32>, vector<8x64xf32> -> vector<8x64xf32>
    %135 = arith.addf %130, %134 : vector<8x64xf32>
    %c0_103 = arith.constant 0 : index
    %c0_104 = arith.constant 0 : index
    %136 = vector.load %arg9[%c0_103, %c0_104] : memref<1x64xf32, #tpu.memory_space<vmem>>, vector<1x64xf32>
    %137 = vector.broadcast %136 : vector<1x64xf32> to vector<8x64xf32>
    %138 = arith.addf %135, %137 : vector<8x64xf32>
    %cst_105 = arith.constant 0.000000e+00 : f32
    %139 = vector.broadcast %cst_105 : f32 to vector<8x64xf32>
    %140 = arith.subf %139, %138 : vector<8x64xf32>
    %141 = math.exp %140 : vector<8x64xf32>
    %cst_106 = arith.constant 1.000000e+00 : f32
    %142 = vector.broadcast %cst_106 : f32 to vector<8x64xf32>
    %143 = arith.addf %142, %141 : vector<8x64xf32>
    %cst_107 = arith.constant 1.000000e+00 : f32
    %144 = vector.broadcast %cst_107 : f32 to vector<8x64xf32>
    %145 = arith.divf %144, %143 : vector<8x64xf32>
    %c0_108 = arith.constant 0 : index
    %c0_109 = arith.constant 0 : index
    %146 = vector.load %arg10[%c0_108, %c0_109] : memref<64x128xf32, #tpu.memory_space<vmem>>, vector<64x128xf32>
    %cst_110 = arith.constant dense<0.000000e+00> : vector<8x128xf32>
    %147 = tpu.matmul %145, %146, %cst_110 {dimension_numbers = #tpu.dot_dimension_numbers<[1], [0], [0], [1], [0, 0, 1, 1], [], []>} : vector<8x64xf32>, vector<64x128xf32>, vector<8x128xf32> -> vector<8x128xf32>
    %c0_111 = arith.constant 0 : index
    %c0_112 = arith.constant 0 : index
    %148 = vector.load %arg11[%c0_111, %c0_112] : memref<1x128xf32, #tpu.memory_space<vmem>>, vector<1x128xf32>
    %149 = vector.broadcast %148 : vector<1x128xf32> to vector<8x128xf32>
    %150 = arith.addf %147, %149 : vector<8x128xf32>
    %c0_113 = arith.constant 0 : index
    %c0_114 = arith.constant 0 : index
    %151 = vector.load %arg12[%c0_113, %c0_114] : memref<8x128xf32, #tpu.memory_space<vmem>>, vector<8x128xf32>
    tpu.vector_store %arg12[%c0_113, %c0_114], %150 {strides = array<i32>} : memref<8x128xf32, #tpu.memory_space<vmem>>, vector<8x128xf32>,
    return
  }
  func.func @transform_0(%arg0: i32) -> (i32, i32, i32) {
    %c0_i32 = arith.constant 0 : i32
    %c0_i32_0 = arith.constant 0 : i32
    %c0_i32_1 = arith.constant 0 : i32
    return %c0_i32, %arg0, %c0_i32_0 : i32, i32, i32
  }
  func.func @transform_1(%arg0: i32) -> (i32, i32, i32) {
    %c0_i32 = arith.constant 0 : i32
    %c0_i32_0 = arith.constant 0 : i32
    %c0_i32_1 = arith.constant 0 : i32
    %c0_i32_2 = arith.constant 0 : i32
    return %c0_i32, %c0_i32_0, %c0_i32_1 : i32, i32, i32
  }
  func.func @transform_2(%arg0: i32) -> (i32, i32, i32) {
    %c0_i32 = arith.constant 0 : i32
    %c0_i32_0 = arith.constant 0 : i32
    %c0_i32_1 = arith.constant 0 : i32
    %c0_i32_2 = arith.constant 0 : i32
    return %c0_i32, %c0_i32_0, %c0_i32_1 : i32, i32, i32
  }
  func.func @transform_3(%arg0: i32) -> (i32, i32) {
    %c0_i32 = arith.constant 0 : i32
    %c0_i32_0 = arith.constant 0 : i32
    %c0_i32_1 = arith.constant 0 : i32
    return %c0_i32, %c0_i32_0 : i32, i32
  }
  func.func @transform_4(%arg0: i32) -> (i32, i32, i32) {
    %c0_i32 = arith.constant 0 : i32
    %c0_i32_0 = arith.constant 0 : i32
    %c0_i32_1 = arith.constant 0 : i32
    %c0_i32_2 = arith.constant 0 : i32
    return %c0_i32, %c0_i32_0, %c0_i32_1 : i32, i32, i32
  }
  func.func @transform_5(%arg0: i32) -> (i32, i32, i32) {
    %c0_i32 = arith.constant 0 : i32
    %c0_i32_0 = arith.constant 0 : i32
    %c0_i32_1 = arith.constant 0 : i32
    %c0_i32_2 = arith.constant 0 : i32
    return %c0_i32, %c0_i32_0, %c0_i32_1 : i32, i32, i32
  }
  func.func @transform_6(%arg0: i32) -> (i32, i32) {
    %c0_i32 = arith.constant 0 : i32
    %c0_i32_0 = arith.constant 0 : i32
    %c0_i32_1 = arith.constant 0 : i32
    return %c0_i32, %c0_i32_0 : i32, i32
  }
  func.func @transform_7(%arg0: i32) -> (i32, i32, i32) {
    %c0_i32 = arith.constant 0 : i32
    %c0_i32_0 = arith.constant 0 : i32
    %c0_i32_1 = arith.constant 0 : i32
    %c0_i32_2 = arith.constant 0 : i32
    return %c0_i32, %c0_i32_0, %c0_i32_1 : i32, i32, i32
  }
  func.func @transform_8(%arg0: i32) -> (i32, i32) {
    %c0_i32 = arith.constant 0 : i32
    %c0_i32_0 = arith.constant 0 : i32
    %c0_i32_1 = arith.constant 0 : i32
    return %c0_i32, %c0_i32_0 : i32, i32
  }
  func.func @transform_9(%arg0: i32) -> (i32, i32) {
    %c0_i32 = arith.constant 0 : i32
    %c0_i32_0 = arith.constant 0 : i32
    %c0_i32_1 = arith.constant 0 : i32
    return %c0_i32, %c0_i32_0 : i32, i32
  }
  func.func @transform_10(%arg0: i32) -> (i32, i32) {
    %c0_i32 = arith.constant 0 : i32
    %c0_i32_0 = arith.constant 0 : i32
    %c0_i32_1 = arith.constant 0 : i32
    return %c0_i32, %c0_i32_0 : i32, i32
  }
  func.func @transform_11(%arg0: i32) -> (i32, i32) {
    %c0_i32 = arith.constant 0 : i32
    %c0_i32_0 = arith.constant 0 : i32
    return %arg0, %c0_i32 : i32, i32
  }
}

</mosaic_0001>

<llo_original>
// kernel: tpu_custom_call.1
$region0: #{tpu_custom_call.1}
  #allocation0 [shape = 'u32[]', space=smem, size = 0x4, offset = 0x4, fixed_abs, tag = 'smem constant byte address 0x4 - core index']
  #allocation1 [shape = 'u32[144,128]{1,0:T(1,128)}', space=vmem, size = 0x12000, scoped, tag = 'internal scratch']
  %s0 = inlined_call_operand.hbm [shape: f32[32,16,32], index: 0, kind: input, shape index: {}]
  %s1 = inlined_call_operand.hbm [shape: f32[5,32,140], index: 1, kind: input, shape index: {}]
  %s2 = inlined_call_operand.hbm [shape: f32[5,32,140], index: 2, kind: input, shape index: {}]
  %s3 = inlined_call_operand.vmem [shape: f32[1,140], index: 3, kind: input, shape index: {}]
  %s4 = inlined_call_operand.vmem [shape: f32[5,140,100], index: 4, kind: input, shape index: {}]
  %s5 = inlined_call_operand.hbm [shape: f32[5,140,100], index: 5, kind: input, shape index: {}]
  %s6 = inlined_call_operand.vmem [shape: f32[1,100], index: 6, kind: input, shape index: {}]
  %s7 = inlined_call_operand.vmem [shape: f32[5,100,64], index: 7, kind: input, shape index: {}]
  %s8 = inlined_call_operand.vmem [shape: f32[1,64], index: 8, kind: input, shape index: {}]
  %s9 = inlined_call_operand.vmem [shape: f32[64,128], index: 9, kind: input, shape index: {}]
  %s10 = inlined_call_operand.vmem [shape: f32[1,128], index: 10, kind: input, shape index: {}]
  %s11 = inlined_call_operand.hbm [shape: f32[16,128], index: 11, kind: output, shape index: {}]
  %s12 = sld [smem:[#allocation0]]
  $region93: #{tpu_custom_call.1} parent=0
    _
  %s14 = ssub.s32 1, %s12
  %s15 = scalar_select 0, %s14, %s12
  $region1: #{tpu_custom_call.1} parent=0
    #allocation2 [shape = 'u8[262144]{0}', space=vmem, size = 0x40000, scoped, tag = 'input window, operand 0']
    #allocation3 [shape = 's32[2]{0}', space=sflag, size = 0x8, scoped, tag = 'scoped memory for tpu_custom_call.1']
    #allocation4 [shape = 's32[2]{0}', space=sflag, size = 0x8, scoped, tag = 'scoped memory for tpu_custom_call.1']
    #allocation5 [shape = 'u8[163840]{0}', space=vmem, size = 0x28000, scoped, tag = 'input window, operand 1, single buffered']
    #allocation6 [shape = 's32[1]{0}', space=sflag, size = 0x4, scoped, tag = 'scoped memory for tpu_custom_call.1']
    #allocation7 [shape = 'u8[163840]{0}', space=vmem, size = 0x28000, scoped, tag = 'input window, operand 2, single buffered']
    #allocation8 [shape = 'u8[368640]{0}', space=vmem, size = 0x5a000, scoped, tag = 'input window, operand 5, single buffered']
    #allocation9 [shape = 's32[1]{0}', space=sflag, size = 0x4, scoped, tag = 'scoped memory for tpu_custom_call.1']
    #allocation10 [shape = 'u8[8192]{0}', space=vmem, size = 0x2000, scoped, tag = 'output window, operand 0']
    %16 = vsyncpa [#allocation3], 0
    %s17 = scalar_lea.sflag [#allocation3], 1
    %18 = vsyncpa %s17, 0
    %19 = vsyncpa [#allocation6], 0
    %20 = vsyncpa [#allocation9], 0
    %21 = vsyncpa [#allocation4], 0
    %s22 = scalar_lea.sflag [#allocation4], 1
    %23 = vsyncpa %s22, 0
    loop: start=0, step=1, limit=4
    $region2: #{tpu_custom_call.1} parent=1 // loop_pre_header
      _
    $region3: #{tpu_custom_call.1} parent=1 // loop_header
      %s25 = sphi 0, %s29
      %p26 = scmp.ge.s32.totalorder %s25, 4
      %s35 = sphi 0, %s37
      %s38 = sphi 0, %s35
      %s39 = sphi 0, %s38
      %s55 = sphi 0, %s39
      %s59 = sphi 0, %s59
      %s61 = sphi 0, %s59
      %s62 = sphi 0, %s61
      %s76 = sphi 0, %s62
      %s80 = sphi 0, %s80
      %s82 = sphi 0, %s80
      %s83 = sphi 0, %s82
      %s97 = sphi 0, %s83
      %s101 = sphi 0, %s101
      %s103 = sphi 0, %s101
      %s104 = sphi 0, %s103
      %s118 = sphi 0, %s104
      %s122 = sphi 0, %s122
      %s124 = sphi 0, %s122
      %s125 = sphi 0, %s124
      %s139 = sphi 0, %s125
      %s143 = sphi 0, %s143
      %s145 = sphi 0, %s143
      %s146 = sphi 0, %s145
      %s160 = sphi 0, %s146
      %s164 = sphi 0, %s164
      %s166 = sphi 0, %s164
      %s167 = sphi 0, %s166
      %s181 = sphi 0, %s167
      %s185 = sphi 0, %s185
      %s187 = sphi 0, %s185
      %s188 = sphi 0, %s187
      %s202 = sphi 0, %s188
      %s206 = sphi 0, %s206
      %s208 = sphi 0, %s206
      %s209 = sphi 0, %s208
      %s223 = sphi 0, %s209
      %s227 = sphi 0, %s227
      %s229 = sphi 0, %s227
      %s230 = sphi 0, %s229
      %s244 = sphi 0, %s230
      %s248 = sphi 0, %s248
      %s250 = sphi 0, %s248
      %s251 = sphi 0, %s250
      %s265 = sphi 0, %s251
      %s271 = sphi 0, %s273
      %s274 = sphi 0, %s271
      %s275 = sphi 0, %s274
      %s291 = sphi 0, %s275
    $region4: #{tpu_custom_call.1} parent=1 // loop_header_branch
      %28 = sbr.rel (%p26) target = $region8
    $region5: #{tpu_custom_call.1} parent=1 // loop_body
      %s30 = ssub.s32 %s25, 1
      %s31 = ssub.s32 %s25, 2
      %s32 = sadd.s32 %s25, 1
      %s33 = ssub.s32 %s25, %s32
      %p34 = scmp.eq.s32.totalorder %s33, 0
      %s36 = sadd.s32 %s35, 1
      %s37 = scalar_select %p34, %s35, %s36
      %p40 = pneg %p34
      %p41 = scmp.eq.s32.totalorder %s25, 1
      %p42 = por %p40, %p41
      %p43 = scmp.ne.s32.totalorder %s35, %s38
      %p44 = scmp.eq.s32.totalorder %s25, 0
      %p45 = por %p43, %p44
      %p46 = scmp.ne.s32.totalorder %s35, %s38
      %p47 = scmp.eq.s32.totalorder %s30, 1
      %p48 = por %p46, %p47
      %p49 = scmp.ne.s32.totalorder %s38, %s39
      %p50 = scmp.eq.s32.totalorder %s30, 0
      %p51 = por %p49, %p50
      %p52 = scmp.ne.s32.totalorder %s38, %s39
      %p53 = scmp.eq.s32.totalorder %s31, 1
      %p54 = por %p52, %p53
      %p56 = scmp.ne.s32.totalorder %s39, %s55
      %p57 = scmp.eq.s32.totalorder %s31, 0
      %p58 = por %p56, %p57
      %s60 = sadd.s32 %s59, 1
      %p63 = scmp.eq.s32.totalorder %s25, 1
      %p64 = scmp.ne.s32.totalorder %s59, %s61
      %p65 = scmp.eq.s32.totalorder %s25, 0
      %p66 = por %p64, %p65
      %p67 = scmp.ne.s32.totalorder %s59, %s61
      %p68 = scmp.eq.s32.totalorder %s30, 1
      %p69 = por %p67, %p68
      %p70 = scmp.ne.s32.totalorder %s61, %s62
      %p71 = scmp.eq.s32.totalorder %s30, 0
      %p72 = por %p70, %p71
      %p73 = scmp.ne.s32.totalorder %s61, %s62
      %p74 = scmp.eq.s32.totalorder %s31, 1
      %p75 = por %p73, %p74
      %p77 = scmp.ne.s32.totalorder %s62, %s76
      %p78 = scmp.eq.s32.totalorder %s31, 0
      %p79 = por %p77, %p78
      %s81 = sadd.s32 %s80, 1
      %p84 = scmp.eq.s32.totalorder %s25, 1
      %p85 = scmp.ne.s32.totalorder %s80, %s82
      %p86 = scmp.eq.s32.totalorder %s25, 0
      %p87 = por %p85, %p86
      %p88 = scmp.ne.s32.totalorder %s80, %s82
      %p89 = scmp.eq.s32.totalorder %s30, 1
      %p90 = por %p88, %p89
      %p91 = scmp.ne.s32.totalorder %s82, %s83
      %p92 = scmp.eq.s32.totalorder %s30, 0
      %p93 = por %p91, %p92
      %p94 = scmp.ne.s32.totalorder %s82, %s83
      %p95 = scmp.eq.s32.totalorder %s31, 1
      %p96 = por %p94, %p95
      %p98 = scmp.ne.s32.totalorder %s83, %s97
      %p99 = scmp.eq.s32.totalorder %s31, 0
      %p100 = por %p98, %p99
      %s102 = sadd.s32 %s101, 1
      %p105 = scmp.eq.s32.totalorder %s25, 1
      %p106 = scmp.ne.s32.totalorder %s101, %s103
      %p107 = scmp.eq.s32.totalorder %s25, 0
      %p108 = por %p106, %p107
      %p109 = scmp.ne.s32.totalorder %s101, %s103
      %p110 = scmp.eq.s32.totalorder %s30, 1
      %p111 = por %p109, %p110
      %p112 = scmp.ne.s32.totalorder %s103, %s104
      %p113 = scmp.eq.s32.totalorder %s30, 0
      %p114 = por %p112, %p113
      %p115 = scmp.ne.s32.totalorder %s103, %s104
      %p116 = scmp.eq.s32.totalorder %s31, 1
      %p117 = por %p115, %p116
      %p119 = scmp.ne.s32.totalorder %s104, %s118
      %p120 = scmp.eq.s32.totalorder %s31, 0
      %p121 = por %p119, %p120
      %s123 = sadd.s32 %s122, 1
      %p126 = scmp.eq.s32.totalorder %s25, 1
      %p127 = scmp.ne.s32.totalorder %s122, %s124
      %p128 = scmp.eq.s32.totalorder %s25, 0
      %p129 = por %p127, %p128
      %p130 = scmp.ne.s32.totalorder %s122, %s124
      %p131 = scmp.eq.s32.totalorder %s30, 1
      %p132 = por %p130, %p131
      %p133 = scmp.ne.s32.totalorder %s124, %s125
      %p134 = scmp.eq.s32.totalorder %s30, 0
      %p135 = por %p133, %p134
      %p136 = scmp.ne.s32.totalorder %s124, %s125
      %p137 = scmp.eq.s32.totalorder %s31, 1
      %p138 = por %p136, %p137
      %p140 = scmp.ne.s32.totalorder %s125, %s139
      %p141 = scmp.eq.s32.totalorder %s31, 0
      %p142 = por %p140, %p141
      %s144 = sadd.s32 %s143, 1
      %p147 = scmp.eq.s32.totalorder %s25, 1
      %p148 = scmp.ne.s32.totalorder %s143, %s145
      %p149 = scmp.eq.s32.totalorder %s25, 0
      %p150 = por %p148, %p149
      %p151 = scmp.ne.s32.totalorder %s143, %s145
      %p152 = scmp.eq.s32.totalorder %s30, 1
      %p153 = por %p151, %p152
      %p154 = scmp.ne.s32.totalorder %s145, %s146
      %p155 = scmp.eq.s32.totalorder %s30, 0
      %p156 = por %p154, %p155
      %p157 = scmp.ne.s32.totalorder %s145, %s146
      %p158 = scmp.eq.s32.totalorder %s31, 1
      %p159 = por %p157, %p158
      %p161 = scmp.ne.s32.totalorder %s146, %s160
      %p162 = scmp.eq.s32.totalorder %s31, 0
      %p163 = por %p161, %p162
      %s165 = sadd.s32 %s164, 1
      %p168 = scmp.eq.s32.totalorder %s25, 1
      %p169 = scmp.ne.s32.totalorder %s164, %s166
      %p170 = scmp.eq.s32.totalorder %s25, 0
      %p171 = por %p169, %p170
      %p172 = scmp.ne.s32.totalorder %s164, %s166
      %p173 = scmp.eq.s32.totalorder %s30, 1
      %p174 = por %p172, %p173
      %p175 = scmp.ne.s32.totalorder %s166, %s167
      %p176 = scmp.eq.s32.totalorder %s30, 0
      %p177 = por %p175, %p176
      %p178 = scmp.ne.s32.totalorder %s166, %s167
      %p179 = scmp.eq.s32.totalorder %s31, 1
      %p180 = por %p178, %p179
      %p182 = scmp.ne.s32.totalorder %s167, %s181
      %p183 = scmp.eq.s32.totalorder %s31, 0
      %p184 = por %p182, %p183
      %s186 = sadd.s32 %s185, 1
      %p189 = scmp.eq.s32.totalorder %s25, 1
      %p190 = scmp.ne.s32.totalorder %s185, %s187
      %p191 = scmp.eq.s32.totalorder %s25, 0
      %p192 = por %p190, %p191
      %p193 = scmp.ne.s32.totalorder %s185, %s187
      %p194 = scmp.eq.s32.totalorder %s30, 1
      %p195 = por %p193, %p194
      %p196 = scmp.ne.s32.totalorder %s187, %s188
      %p197 = scmp.eq.s32.totalorder %s30, 0
      %p198 = por %p196, %p197
      %p199 = scmp.ne.s32.totalorder %s187, %s188
      %p200 = scmp.eq.s32.totalorder %s31, 1
      %p201 = por %p199, %p200
      %p203 = scmp.ne.s32.totalorder %s188, %s202
      %p204 = scmp.eq.s32.totalorder %s31, 0
      %p205 = por %p203, %p204
      %s207 = sadd.s32 %s206, 1
      %p210 = scmp.eq.s32.totalorder %s25, 1
      %p211 = scmp.ne.s32.totalorder %s206, %s208
      %p212 = scmp.eq.s32.totalorder %s25, 0
      %p213 = por %p211, %p212
      %p214 = scmp.ne.s32.totalorder %s206, %s208
      %p215 = scmp.eq.s32.totalorder %s30, 1
      %p216 = por %p214, %p215
      %p217 = scmp.ne.s32.totalorder %s208, %s209
      %p218 = scmp.eq.s32.totalorder %s30, 0
      %p219 = por %p217, %p218
      %p220 = scmp.ne.s32.totalorder %s208, %s209
      %p221 = scmp.eq.s32.totalorder %s31, 1
      %p222 = por %p220, %p221
      %p224 = scmp.ne.s32.totalorder %s209, %s223
      %p225 = scmp.eq.s32.totalorder %s31, 0
      %p226 = por %p224, %p225
      %s228 = sadd.s32 %s227, 1
      %p231 = scmp.eq.s32.totalorder %s25, 1
      %p232 = scmp.ne.s32.totalorder %s227, %s229
      %p233 = scmp.eq.s32.totalorder %s25, 0
      %p234 = por %p232, %p233
      %p235 = scmp.ne.s32.totalorder %s227, %s229
      %p236 = scmp.eq.s32.totalorder %s30, 1
      %p237 = por %p235, %p236
      %p238 = scmp.ne.s32.totalorder %s229, %s230
      %p239 = scmp.eq.s32.totalorder %s30, 0
      %p240 = por %p238, %p239
      %p241 = scmp.ne.s32.totalorder %s229, %s230
      %p242 = scmp.eq.s32.totalorder %s31, 1
      %p243 = por %p241, %p242
      %p245 = scmp.ne.s32.totalorder %s230, %s244
      %p246 = scmp.eq.s32.totalorder %s31, 0
      %p247 = por %p245, %p246
      %s249 = sadd.s32 %s248, 1
      %p252 = scmp.eq.s32.totalorder %s25, 1
      %p253 = scmp.ne.s32.totalorder %s248, %s250
      %p254 = scmp.eq.s32.totalorder %s25, 0
      %p255 = por %p253, %p254
      %p256 = scmp.ne.s32.totalorder %s248, %s250
      %p257 = scmp.eq.s32.totalorder %s30, 1
      %p258 = por %p256, %p257
      %p259 = scmp.ne.s32.totalorder %s250, %s251
      %p260 = scmp.eq.s32.totalorder %s30, 0
      %p261 = por %p259, %p260
      %p262 = scmp.ne.s32.totalorder %s250, %s251
      %p263 = scmp.eq.s32.totalorder %s31, 1
      %p264 = por %p262, %p263
      %p266 = scmp.ne.s32.totalorder %s251, %s265
      %p267 = scmp.eq.s32.totalorder %s31, 0
      %p268 = por %p266, %p267
      %s269 = ssub.s32 %s25, %s32
      %p270 = scmp.eq.s32.totalorder %s269, 0
      %s272 = sadd.s32 %s271, 1
      %s273 = scalar_select %p270, %s271, %s272
      %p276 = pneg %p270
      %p277 = scmp.eq.s32.totalorder %s25, 1
      %p278 = por %p276, %p277
      %p279 = scmp.ne.s32.totalorder %s271, %s274
      %p280 = scmp.eq.s32.totalorder %s25, 0
      %p281 = por %p279, %p280
      %p282 = scmp.ne.s32.totalorder %s271, %s274
      %p283 = scmp.eq.s32.totalorder %s30, 1
      %p284 = por %p282, %p283
      %p285 = scmp.ne.s32.totalorder %s274, %s275
      %p286 = scmp.eq.s32.totalorder %s30, 0
      %p287 = por %p285, %p286
      %p288 = scmp.ne.s32.totalorder %s274, %s275
      %p289 = scmp.eq.s32.totalorder %s31, 1
      %p290 = por %p288, %p289
      %p292 = scmp.ne.s32.totalorder %s275, %s291
      %p293 = scmp.eq.s32.totalorder %s31, 0
      %p294 = por %p292, %p293
      %p295 = scmp.le.s32.totalorder 1, %s25
      %p296 = scmp.lt.s32.totalorder %s25, 3
      %p297 = pnand %p295, %p296
      %p298 = pneg %p297
      // Predicated region
      $region9: #{tpu_custom_call.1} parent=5 // pred_check
        _
      $region10: #{tpu_custom_call.1} parent=5 // pred_check_branch
        %300 = sbr.rel (%p297) target = $region12
      $region11: #{tpu_custom_call.1} parent=5 // pred_region
        %s301 = ssub.s32 %s25, 1
        // Predicated region
        $region13: #{tpu_custom_call.1} parent=11 // pred_check
          %p302 = pneg %p72
        $region14: #{tpu_custom_call.1} parent=11 // pred_check_branch
          %304 = sbr.rel (%p302) target = $region16
        $region15: #{tpu_custom_call.1} parent=11 // pred_region
          %s306 = ssub.s32 5120, 5120
          %307 = vsyncadd [#allocation6], %s306
          %s308 = sshll.u32 [#allocation5], 4
          %s309 = int_to_ptr.vmem [resolvable:$true] %s308
          %314 = dma.hbm_to_vmem [thread:$0]  %s1, 5120, %s309, [#allocation6], 256, 256, 16
        $region16: #{tpu_custom_call.1} parent=11 // pred_fallthru
          _
        // Predicated region
        $region17: #{tpu_custom_call.1} parent=11 // pred_check
          %p315 = pneg %p93
        $region18: #{tpu_custom_call.1} parent=11 // pred_check_branch
          %317 = sbr.rel (%p315) target = $region20
        $region19: #{tpu_custom_call.1} parent=11 // pred_region
          %s319 = ssub.s32 5120, 5120
          %320 = vsyncadd [#allocation6], %s319
          %s321 = sshll.u32 [#allocation7], 4
          %s322 = int_to_ptr.vmem [resolvable:$true] %s321
          %327 = dma.hbm_to_vmem [thread:$0]  %s2, 5120, %s322, [#allocation6], 256, 256, 16
        $region20: #{tpu_custom_call.1} parent=11 // pred_fallthru
          _
        // Predicated region
        $region21: #{tpu_custom_call.1} parent=11 // pred_check
          %p328 = pneg %p114
        $region22: #{tpu_custom_call.1} parent=11 // pred_check_branch
          %330 = sbr.rel (%p328) target = $region24
        $region23: #{tpu_custom_call.1} parent=11 // pred_region
          _
        $region24: #{tpu_custom_call.1} parent=11 // pred_fallthru
          _
        // Predicated region
        $region25: #{tpu_custom_call.1} parent=11 // pred_check
          %p331 = pneg %p135
        $region26: #{tpu_custom_call.1} parent=11 // pred_check_branch
          %333 = sbr.rel (%p331) target = $region28
        $region27: #{tpu_custom_call.1} parent=11 // pred_region
          _
        $region28: #{tpu_custom_call.1} parent=11 // pred_fallthru
          _
        // Predicated region
        $region29: #{tpu_custom_call.1} parent=11 // pred_check
          %p334 = pneg %p156
        $region30: #{tpu_custom_call.1} parent=11 // pred_check_branch
          %336 = sbr.rel (%p334) target = $region32
        $region31: #{tpu_custom_call.1} parent=11 // pred_region
          %s338 = ssub.s32 11520, 11520
          %339 = vsyncadd [#allocation9], %s338
          %s340 = sshll.u32 [#allocation8], 4
          %s341 = int_to_ptr.vmem [resolvable:$true] %s340
          %346 = dma.hbm_to_vmem [thread:$0]  %s5, 11520, %s341, [#allocation9], 128, 128, 8
        $region32: #{tpu_custom_call.1} parent=11 // pred_fallthru
          _
        // Predicated region
        $region33: #{tpu_custom_call.1} parent=11 // pred_check
          %p347 = pneg %p177
        $region34: #{tpu_custom_call.1} parent=11 // pred_check_branch
          %349 = sbr.rel (%p347) target = $region36
        $region35: #{tpu_custom_call.1} parent=11 // pred_region
          _
        $region36: #{tpu_custom_call.1} parent=11 // pred_fallthru
          _
        // Predicated region
        $region37: #{tpu_custom_call.1} parent=11 // pred_check
          %p350 = pneg %p198
        $region38: #{tpu_custom_call.1} parent=11 // pred_check_branch
          %352 = sbr.rel (%p350) target = $region40
        $region39: #{tpu_custom_call.1} parent=11 // pred_region
          _
        $region40: #{tpu_custom_call.1} parent=11 // pred_fallthru
          _
        // Predicated region
        $region41: #{tpu_custom_call.1} parent=11 // pred_check
          %p353 = pneg %p219
        $region42: #{tpu_custom_call.1} parent=11 // pred_check_branch
          %355 = sbr.rel (%p353) target = $region44
        $region43: #{tpu_custom_call.1} parent=11 // pred_region
          _
        $region44: #{tpu_custom_call.1} parent=11 // pred_fallthru
          _
        // Predicated region
        $region45: #{tpu_custom_call.1} parent=11 // pred_check
          %p356 = pneg %p240
        $region46: #{tpu_custom_call.1} parent=11 // pred_check_branch
          %358 = sbr.rel (%p356) target = $region48
        $region47: #{tpu_custom_call.1} parent=11 // pred_region
          _
        $region48: #{tpu_custom_call.1} parent=11 // pred_fallthru
          _
        // Predicated region
        $region49: #{tpu_custom_call.1} parent=11 // pred_check
          %p359 = pneg %p261
        $region50: #{tpu_custom_call.1} parent=11 // pred_check_branch
          %361 = sbr.rel (%p359) target = $region52
        $region51: #{tpu_custom_call.1} parent=11 // pred_region
          _
        $region52: #{tpu_custom_call.1} parent=11 // pred_fallthru
          _
      $region12: #{tpu_custom_call.1} parent=5 // pred_fallthru
        _
      %p362 = scmp.lt.s32.totalorder %s25, 2
      // Predicated region
      $region53: #{tpu_custom_call.1} parent=5 // pred_check
        %p363 = pneg %p362
      $region54: #{tpu_custom_call.1} parent=5 // pred_check_branch
        %365 = sbr.rel (%p363) target = $region56
      $region55: #{tpu_custom_call.1} parent=5 // pred_region
        // Predicated region
        $region57: #{tpu_custom_call.1} parent=55 // pred_check
          %p366 = pneg %p45
        $region58: #{tpu_custom_call.1} parent=55 // pred_check_branch
          %368 = sbr.rel (%p366) target = $region60
        $region59: #{tpu_custom_call.1} parent=55 // pred_region
          %s369 = sand.u32 %s35, 1
          %s370 = scalar_lea.sflag [#allocation3], %s369
          %s371 = sand.u32 %s35, 1
          %s372 = smul.addr %s371, 256
          %s373 = scalar_lea.vmem [#allocation2], %s372
          %s375 = ssub.s32 4096, 4096
          %376 = vsyncadd %s370, %s375
          %s377 = smul.addr %s25, 128
          %s378 = scalar_lea.hbm %s0, %s377
          %s379 = sshll.u32 %s373, 4
          %s380 = int_to_ptr.vmem [resolvable:$true] %s379
          %385 = dma.hbm_to_vmem [thread:$0]  %s378, 4096, %s380, %s370, 256, 128, 8
        $region60: #{tpu_custom_call.1} parent=55 // pred_fallthru
          _
      $region56: #{tpu_custom_call.1} parent=5 // pred_fallthru
        _
      %p386 = scmp.le.s32.totalorder 1, %s25
      %p387 = scmp.lt.s32.totalorder %s25, 3
      %p388 = pnand %p386, %p387
      %p389 = pneg %p388
      // Predicated region
      $region61: #{tpu_custom_call.1} parent=5 // pred_check
        _
      $region62: #{tpu_custom_call.1} parent=5 // pred_check_branch
        %391 = sbr.rel (%p388) target = $region64
      $region63: #{tpu_custom_call.1} parent=5 // pred_region
        %s392 = ssub.s32 %s25, 1
        %s393 = sand.u32 %s38, 1
        %s394 = scalar_lea.sflag [#allocation3], %s393
        %s395 = sand.u32 %s38, 1
        %s396 = smul.addr %s395, 256
        %s397 = scalar_lea.vmem [#allocation2], %s396
        // Predicated region
        $region65: #{tpu_custom_call.1} parent=63 // pred_check
          %p398 = pneg %p51
        $region66: #{tpu_custom_call.1} parent=63 // pred_check_branch
          %400 = sbr.rel (%p398) target = $region68
        $region67: #{tpu_custom_call.1} parent=63 // pred_region
          %401 = dma.done %s394, 4096
        $region68: #{tpu_custom_call.1} parent=63 // pred_fallthru
          _
        // Predicated region
        $region69: #{tpu_custom_call.1} parent=63 // pred_check
          %p402 = pneg %p72
        $region70: #{tpu_custom_call.1} parent=63 // pred_check_branch
          %404 = sbr.rel (%p402) target = $region72
        $region71: #{tpu_custom_call.1} parent=63 // pred_region
          %405 = dma.done [#allocation6], 5120
        $region72: #{tpu_custom_call.1} parent=63 // pred_fallthru
          _
        // Predicated region
        $region73: #{tpu_custom_call.1} parent=63 // pred_check
          %p406 = pneg %p93
        $region74: #{tpu_custom_call.1} parent=63 // pred_check_branch
          %408 = sbr.rel (%p406) target = $region76
        $region75: #{tpu_custom_call.1} parent=63 // pred_region
          %409 = dma.done [#allocation6], 5120
        $region76: #{tpu_custom_call.1} parent=63 // pred_fallthru
          _
        // Predicated region
        $region77: #{tpu_custom_call.1} parent=63 // pred_check
          %p410 = pneg %p156
        $region78: #{tpu_custom_call.1} parent=63 // pred_check_branch
          %412 = sbr.rel (%p410) target = $region80
        $region79: #{tpu_custom_call.1} parent=63 // pred_region
          %413 = dma.done [#allocation9], 11520
        $region80: #{tpu_custom_call.1} parent=63 // pred_fallthru
          _
        %s414 = sand.u32 %s38, 1
        %s415 = scalar_lea.sflag [#allocation3], %s414
        %s416 = sand.u32 %s38, 1
        %s417 = smul.addr %s416, 256
        %s418 = scalar_lea.vmem [#allocation2], %s417
        %p419 = pneg %p51
        %p420 = pneg %p48
        %p421 = pneg %p72
        %p422 = pneg %p69
        %p423 = pneg %p93
        %p424 = pneg %p90
        %p425 = pneg %p114
        %p426 = pneg %p111
        %p427 = pneg %p135
        %p428 = pneg %p132
        %p429 = pneg %p156
        %p430 = pneg %p153
        %p431 = pneg %p177
        %p432 = pneg %p174
        %p433 = pneg %p198
        %p434 = pneg %p195
        %p435 = pneg %p219
        %p436 = pneg %p216
        %p437 = pneg %p240
        %p438 = pneg %p237
        %p439 = pneg %p261
        %p440 = pneg %p258
        %p441 = pneg %p287
        %p442 = pneg %p284
        %s443 = sand.u32 %s274, 1
        %s444 = scalar_lea.sflag [#allocation4], %s443
        %s445 = sand.u32 %s274, 1
        %s446 = smul.addr %s445, 8
        %s447 = scalar_lea.vmem [#allocation10], %s446
        %v448 = vld [vmem:[%s397] sm:$0xff]
        %v449 = vld [vmem:[%s397 + $0x8] sm:$0xff]
        %v450 = vld [vmem:[%s397 + $0x10] sm:$0xff]
        %v451 = vld [vmem:[%s397 + $0x18] sm:$0xff]
        %v452 = vld [vmem:[%s397 + $0x20] sm:$0xff]
        %v453 = vld [vmem:[%s397 + $0x28] sm:$0xff]
        %v454 = vld [vmem:[%s397 + $0x30] sm:$0xff]
        %v455 = vld [vmem:[%s397 + $0x38] sm:$0xff]
        %v456 = vld [vmem:[%s397 + $0x40] sm:$0xff]
        %v457 = vld [vmem:[%s397 + $0x48] sm:$0xff]
        %v458 = vld [vmem:[%s397 + $0x50] sm:$0xff]
        %v459 = vld [vmem:[%s397 + $0x58] sm:$0xff]
        %v460 = vld [vmem:[%s397 + $0x60] sm:$0xff]
        %v461 = vld [vmem:[%s397 + $0x68] sm:$0xff]
        %v462 = vld [vmem:[%s397 + $0x70] sm:$0xff]
        %v463 = vld [vmem:[%s397 + $0x78] sm:$0xff]
        %v464 = vld [vmem:[%s397 + $0x80] sm:$0xff]
        %v465 = vld [vmem:[%s397 + $0x88] sm:$0xff]
        %v466 = vld [vmem:[%s397 + $0x90] sm:$0xff]
        %v467 = vld [vmem:[%s397 + $0x98] sm:$0xff]
        %v468 = vld [vmem:[%s397 + $0xa0] sm:$0xff]
        %v469 = vld [vmem:[%s397 + $0xa8] sm:$0xff]
        %v470 = vld [vmem:[%s397 + $0xb0] sm:$0xff]
        %v471 = vld [vmem:[%s397 + $0xb8] sm:$0xff]
        %v472 = vld [vmem:[%s397 + $0xc0] sm:$0xff]
        %v473 = vld [vmem:[%s397 + $0xc8] sm:$0xff]
        %v474 = vld [vmem:[%s397 + $0xd0] sm:$0xff]
        %v475 = vld [vmem:[%s397 + $0xd8] sm:$0xff]
        %v476 = vld [vmem:[%s397 + $0xe0] sm:$0xff]
        %v477 = vld [vmem:[%s397 + $0xe8] sm:$0xff]
        %v478 = vld [vmem:[%s397 + $0xf0] sm:$0xff]
        %v479 = vld [vmem:[%s397 + $0xf8] sm:$0xff]
        %v480 = vld [vmem:[#allocation5] sm:$0xff]
        %v481 = vld [vmem:[#allocation5 + $0x8] sm:$0xff]
        %v482 = vld [vmem:[#allocation5 + $0x10] sm:$0xff]
        %v483 = vld [vmem:[#allocation5 + $0x18] sm:$0xff]
        %v484 = vld [vmem:[#allocation5 + $0x20] sm:$0xff]
        %v485 = vld [vmem:[#allocation5 + $0x28] sm:$0xff]
        %v486 = vld [vmem:[#allocation5 + $0x30] sm:$0xff]
        %v487 = vld [vmem:[#allocation5 + $0x38] sm:$0xff]
        %v488 = vld [vmem:[#allocation7] sm:$0xff]
        %v489 = vld [vmem:[#allocation7 + $0x8] sm:$0xff]
        %v490 = vld [vmem:[#allocation7 + $0x10] sm:$0xff]
        %v491 = vld [vmem:[#allocation7 + $0x18] sm:$0xff]
        %v492 = vld [vmem:[#allocation7 + $0x20] sm:$0xff]
        %v493 = vld [vmem:[#allocation7 + $0x28] sm:$0xff]
        %v494 = vld [vmem:[#allocation7 + $0x30] sm:$0xff]
        %v495 = vld [vmem:[#allocation7 + $0x38] sm:$0xff]
        %s496 = scalar_lea.vmem [#allocation5], 64
        %v497 = vld [vmem:[%s496] sm:$0xff]
        %v498 = vld [vmem:[%s496 + $0x8] sm:$0xff]
        %v499 = vld [vmem:[%s496 + $0x10] sm:$0xff]
        %v500 = vld [vmem:[%s496 + $0x18] sm:$0xff]
        %v501 = vld [vmem:[%s496 + $0x20] sm:$0xff]
        %v502 = vld [vmem:[%s496 + $0x28] sm:$0xff]
        %v503 = vld [vmem:[%s496 + $0x30] sm:$0xff]
        %v504 = vld [vmem:[%s496 + $0x38] sm:$0xff]
        %vm505 = vcmask 261120
        %v507 = vsel %vm505, %v449, 0
        %v510 = vsel %vm505, %v450, 0
        %v513 = vsel %vm505, %v451, 0
        %v516 = vsel %vm505, %v452, 0
        %v519 = vsel %vm505, %v453, 0
        %v522 = vsel %vm505, %v454, 0
        %v525 = vsel %vm505, %v455, 0
        %v528 = vsel %vm505, %v456, 0
        %v531 = vsel %vm505, %v457, 0
        %v534 = vsel %vm505, %v458, 0
        %v537 = vsel %vm505, %v459, 0
        %v540 = vsel %vm505, %v460, 0
        %v543 = vsel %vm505, %v461, 0
        %v546 = vsel %vm505, %v462, 0
        %v549 = vsel %vm505, %v463, 0
        %v552 = vsel %vm505, %v464, 0
        %v555 = vsel %vm505, %v465, 0
        %v558 = vsel %vm505, %v466, 0
        %v561 = vsel %vm505, %v467, 0
        %v564 = vsel %vm505, %v468, 0
        %v567 = vsel %vm505, %v469, 0
        %v570 = vsel %vm505, %v470, 0
        %v573 = vsel %vm505, %v471, 0
        %v576 = vsel %vm505, %v472, 0
        %v579 = vsel %vm505, %v473, 0
        %v582 = vsel %vm505, %v474, 0
        %v585 = vsel %vm505, %v475, 0
        %v588 = vsel %vm505, %v476, 0
        %590 = vmatprep.subr.mxu0 0.0
        %591 = vmatpush1.msra.mxu0 0.0
        %592 = vmatprep.subr.mxu0 0.0
        %593 = vmatpush1.msra.mxu0 0.0
        %594 = vmatprep.subr.mxu0 0.0
        %595 = vmatpush1.msra.mxu0 0.0
        %596 = vmatprep.subr.mxu0 0.0
        %597 = vmatpush1.msra.mxu0 0.0
        %598 = vmatprep.subr.mxu0 0.0
        %599 = vmatpush1.msra.mxu0 0.0
        %600 = vmatprep.subr.mxu0 0.0
        %601 = vmatpush1.msra.mxu0 0.0
        %602 = vmatprep.subr.mxu0 0.0
        %603 = vmatpush1.msra.mxu0 0.0
        %604 = vmatprep.subr.mxu0 0.0
        %605 = vmatpush1.msra.mxu0 0.0
        %606 = vmatprep.subr.mxu0 0.0
        %607 = vmatpush1.msra.mxu0 0.0
        %608 = vmatprep.subr.mxu0 0.0
        %609 = vmatpush1.msra.mxu0 0.0
        %610 = vmatprep.subr.mxu0 0.0
        %611 = vmatpush1.msra.mxu0 0.0
        %612 = vmatprep.subr.mxu0 0.0
        %613 = vmatpush1.msra.mxu0 0.0
        %614 = vmatprep.subr.mxu0 %v504
        %615 = vmatpush1.msra.mxu0 %v503
        %616 = vmatprep.subr.mxu0 %v502
        %617 = vmatpush1.msra.mxu0 %v501
        %618 = vmatprep.subr.mxu0 %v500
        %619 = vmatpush1.msra.mxu0 %v499
        %620 = vmatprep.subr.mxu0 %v498
        %621 = vmatpush1.msra.mxu0 %v497
        %622 = vmatprep.subr.mxu0 0.0
        %623 = vmatpush2.msra.mxu0 0.0
        %624 = vmatprep.subr.mxu0 0.0
        %625 = vmatpush2.msra.mxu0 0.0
        %626 = vmatprep.subr.mxu0 0.0
        %627 = vmatpush2.msra.mxu0 0.0
        %628 = vmatprep.subr.mxu0 0.0
        %629 = vmatpush2.msra.mxu0 0.0
        %630 = vmatprep.subr.mxu0 0.0
        %631 = vmatpush2.msra.mxu0 0.0
        %632 = vmatprep.subr.mxu0 0.0
        %633 = vmatpush2.msra.mxu0 0.0
        %634 = vmatprep.subr.mxu0 0.0
        %635 = vmatpush2.msra.mxu0 0.0
        %636 = vmatprep.subr.mxu0 0.0
        %637 = vmatpush2.msra.mxu0 0.0
        %638 = vmatprep.subr.mxu0 0.0
        %639 = vmatpush2.msra.mxu0 0.0
        %640 = vmatprep.subr.mxu0 0.0
        %641 = vmatpush2.msra.mxu0 0.0
        %642 = vmatprep.subr.mxu0 0.0
        %643 = vmatpush2.msra.mxu0 0.0
        %644 = vmatprep.subr.mxu0 0.0
        %645 = vmatpush2.msra.mxu0 0.0
        %646 = vmatprep.subr.mxu0 0.0
        %647 = vmatpush2.msra.mxu0 0.0
        %648 = vmatprep.subr.mxu0 0.0
        %649 = vmatpush2.msra.mxu0 0.0
        %650 = vmatprep.subr.mxu0 0.0
        %651 = vmatpush2.msra.mxu0 0.0
        %652 = vmatprep.subr.mxu0 0.0
        %653 = vmatpush2.msra.mxu0 0.0
        %654 = vmatprep.mubr.f32.mxu0 0.0
        %655 = vmatmul.mubr.f32.gmra.mxu0 %v507
        %v656 = vpop.f32.mrf.mxu0
        %v657 = vadd.f32 0.0, %v656
        %v658 = vpop.f32.mrf.mxu0
        %v659 = vadd.f32 0.0, %v658
        %660 = vmatprep.mubr.f32.mxu0 0.0
        %661 = vmatmul.mubr.f32.gmra.mxu0 %v510
        %v662 = vpop.f32.mrf.mxu0
        %v663 = vadd.f32 0.0, %v662
        %v664 = vpop.f32.mrf.mxu0
        %v665 = vadd.f32 0.0, %v664
        %666 = vmatprep.mubr.f32.mxu0 0.0
        %667 = vmatmul.mubr.f32.gmra.mxu0 %v513
        %v668 = vpop.f32.mrf.mxu0
        %v669 = vadd.f32 0.0, %v668
        %v670 = vpop.f32.mrf.mxu0
        %v671 = vadd.f32 0.0, %v670
        %672 = vmatprep.mubr.f32.mxu0 0.0
        %673 = vmatmul.mubr.f32.gmra.mxu0 %v516
        %v674 = vpop.f32.mrf.mxu0
        %v675 = vadd.f32 0.0, %v674
        %v676 = vpop.f32.mrf.mxu0
        %v677 = vadd.f32 0.0, %v676
        %678 = vmatprep.mubr.f32.mxu0 0.0
        %679 = vmatmul.mubr.f32.gmra.mxu0 %v519
        %v680 = vpop.f32.mrf.mxu0
        %v681 = vadd.f32 0.0, %v680
        %v682 = vpop.f32.mrf.mxu0
        %v683 = vadd.f32 0.0, %v682
        %684 = vmatprep.mubr.f32.mxu0 0.0
        %685 = vmatmul.mubr.f32.gmra.mxu0 %v522
        %v686 = vpop.f32.mrf.mxu0
        %v687 = vadd.f32 0.0, %v686
        %v688 = vpop.f32.mrf.mxu0
        %v689 = vadd.f32 0.0, %v688
        %690 = vmatprep.mubr.f32.mxu0 0.0
        %691 = vmatmul.mubr.f32.gmra.mxu0 %v525
        %v692 = vpop.f32.mrf.mxu0
        %v693 = vadd.f32 0.0, %v692
        %v694 = vpop.f32.mrf.mxu0
        %v695 = vadd.f32 0.0, %v694
        %696 = vmatprep.mubr.f32.mxu0 0.0
        %697 = vmatmul.mubr.f32.gmra.mxu0 %v528
        %v698 = vpop.f32.mrf.mxu0
        %v699 = vadd.f32 0.0, %v698
        %v700 = vpop.f32.mrf.mxu0
        %v701 = vadd.f32 0.0, %v700
        %702 = vmatprep.mubr.f32.mxu0 0.0
        %703 = vmatmul.mubr.f32.gmra.mxu0 %v531
        %v704 = vpop.f32.mrf.mxu0
        %v705 = vadd.f32 0.0, %v704
        %v706 = vpop.f32.mrf.mxu0
        %v707 = vadd.f32 0.0, %v706
        %708 = vmatprep.mubr.f32.mxu0 0.0
        %709 = vmatmul.mubr.f32.gmra.mxu0 %v534
        %v710 = vpop.f32.mrf.mxu0
        %v711 = vadd.f32 0.0, %v710
        %v712 = vpop.f32.mrf.mxu0
        %v713 = vadd.f32 0.0, %v712
        %714 = vmatprep.mubr.f32.mxu0 0.0
        %715 = vmatmul.mubr.f32.gmra.mxu0 %v537
        %v716 = vpop.f32.mrf.mxu0
        %v717 = vadd.f32 0.0, %v716
        %v718 = vpop.f32.mrf.mxu0
        %v719 = vadd.f32 0.0, %v718
        %720 = vmatprep.mubr.f32.mxu0 0.0
        %721 = vmatmul.mubr.f32.gmra.mxu0 %v540
        %v722 = vpop.f32.mrf.mxu0
        %v723 = vadd.f32 0.0, %v722
        %v724 = vpop.f32.mrf.mxu0
        %v725 = vadd.f32 0.0, %v724
        %726 = vmatprep.mubr.f32.mxu0 0.0
        %727 = vmatmul.mubr.f32.gmra.mxu0 %v543
        %v728 = vpop.f32.mrf.mxu0
        %v729 = vadd.f32 0.0, %v728
        %v730 = vpop.f32.mrf.mxu0
        %v731 = vadd.f32 0.0, %v730
        %732 = vmatprep.mubr.f32.mxu0 0.0
        %733 = vmatmul.mubr.f32.gmra.mxu0 %v546
        %v734 = vpop.f32.mrf.mxu0
        %v735 = vadd.f32 0.0, %v734
        %v736 = vpop.f32.mrf.mxu0
        %v737 = vadd.f32 0.0, %v736
        %738 = vmatprep.mubr.f32.mxu0 0.0
        %739 = vmatmul.mubr.f32.gmra.mxu0 %v549
        %v740 = vpop.f32.mrf.mxu0
        %v741 = vadd.f32 0.0, %v740
        %v742 = vpop.f32.mrf.mxu0
        %v743 = vadd.f32 0.0, %v742
        %744 = vmatprep.mubr.f32.mxu0 0.0
        %745 = vmatmul.mubr.f32.gmra.mxu0 %v552
        %v746 = vpop.f32.mrf.mxu0
        %v747 = vadd.f32 0.0, %v746
        %v748 = vpop.f32.mrf.mxu0
        %v749 = vadd.f32 0.0, %v748
        %750 = vmatprep.mubr.f32.mxu0 0.0
        %751 = vmatmul.mubr.f32.gmra.mxu0 %v555
        %v752 = vpop.f32.mrf.mxu0
        %v753 = vadd.f32 0.0, %v752
        %v754 = vpop.f32.mrf.mxu0
        %v755 = vadd.f32 0.0, %v754
        %756 = vmatprep.mubr.f32.mxu0 0.0
        %757 = vmatmul.mubr.f32.gmra.mxu0 %v558
        %v758 = vpop.f32.mrf.mxu0
        %v759 = vadd.f32 0.0, %v758
        %v760 = vpop.f32.mrf.mxu0
        %v761 = vadd.f32 0.0, %v760
        %762 = vmatprep.mubr.f32.mxu0 0.0
        %763 = vmatmul.mubr.f32.gmra.mxu0 %v561
        %v764 = vpop.f32.mrf.mxu0
        %v765 = vadd.f32 0.0, %v764
        %v766 = vpop.f32.mrf.mxu0
        %v767 = vadd.f32 0.0, %v766
        %768 = vmatprep.mubr.f32.mxu0 0.0
        %769 = vmatmul.mubr.f32.gmra.mxu0 %v564
        %v770 = vpop.f32.mrf.mxu0
        %v771 = vadd.f32 0.0, %v770
        %v772 = vpop.f32.mrf.mxu0
        %v773 = vadd.f32 0.0, %v772
        %774 = vmatprep.mubr.f32.mxu0 0.0
        %775 = vmatmul.mubr.f32.gmra.mxu0 %v567
        %v776 = vpop.f32.mrf.mxu0
        %v777 = vadd.f32 0.0, %v776
        %v778 = vpop.f32.mrf.mxu0
        %v779 = vadd.f32 0.0, %v778
        %780 = vmatprep.mubr.f32.mxu0 0.0
        %781 = vmatmul.mubr.f32.gmra.mxu0 %v570
        %v782 = vpop.f32.mrf.mxu0
        %v783 = vadd.f32 0.0, %v782
        %v784 = vpop.f32.mrf.mxu0
        %v785 = vadd.f32 0.0, %v784
        %786 = vmatprep.mubr.f32.mxu0 0.0
        %787 = vmatmul.mubr.f32.gmra.mxu0 %v573
        %v788 = vpop.f32.mrf.mxu0
        %v789 = vadd.f32 0.0, %v788
        %v790 = vpop.f32.mrf.mxu0
        %v791 = vadd.f32 0.0, %v790
        %792 = vmatprep.mubr.f32.mxu0 0.0
        %793 = vmatmul.mubr.f32.gmra.mxu0 %v576
        %v794 = vpop.f32.mrf.mxu0
        %v795 = vadd.f32 0.0, %v794
        %v796 = vpop.f32.mrf.mxu0
        %v797 = vadd.f32 0.0, %v796
        %798 = vmatprep.mubr.f32.mxu0 0.0
        %799 = vmatmul.mubr.f32.gmra.mxu0 %v579
        %v800 = vpop.f32.mrf.mxu0
        %v801 = vadd.f32 0.0, %v800
        %v802 = vpop.f32.mrf.mxu0
        %v803 = vadd.f32 0.0, %v802
        %804 = vmatprep.mubr.f32.mxu0 0.0
        %805 = vmatmul.mubr.f32.gmra.mxu0 %v582
        %v806 = vpop.f32.mrf.mxu0
        %v807 = vadd.f32 0.0, %v806
        %v808 = vpop.f32.mrf.mxu0
        %v809 = vadd.f32 0.0, %v808
        %810 = vmatprep.mubr.f32.mxu0 0.0
        %811 = vmatmul.mubr.f32.gmra.mxu0 %v585
        %v812 = vpop.f32.mrf.mxu0
        %v813 = vadd.f32 0.0, %v812
        %v814 = vpop.f32.mrf.mxu0
        %v815 = vadd.f32 0.0, %v814
        %816 = vmatprep.mubr.f32.mxu0 0.0
        %817 = vmatmul.mubr.f32.gmra.mxu0 %v588
        %v818 = vpop.f32.mrf.mxu0
        %v819 = vadd.f32 0.0, %v818
        %v820 = vpop.f32.mrf.mxu0
        %v821 = vadd.f32 0.0, %v820
        %822 = vdwg.mxu0
        %v824 = vsel %vm505, %v448, 0
        %826 = vmatprep.subr.mxu0 0.0
        %827 = vmatpush1.msra.mxu0 0.0
        %828 = vmatprep.subr.mxu0 0.0
        %829 = vmatpush1.msra.mxu0 0.0
        %830 = vmatprep.subr.mxu0 0.0
        %831 = vmatpush1.msra.mxu0 0.0
        %832 = vmatprep.subr.mxu0 0.0
        %833 = vmatpush1.msra.mxu0 0.0
        %834 = vmatprep.subr.mxu0 0.0
        %835 = vmatpush1.msra.mxu0 0.0
        %836 = vmatprep.subr.mxu0 0.0
        %837 = vmatpush1.msra.mxu0 0.0
        %838 = vmatprep.subr.mxu0 0.0
        %839 = vmatpush1.msra.mxu0 0.0
        %840 = vmatprep.subr.mxu0 0.0
        %841 = vmatpush1.msra.mxu0 0.0
        %842 = vmatprep.subr.mxu0 0.0
        %843 = vmatpush1.msra.mxu0 0.0
        %844 = vmatprep.subr.mxu0 0.0
        %845 = vmatpush1.msra.mxu0 0.0
        %846 = vmatprep.subr.mxu0 0.0
        %847 = vmatpush1.msra.mxu0 0.0
        %848 = vmatprep.subr.mxu0 0.0
        %849 = vmatpush1.msra.mxu0 0.0
        %850 = vmatprep.subr.mxu0 %v487
        %851 = vmatpush1.msra.mxu0 %v486
        %852 = vmatprep.subr.mxu0 %v485
        %853 = vmatpush1.msra.mxu0 %v484
        %854 = vmatprep.subr.mxu0 %v483
        %855 = vmatpush1.msra.mxu0 %v482
        %856 = vmatprep.subr.mxu0 %v481
        %857 = vmatpush1.msra.mxu0 %v480
        %858 = vmatprep.subr.mxu0 0.0
        %859 = vmatpush2.msra.mxu0 0.0
        %860 = vmatprep.subr.mxu0 0.0
        %861 = vmatpush2.msra.mxu0 0.0
        %862 = vmatprep.subr.mxu0 0.0
        %863 = vmatpush2.msra.mxu0 0.0
        %864 = vmatprep.subr.mxu0 0.0
        %865 = vmatpush2.msra.mxu0 0.0
        %866 = vmatprep.subr.mxu0 0.0
        %867 = vmatpush2.msra.mxu0 0.0
        %868 = vmatprep.subr.mxu0 0.0
        %869 = vmatpush2.msra.mxu0 0.0
        %870 = vmatprep.subr.mxu0 0.0
        %871 = vmatpush2.msra.mxu0 0.0
        %872 = vmatprep.subr.mxu0 0.0
        %873 = vmatpush2.msra.mxu0 0.0
        %874 = vmatprep.subr.mxu0 0.0
        %875 = vmatpush2.msra.mxu0 0.0
        %876 = vmatprep.subr.mxu0 0.0
        %877 = vmatpush2.msra.mxu0 0.0
        %878 = vmatprep.subr.mxu0 0.0
        %879 = vmatpush2.msra.mxu0 0.0
        %880 = vmatprep.subr.mxu0 0.0
        %881 = vmatpush2.msra.mxu0 0.0
        %882 = vmatprep.subr.mxu0 0.0
        %883 = vmatpush2.msra.mxu0 0.0
        %884 = vmatprep.subr.mxu0 0.0
        %885 = vmatpush2.msra.mxu0 0.0
        %886 = vmatprep.subr.mxu0 0.0
        %887 = vmatpush2.msra.mxu0 0.0
        %888 = vmatprep.subr.mxu0 0.0
        %889 = vmatpush2.msra.mxu0 0.0
        %890 = vmatprep.mubr.f32.mxu0 0.0
        %891 = vmatmul.mubr.f32.gmra.mxu0 %v824
        %v892 = vpop.f32.mrf.mxu0
        %v893 = vadd.f32 %v657, %v892
        %v894 = vpop.f32.mrf.mxu0
        %v895 = vadd.f32 %v659, %v894
        %896 = vmatprep.mubr.f32.mxu0 0.0
        %897 = vmatmul.mubr.f32.gmra.mxu0 %v507
        %v898 = vpop.f32.mrf.mxu0
        %v899 = vadd.f32 %v663, %v898
        %v900 = vpop.f32.mrf.mxu0
        %v901 = vadd.f32 %v665, %v900
        %902 = vmatprep.mubr.f32.mxu0 0.0
        %903 = vmatmul.mubr.f32.gmra.mxu0 %v510
        %v904 = vpop.f32.mrf.mxu0
        %v905 = vadd.f32 %v669, %v904
        %v906 = vpop.f32.mrf.mxu0
        %v907 = vadd.f32 %v671, %v906
        %908 = vmatprep.mubr.f32.mxu0 0.0
        %909 = vmatmul.mubr.f32.gmra.mxu0 %v513
        %v910 = vpop.f32.mrf.mxu0
        %v911 = vadd.f32 %v675, %v910
        %v912 = vpop.f32.mrf.mxu0
        %v913 = vadd.f32 %v677, %v912
        %914 = vmatprep.mubr.f32.mxu0 0.0
        %915 = vmatmul.mubr.f32.gmra.mxu0 %v516
        %v916 = vpop.f32.mrf.mxu0
        %v917 = vadd.f32 %v681, %v916
        %v918 = vpop.f32.mrf.mxu0
        %v919 = vadd.f32 %v683, %v918
        %920 = vmatprep.mubr.f32.mxu0 0.0
        %921 = vmatmul.mubr.f32.gmra.mxu0 %v519
        %v922 = vpop.f32.mrf.mxu0
        %v923 = vadd.f32 %v687, %v922
        %v924 = vpop.f32.mrf.mxu0
        %v925 = vadd.f32 %v689, %v924
        %926 = vmatprep.mubr.f32.mxu0 0.0
        %927 = vmatmul.mubr.f32.gmra.mxu0 %v522
        %v928 = vpop.f32.mrf.mxu0
        %v929 = vadd.f32 %v693, %v928
        %v930 = vpop.f32.mrf.mxu0
        %v931 = vadd.f32 %v695, %v930
        %932 = vmatprep.mubr.f32.mxu0 0.0
        %933 = vmatmul.mubr.f32.gmra.mxu0 %v525
        %v934 = vpop.f32.mrf.mxu0
        %v935 = vadd.f32 %v699, %v934
        %v936 = vpop.f32.mrf.mxu0
        %v937 = vadd.f32 %v701, %v936
        %938 = vmatprep.mubr.f32.mxu0 0.0
        %939 = vmatmul.mubr.f32.gmra.mxu0 %v528
        %v940 = vpop.f32.mrf.mxu0
        %v941 = vadd.f32 %v705, %v940
        %v942 = vpop.f32.mrf.mxu0
        %v943 = vadd.f32 %v707, %v942
        %944 = vmatprep.mubr.f32.mxu0 0.0
        %945 = vmatmul.mubr.f32.gmra.mxu0 %v531
        %v946 = vpop.f32.mrf.mxu0
        %v947 = vadd.f32 %v711, %v946
        %v948 = vpop.f32.mrf.mxu0
        %v949 = vadd.f32 %v713, %v948
        %950 = vmatprep.mubr.f32.mxu0 0.0
        %951 = vmatmul.mubr.f32.gmra.mxu0 %v534
        %v952 = vpop.f32.mrf.mxu0
        %v953 = vadd.f32 %v717, %v952
        %v954 = vpop.f32.mrf.mxu0
        %v955 = vadd.f32 %v719, %v954
        %956 = vmatprep.mubr.f32.mxu0 0.0
        %957 = vmatmul.mubr.f32.gmra.mxu0 %v537
        %v958 = vpop.f32.mrf.mxu0
        %v959 = vadd.f32 %v723, %v958
        %v960 = vpop.f32.mrf.mxu0
        %v961 = vadd.f32 %v725, %v960
        %962 = vmatprep.mubr.f32.mxu0 0.0
        %963 = vmatmul.mubr.f32.gmra.mxu0 %v540
        %v964 = vpop.f32.mrf.mxu0
        %v965 = vadd.f32 %v729, %v964
        %v966 = vpop.f32.mrf.mxu0
        %v967 = vadd.f32 %v731, %v966
        %968 = vmatprep.mubr.f32.mxu0 0.0
        %969 = vmatmul.mubr.f32.gmra.mxu0 %v543
        %v970 = vpop.f32.mrf.mxu0
        %v971 = vadd.f32 %v735, %v970
        %v972 = vpop.f32.mrf.mxu0
        %v973 = vadd.f32 %v737, %v972
        %974 = vmatprep.mubr.f32.mxu0 0.0
        %975 = vmatmul.mubr.f32.gmra.mxu0 %v546
        %v976 = vpop.f32.mrf.mxu0
        %v977 = vadd.f32 %v741, %v976
        %v978 = vpop.f32.mrf.mxu0
        %v979 = vadd.f32 %v743, %v978
        %980 = vmatprep.mubr.f32.mxu0 0.0
        %981 = vmatmul.mubr.f32.gmra.mxu0 %v549
        %v982 = vpop.f32.mrf.mxu0
        %v983 = vadd.f32 %v747, %v982
        %v984 = vpop.f32.mrf.mxu0
        %v985 = vadd.f32 %v749, %v984
        %986 = vmatprep.mubr.f32.mxu0 0.0
        %987 = vmatmul.mubr.f32.gmra.mxu0 %v552
        %v988 = vpop.f32.mrf.mxu0
        %v989 = vadd.f32 %v753, %v988
        %v990 = vpop.f32.mrf.mxu0
        %v991 = vadd.f32 %v755, %v990
        %992 = vmatprep.mubr.f32.mxu0 0.0
        %993 = vmatmul.mubr.f32.gmra.mxu0 %v555
        %v994 = vpop.f32.mrf.mxu0
        %v995 = vadd.f32 %v759, %v994
        %v996 = vpop.f32.mrf.mxu0
        %v997 = vadd.f32 %v761, %v996
        %998 = vmatprep.mubr.f32.mxu0 0.0
        %999 = vmatmul.mubr.f32.gmra.mxu0 %v558
        %v1000 = vpop.f32.mrf.mxu0
        %v1001 = vadd.f32 %v765, %v1000
        %v1002 = vpop.f32.mrf.mxu0
        %v1003 = vadd.f32 %v767, %v1002
        %1004 = vmatprep.mubr.f32.mxu0 0.0
        %1005 = vmatmul.mubr.f32.gmra.mxu0 %v561
        %v1006 = vpop.f32.mrf.mxu0
        %v1007 = vadd.f32 %v771, %v1006
        %v1008 = vpop.f32.mrf.mxu0
        %v1009 = vadd.f32 %v773, %v1008
        %1010 = vmatprep.mubr.f32.mxu0 0.0
        %1011 = vmatmul.mubr.f32.gmra.mxu0 %v564
        %v1012 = vpop.f32.mrf.mxu0
        %v1013 = vadd.f32 %v777, %v1012
        %v1014 = vpop.f32.mrf.mxu0
        %v1015 = vadd.f32 %v779, %v1014
        %1016 = vmatprep.mubr.f32.mxu0 0.0
        %1017 = vmatmul.mubr.f32.gmra.mxu0 %v567
        %v1018 = vpop.f32.mrf.mxu0
        %v1019 = vadd.f32 %v783, %v1018
        %v1020 = vpop.f32.mrf.mxu0
        %v1021 = vadd.f32 %v785, %v1020
        %1022 = vmatprep.mubr.f32.mxu0 0.0
        %1023 = vmatmul.mubr.f32.gmra.mxu0 %v570
        %v1024 = vpop.f32.mrf.mxu0
        %v1025 = vadd.f32 %v789, %v1024
        %v1026 = vpop.f32.mrf.mxu0
        %v1027 = vadd.f32 %v791, %v1026
        %1028 = vmatprep.mubr.f32.mxu0 0.0
        %1029 = vmatmul.mubr.f32.gmra.mxu0 %v573
        %v1030 = vpop.f32.mrf.mxu0
        %v1031 = vadd.f32 %v795, %v1030
        %v1032 = vpop.f32.mrf.mxu0
        %v1033 = vadd.f32 %v797, %v1032
        %1034 = vmatprep.mubr.f32.mxu0 0.0
        %1035 = vmatmul.mubr.f32.gmra.mxu0 %v576
        %v1036 = vpop.f32.mrf.mxu0
        %v1037 = vadd.f32 %v801, %v1036
        %v1038 = vpop.f32.mrf.mxu0
        %v1039 = vadd.f32 %v803, %v1038
        %1040 = vmatprep.mubr.f32.mxu0 0.0
        %1041 = vmatmul.mubr.f32.gmra.mxu0 %v579
        %v1042 = vpop.f32.mrf.mxu0
        %v1043 = vadd.f32 %v807, %v1042
        %v1044 = vpop.f32.mrf.mxu0
        %v1045 = vadd.f32 %v809, %v1044
        %1046 = vmatprep.mubr.f32.mxu0 0.0
        %1047 = vmatmul.mubr.f32.gmra.mxu0 %v582
        %v1048 = vpop.f32.mrf.mxu0
        %v1049 = vadd.f32 %v813, %v1048
        %v1050 = vpop.f32.mrf.mxu0
        %v1051 = vadd.f32 %v815, %v1050
        %1052 = vmatprep.mubr.f32.mxu0 0.0
        %1053 = vmatmul.mubr.f32.gmra.mxu0 %v585
        %v1054 = vpop.f32.mrf.mxu0
        %v1055 = vadd.f32 %v819, %v1054
        %v1056 = vpop.f32.mrf.mxu0
        %v1057 = vadd.f32 %v821, %v1056
        %1058 = vdwg.mxu0
        %s1059 = scalar_lea.vmem [#allocation7], 64
        %v1060 = vld [vmem:[%s1059] sm:$0xff]
        %v1061 = vld [vmem:[%s1059 + $0x8] sm:$0xff]
        %v1062 = vld [vmem:[%s1059 + $0x10] sm:$0xff]
        %v1063 = vld [vmem:[%s1059 + $0x18] sm:$0xff]
        %v1064 = vld [vmem:[%s1059 + $0x20] sm:$0xff]
        %v1065 = vld [vmem:[%s1059 + $0x28] sm:$0xff]
        %v1066 = vld [vmem:[%s1059 + $0x30] sm:$0xff]
        %v1067 = vld [vmem:[%s1059 + $0x38] sm:$0xff]
        %1068 = vmatprep.subr.mxu0 0.0
        %1069 = vmatpush1.msra.mxu0 0.0
        %1070 = vmatprep.subr.mxu0 0.0
        %1071 = vmatpush1.msra.mxu0 0.0
        %1072 = vmatprep.subr.mxu0 0.0
        %1073 = vmatpush1.msra.mxu0 0.0
        %1074 = vmatprep.subr.mxu0 0.0
        %1075 = vmatpush1.msra.mxu0 0.0
        %1076 = vmatprep.subr.mxu0 0.0
        %1077 = vmatpush1.msra.mxu0 0.0
        %1078 = vmatprep.subr.mxu0 0.0
        %1079 = vmatpush1.msra.mxu0 0.0
        %1080 = vmatprep.subr.mxu0 0.0
        %1081 = vmatpush1.msra.mxu0 0.0
        %1082 = vmatprep.subr.mxu0 0.0
        %1083 = vmatpush1.msra.mxu0 0.0
        %1084 = vmatprep.subr.mxu0 0.0
        %1085 = vmatpush1.msra.mxu0 0.0
        %1086 = vmatprep.subr.mxu0 0.0
        %1087 = vmatpush1.msra.mxu0 0.0
        %1088 = vmatprep.subr.mxu0 0.0
        %1089 = vmatpush1.msra.mxu0 0.0
        %1090 = vmatprep.subr.mxu0 0.0
        %1091 = vmatpush1.msra.mxu0 0.0
        %1092 = vmatprep.subr.mxu0 %v1067
        %1093 = vmatpush1.msra.mxu0 %v1066
        %1094 = vmatprep.subr.mxu0 %v1065
        %1095 = vmatpush1.msra.mxu0 %v1064
        %1096 = vmatprep.subr.mxu0 %v1063
        %1097 = vmatpush1.msra.mxu0 %v1062
        %1098 = vmatprep.subr.mxu0 %v1061
        %1099 = vmatpush1.msra.mxu0 %v1060
        %1100 = vmatprep.subr.mxu0 0.0
        %1101 = vmatpush2.msra.mxu0 0.0
        %1102 = vmatprep.subr.mxu0 0.0
        %1103 = vmatpush2.msra.mxu0 0.0
        %1104 = vmatprep.subr.mxu0 0.0
        %1105 = vmatpush2.msra.mxu0 0.0
        %1106 = vmatprep.subr.mxu0 0.0
        %1107 = vmatpush2.msra.mxu0 0.0
        %1108 = vmatprep.subr.mxu0 0.0
        %1109 = vmatpush2.msra.mxu0 0.0
        %1110 = vmatprep.subr.mxu0 0.0
        %1111 = vmatpush2.msra.mxu0 0.0
        %1112 = vmatprep.subr.mxu0 0.0
        %1113 = vmatpush2.msra.mxu0 0.0
        %1114 = vmatprep.subr.mxu0 0.0
        %1115 = vmatpush2.msra.mxu0 0.0
        %1116 = vmatprep.subr.mxu0 0.0
        %1117 = vmatpush2.msra.mxu0 0.0
        %1118 = vmatprep.subr.mxu0 0.0
        %1119 = vmatpush2.msra.mxu0 0.0
        %1120 = vmatprep.subr.mxu0 0.0
        %1121 = vmatpush2.msra.mxu0 0.0
        %1122 = vmatprep.subr.mxu0 0.0
        %1123 = vmatpush2.msra.mxu0 0.0
        %1124 = vmatprep.subr.mxu0 0.0
        %1125 = vmatpush2.msra.mxu0 0.0
        %1126 = vmatprep.subr.mxu0 0.0
        %1127 = vmatpush2.msra.mxu0 0.0
        %1128 = vmatprep.subr.mxu0 0.0
        %1129 = vmatpush2.msra.mxu0 0.0
        %1130 = vmatprep.subr.mxu0 0.0
        %1131 = vmatpush2.msra.mxu0 0.0
        %1132 = vmatprep.mubr.f32.mxu0 0.0
        %1133 = vmatmul.mubr.f32.gmra.mxu0 %v507
        %v1134 = vpop.f32.mrf.mxu0
        %v1135 = vadd.f32 0.0, %v1134
        %v1136 = vpop.f32.mrf.mxu0
        %v1137 = vadd.f32 0.0, %v1136
        %1138 = vmatprep.mubr.f32.mxu0 0.0
        %1139 = vmatmul.mubr.f32.gmra.mxu0 %v510
        %v1140 = vpop.f32.mrf.mxu0
        %v1141 = vadd.f32 0.0, %v1140
        %v1142 = vpop.f32.mrf.mxu0
        %v1143 = vadd.f32 0.0, %v1142
        %1144 = vmatprep.mubr.f32.mxu0 0.0
        %1145 = vmatmul.mubr.f32.gmra.mxu0 %v513
        %v1146 = vpop.f32.mrf.mxu0
        %v1147 = vadd.f32 0.0, %v1146
        %v1148 = vpop.f32.mrf.mxu0
        %v1149 = vadd.f32 0.0, %v1148
        %1150 = vmatprep.mubr.f32.mxu0 0.0
        %1151 = vmatmul.mubr.f32.gmra.mxu0 %v516
        %v1152 = vpop.f32.mrf.mxu0
        %v1153 = vadd.f32 0.0, %v1152
        %v1154 = vpop.f32.mrf.mxu0
        %v1155 = vadd.f32 0.0, %v1154
        %1156 = vmatprep.mubr.f32.mxu0 0.0
        %1157 = vmatmul.mubr.f32.gmra.mxu0 %v519
        %v1158 = vpop.f32.mrf.mxu0
        %v1159 = vadd.f32 0.0, %v1158
        %v1160 = vpop.f32.mrf.mxu0
        %v1161 = vadd.f32 0.0, %v1160
        %1162 = vmatprep.mubr.f32.mxu0 0.0
        %1163 = vmatmul.mubr.f32.gmra.mxu0 %v522
        %v1164 = vpop.f32.mrf.mxu0
        %v1165 = vadd.f32 0.0, %v1164
        %v1166 = vpop.f32.mrf.mxu0
        %v1167 = vadd.f32 0.0, %v1166
        %1168 = vmatprep.mubr.f32.mxu0 0.0
        %1169 = vmatmul.mubr.f32.gmra.mxu0 %v525
        %v1170 = vpop.f32.mrf.mxu0
        %v1171 = vadd.f32 0.0, %v1170
        %v1172 = vpop.f32.mrf.mxu0
        %v1173 = vadd.f32 0.0, %v1172
        %1174 = vmatprep.mubr.f32.mxu0 0.0
        %1175 = vmatmul.mubr.f32.gmra.mxu0 %v528
        %v1176 = vpop.f32.mrf.mxu0
        %v1177 = vadd.f32 0.0, %v1176
        %v1178 = vpop.f32.mrf.mxu0
        %v1179 = vadd.f32 0.0, %v1178
        %1180 = vmatprep.mubr.f32.mxu0 0.0
        %1181 = vmatmul.mubr.f32.gmra.mxu0 %v531
        %v1182 = vpop.f32.mrf.mxu0
        %v1183 = vadd.f32 0.0, %v1182
        %v1184 = vpop.f32.mrf.mxu0
        %v1185 = vadd.f32 0.0, %v1184
        %1186 = vmatprep.mubr.f32.mxu0 0.0
        %1187 = vmatmul.mubr.f32.gmra.mxu0 %v534
        %v1188 = vpop.f32.mrf.mxu0
        %v1189 = vadd.f32 0.0, %v1188
        %v1190 = vpop.f32.mrf.mxu0
        %v1191 = vadd.f32 0.0, %v1190
        %1192 = vmatprep.mubr.f32.mxu0 0.0
        %1193 = vmatmul.mubr.f32.gmra.mxu0 %v537
        %v1194 = vpop.f32.mrf.mxu0
        %v1195 = vadd.f32 0.0, %v1194
        %v1196 = vpop.f32.mrf.mxu0
        %v1197 = vadd.f32 0.0, %v1196
        %1198 = vmatprep.mubr.f32.mxu0 0.0
        %1199 = vmatmul.mubr.f32.gmra.mxu0 %v540
        %v1200 = vpop.f32.mrf.mxu0
        %v1201 = vadd.f32 0.0, %v1200
        %v1202 = vpop.f32.mrf.mxu0
        %v1203 = vadd.f32 0.0, %v1202
        %1204 = vmatprep.mubr.f32.mxu0 0.0
        %1205 = vmatmul.mubr.f32.gmra.mxu0 %v543
        %v1206 = vpop.f32.mrf.mxu0
        %v1207 = vadd.f32 0.0, %v1206
        %v1208 = vpop.f32.mrf.mxu0
        %v1209 = vadd.f32 0.0, %v1208
        %1210 = vmatprep.mubr.f32.mxu0 0.0
        %1211 = vmatmul.mubr.f32.gmra.mxu0 %v546
        %v1212 = vpop.f32.mrf.mxu0
        %v1213 = vadd.f32 0.0, %v1212
        %v1214 = vpop.f32.mrf.mxu0
        %v1215 = vadd.f32 0.0, %v1214
        %1216 = vmatprep.mubr.f32.mxu0 0.0
        %1217 = vmatmul.mubr.f32.gmra.mxu0 %v549
        %v1218 = vpop.f32.mrf.mxu0
        %v1219 = vadd.f32 0.0, %v1218
        %v1220 = vpop.f32.mrf.mxu0
        %v1221 = vadd.f32 0.0, %v1220
        %1222 = vmatprep.mubr.f32.mxu0 0.0
        %1223 = vmatmul.mubr.f32.gmra.mxu0 %v552
        %v1224 = vpop.f32.mrf.mxu0
        %v1225 = vadd.f32 0.0, %v1224
        %v1226 = vpop.f32.mrf.mxu0
        %v1227 = vadd.f32 0.0, %v1226
        %1228 = vmatprep.mubr.f32.mxu0 0.0
        %1229 = vmatmul.mubr.f32.gmra.mxu0 %v555
        %v1230 = vpop.f32.mrf.mxu0
        %v1231 = vadd.f32 0.0, %v1230
        %v1232 = vpop.f32.mrf.mxu0
        %v1233 = vadd.f32 0.0, %v1232
        %1234 = vmatprep.mubr.f32.mxu0 0.0
        %1235 = vmatmul.mubr.f32.gmra.mxu0 %v558
        %v1236 = vpop.f32.mrf.mxu0
        %v1237 = vadd.f32 0.0, %v1236
        %v1238 = vpop.f32.mrf.mxu0
        %v1239 = vadd.f32 0.0, %v1238
        %1240 = vmatprep.mubr.f32.mxu0 0.0
        %1241 = vmatmul.mubr.f32.gmra.mxu0 %v561
        %v1242 = vpop.f32.mrf.mxu0
        %v1243 = vadd.f32 0.0, %v1242
        %v1244 = vpop.f32.mrf.mxu0
        %v1245 = vadd.f32 0.0, %v1244
        %1246 = vmatprep.mubr.f32.mxu0 0.0
        %1247 = vmatmul.mubr.f32.gmra.mxu0 %v564
        %v1248 = vpop.f32.mrf.mxu0
        %v1249 = vadd.f32 0.0, %v1248
        %v1250 = vpop.f32.mrf.mxu0
        %v1251 = vadd.f32 0.0, %v1250
        %1252 = vmatprep.mubr.f32.mxu0 0.0
        %1253 = vmatmul.mubr.f32.gmra.mxu0 %v567
        %v1254 = vpop.f32.mrf.mxu0
        %v1255 = vadd.f32 0.0, %v1254
        %v1256 = vpop.f32.mrf.mxu0
        %v1257 = vadd.f32 0.0, %v1256
        %1258 = vmatprep.mubr.f32.mxu0 0.0
        %1259 = vmatmul.mubr.f32.gmra.mxu0 %v570
        %v1260 = vpop.f32.mrf.mxu0
        %v1261 = vadd.f32 0.0, %v1260
        %v1262 = vpop.f32.mrf.mxu0
        %v1263 = vadd.f32 0.0, %v1262
        %1264 = vmatprep.mubr.f32.mxu0 0.0
        %1265 = vmatmul.mubr.f32.gmra.mxu0 %v573
        %v1266 = vpop.f32.mrf.mxu0
        %v1267 = vadd.f32 0.0, %v1266
        %v1268 = vpop.f32.mrf.mxu0
        %v1269 = vadd.f32 0.0, %v1268
        %1270 = vmatprep.mubr.f32.mxu0 0.0
        %1271 = vmatmul.mubr.f32.gmra.mxu0 %v576
        %v1272 = vpop.f32.mrf.mxu0
        %v1273 = vadd.f32 0.0, %v1272
        %v1274 = vpop.f32.mrf.mxu0
        %v1275 = vadd.f32 0.0, %v1274
        %1276 = vmatprep.mubr.f32.mxu0 0.0
        %1277 = vmatmul.mubr.f32.gmra.mxu0 %v579
        %v1278 = vpop.f32.mrf.mxu0
        %v1279 = vadd.f32 0.0, %v1278
        %v1280 = vpop.f32.mrf.mxu0
        %v1281 = vadd.f32 0.0, %v1280
        %1282 = vmatprep.mubr.f32.mxu0 0.0
        %1283 = vmatmul.mubr.f32.gmra.mxu0 %v582
        %v1284 = vpop.f32.mrf.mxu0
        %v1285 = vadd.f32 0.0, %v1284
        %v1286 = vpop.f32.mrf.mxu0
        %v1287 = vadd.f32 0.0, %v1286
        %1288 = vmatprep.mubr.f32.mxu0 0.0
        %1289 = vmatmul.mubr.f32.gmra.mxu0 %v585
        %v1290 = vpop.f32.mrf.mxu0
        %v1291 = vadd.f32 0.0, %v1290
        %v1292 = vpop.f32.mrf.mxu0
        %v1293 = vadd.f32 0.0, %v1292
        %1294 = vmatprep.mubr.f32.mxu0 0.0
        %1295 = vmatmul.mubr.f32.gmra.mxu0 %v588
        %v1296 = vpop.f32.mrf.mxu0
        %v1297 = vadd.f32 0.0, %v1296
        %v1298 = vpop.f32.mrf.mxu0
        %v1299 = vadd.f32 0.0, %v1298
        %1300 = vdwg.mxu0
        %1301 = vmatprep.subr.mxu0 0.0
        %1302 = vmatpush1.msra.mxu0 0.0
        %1303 = vmatprep.subr.mxu0 0.0
        %1304 = vmatpush1.msra.mxu0 0.0
        %1305 = vmatprep.subr.mxu0 0.0
        %1306 = vmatpush1.msra.mxu0 0.0
        %1307 = vmatprep.subr.mxu0 0.0
        %1308 = vmatpush1.msra.mxu0 0.0
        %1309 = vmatprep.subr.mxu0 0.0
        %1310 = vmatpush1.msra.mxu0 0.0
        %1311 = vmatprep.subr.mxu0 0.0
        %1312 = vmatpush1.msra.mxu0 0.0
        %1313 = vmatprep.subr.mxu0 0.0
        %1314 = vmatpush1.msra.mxu0 0.0
        %1315 = vmatprep.subr.mxu0 0.0
        %1316 = vmatpush1.msra.mxu0 0.0
        %1317 = vmatprep.subr.mxu0 0.0
        %1318 = vmatpush1.msra.mxu0 0.0
        %1319 = vmatprep.subr.mxu0 0.0
        %1320 = vmatpush1.msra.mxu0 0.0
        %1321 = vmatprep.subr.mxu0 0.0
        %1322 = vmatpush1.msra.mxu0 0.0
        %1323 = vmatprep.subr.mxu0 0.0
        %1324 = vmatpush1.msra.mxu0 0.0
        %1325 = vmatprep.subr.mxu0 %v495
        %1326 = vmatpush1.msra.mxu0 %v494
        %1327 = vmatprep.subr.mxu0 %v493
        %1328 = vmatpush1.msra.mxu0 %v492
        %1329 = vmatprep.subr.mxu0 %v491
        %1330 = vmatpush1.msra.mxu0 %v490
        %1331 = vmatprep.subr.mxu0 %v489
        %1332 = vmatpush1.msra.mxu0 %v488
        %1333 = vmatprep.subr.mxu0 0.0
        %1334 = vmatpush2.msra.mxu0 0.0
        %1335 = vmatprep.subr.mxu0 0.0
        %1336 = vmatpush2.msra.mxu0 0.0
        %1337 = vmatprep.subr.mxu0 0.0
        %1338 = vmatpush2.msra.mxu0 0.0
        %1339 = vmatprep.subr.mxu0 0.0
        %1340 = vmatpush2.msra.mxu0 0.0
        %1341 = vmatprep.subr.mxu0 0.0
        %1342 = vmatpush2.msra.mxu0 0.0
        %1343 = vmatprep.subr.mxu0 0.0
        %1344 = vmatpush2.msra.mxu0 0.0
        %1345 = vmatprep.subr.mxu0 0.0
        %1346 = vmatpush2.msra.mxu0 0.0
        %1347 = vmatprep.subr.mxu0 0.0
        %1348 = vmatpush2.msra.mxu0 0.0
        %1349 = vmatprep.subr.mxu0 0.0
        %1350 = vmatpush2.msra.mxu0 0.0
        %1351 = vmatprep.subr.mxu0 0.0
        %1352 = vmatpush2.msra.mxu0 0.0
        %1353 = vmatprep.subr.mxu0 0.0
        %1354 = vmatpush2.msra.mxu0 0.0
        %1355 = vmatprep.subr.mxu0 0.0
        %1356 = vmatpush2.msra.mxu0 0.0
        %1357 = vmatprep.subr.mxu0 0.0
        %1358 = vmatpush2.msra.mxu0 0.0
        %1359 = vmatprep.subr.mxu0 0.0
        %1360 = vmatpush2.msra.mxu0 0.0
        %1361 = vmatprep.subr.mxu0 0.0
        %1362 = vmatpush2.msra.mxu0 0.0
        %1363 = vmatprep.subr.mxu0 0.0
        %1364 = vmatpush2.msra.mxu0 0.0
        %1365 = vmatprep.mubr.f32.mxu0 0.0
        %1366 = vmatmul.mubr.f32.gmra.mxu0 %v824
        %v1367 = vpop.f32.mrf.mxu0
        %v1368 = vadd.f32 %v1135, %v1367
        %v1369 = vpop.f32.mrf.mxu0
        %v1370 = vadd.f32 %v1137, %v1369
        %1371 = vmatprep.mubr.f32.mxu0 0.0
        %1372 = vmatmul.mubr.f32.gmra.mxu0 %v507
        %v1373 = vpop.f32.mrf.mxu0
        %v1374 = vadd.f32 %v1141, %v1373
        %v1375 = vpop.f32.mrf.mxu0
        %v1376 = vadd.f32 %v1143, %v1375
        %1377 = vmatprep.mubr.f32.mxu0 0.0
        %1378 = vmatmul.mubr.f32.gmra.mxu0 %v510
        %v1379 = vpop.f32.mrf.mxu0
        %v1380 = vadd.f32 %v1147, %v1379
        %v1381 = vpop.f32.mrf.mxu0
        %v1382 = vadd.f32 %v1149, %v1381
        %1383 = vmatprep.mubr.f32.mxu0 0.0
        %1384 = vmatmul.mubr.f32.gmra.mxu0 %v513
        %v1385 = vpop.f32.mrf.mxu0
        %v1386 = vadd.f32 %v1153, %v1385
        %v1387 = vpop.f32.mrf.mxu0
        %v1388 = vadd.f32 %v1155, %v1387
        %1389 = vmatprep.mubr.f32.mxu0 0.0
        %1390 = vmatmul.mubr.f32.gmra.mxu0 %v516
        %v1391 = vpop.f32.mrf.mxu0
        %v1392 = vadd.f32 %v1159, %v1391
        %v1393 = vpop.f32.mrf.mxu0
        %v1394 = vadd.f32 %v1161, %v1393
        %1395 = vmatprep.mubr.f32.mxu0 0.0
        %1396 = vmatmul.mubr.f32.gmra.mxu0 %v519
        %v1397 = vpop.f32.mrf.mxu0
        %v1398 = vadd.f32 %v1165, %v1397
        %v1399 = vpop.f32.mrf.mxu0
        %v1400 = vadd.f32 %v1167, %v1399
        %1401 = vmatprep.mubr.f32.mxu0 0.0
        %1402 = vmatmul.mubr.f32.gmra.mxu0 %v522
        %v1403 = vpop.f32.mrf.mxu0
        %v1404 = vadd.f32 %v1171, %v1403
        %v1405 = vpop.f32.mrf.mxu0
        %v1406 = vadd.f32 %v1173, %v1405
        %1407 = vmatprep.mubr.f32.mxu0 0.0
        %1408 = vmatmul.mubr.f32.gmra.mxu0 %v525
        %v1409 = vpop.f32.mrf.mxu0
        %v1410 = vadd.f32 %v1177, %v1409
        %v1411 = vpop.f32.mrf.mxu0
        %v1412 = vadd.f32 %v1179, %v1411
        %1413 = vmatprep.mubr.f32.mxu0 0.0
        %1414 = vmatmul.mubr.f32.gmra.mxu0 %v528
        %v1415 = vpop.f32.mrf.mxu0
        %v1416 = vadd.f32 %v1183, %v1415
        %v1417 = vpop.f32.mrf.mxu0
        %v1418 = vadd.f32 %v1185, %v1417
        %1419 = vmatprep.mubr.f32.mxu0 0.0
        %1420 = vmatmul.mubr.f32.gmra.mxu0 %v531
        %v1421 = vpop.f32.mrf.mxu0
        %v1422 = vadd.f32 %v1189, %v1421
        %v1423 = vpop.f32.mrf.mxu0
        %v1424 = vadd.f32 %v1191, %v1423
        %1425 = vmatprep.mubr.f32.mxu0 0.0
        %1426 = vmatmul.mubr.f32.gmra.mxu0 %v534
        %v1427 = vpop.f32.mrf.mxu0
        %v1428 = vadd.f32 %v1195, %v1427
        %v1429 = vpop.f32.mrf.mxu0
        %v1430 = vadd.f32 %v1197, %v1429
        %1431 = vmatprep.mubr.f32.mxu0 0.0
        %1432 = vmatmul.mubr.f32.gmra.mxu0 %v537
        %v1433 = vpop.f32.mrf.mxu0
        %v1434 = vadd.f32 %v1201, %v1433
        %v1435 = vpop.f32.mrf.mxu0
        %v1436 = vadd.f32 %v1203, %v1435
        %1437 = vmatprep.mubr.f32.mxu0 0.0
        %1438 = vmatmul.mubr.f32.gmra.mxu0 %v540
        %v1439 = vpop.f32.mrf.mxu0
        %v1440 = vadd.f32 %v1207, %v1439
        %v1441 = vpop.f32.mrf.mxu0
        %v1442 = vadd.f32 %v1209, %v1441
        %1443 = vmatprep.mubr.f32.mxu0 0.0
        %1444 = vmatmul.mubr.f32.gmra.mxu0 %v543
        %v1445 = vpop.f32.mrf.mxu0
        %v1446 = vadd.f32 %v1213, %v1445
        %v1447 = vpop.f32.mrf.mxu0
        %v1448 = vadd.f32 %v1215, %v1447
        %1449 = vmatprep.mubr.f32.mxu0 0.0
        %1450 = vmatmul.mubr.f32.gmra.mxu0 %v546
        %v1451 = vpop.f32.mrf.mxu0
        %v1452 = vadd.f32 %v1219, %v1451
        %v1453 = vpop.f32.mrf.mxu0
        %v1454 = vadd.f32 %v1221, %v1453
        %1455 = vmatprep.mubr.f32.mxu0 0.0
        %1456 = vmatmul.mubr.f32.gmra.mxu0 %v549
        %v1457 = vpop.f32.mrf.mxu0
        %v1458 = vadd.f32 %v1225, %v1457
        %v1459 = vpop.f32.mrf.mxu0
        %v1460 = vadd.f32 %v1227, %v1459
        %1461 = vmatprep.mubr.f32.mxu0 0.0
        %1462 = vmatmul.mubr.f32.gmra.mxu0 %v552
        %v1463 = vpop.f32.mrf.mxu0
        %v1464 = vadd.f32 %v1231, %v1463
        %v1465 = vpop.f32.mrf.mxu0
        %v1466 = vadd.f32 %v1233, %v1465
        %1467 = vmatprep.mubr.f32.mxu0 0.0
        %1468 = vmatmul.mubr.f32.gmra.mxu0 %v555
        %v1469 = vpop.f32.mrf.mxu0
        %v1470 = vadd.f32 %v1237, %v1469
        %v1471 = vpop.f32.mrf.mxu0
        %v1472 = vadd.f32 %v1239, %v1471
        %1473 = vmatprep.mubr.f32.mxu0 0.0
        %1474 = vmatmul.mubr.f32.gmra.mxu0 %v558
        %v1475 = vpop.f32.mrf.mxu0
        %v1476 = vadd.f32 %v1243, %v1475
        %v1477 = vpop.f32.mrf.mxu0
        %v1478 = vadd.f32 %v1245, %v1477
        %1479 = vmatprep.mubr.f32.mxu0 0.0
        %1480 = vmatmul.mubr.f32.gmra.mxu0 %v561
        %v1481 = vpop.f32.mrf.mxu0
        %v1482 = vadd.f32 %v1249, %v1481
        %v1483 = vpop.f32.mrf.mxu0
        %v1484 = vadd.f32 %v1251, %v1483
        %1485 = vmatprep.mubr.f32.mxu0 0.0
        %1486 = vmatmul.mubr.f32.gmra.mxu0 %v564
        %v1487 = vpop.f32.mrf.mxu0
        %v1488 = vadd.f32 %v1255, %v1487
        %v1489 = vpop.f32.mrf.mxu0
        %v1490 = vadd.f32 %v1257, %v1489
        %1491 = vmatprep.mubr.f32.mxu0 0.0
        %1492 = vmatmul.mubr.f32.gmra.mxu0 %v567
        %v1493 = vpop.f32.mrf.mxu0
        %v1494 = vadd.f32 %v1261, %v1493
        %v1495 = vpop.f32.mrf.mxu0
        %v1496 = vadd.f32 %v1263, %v1495
        %1497 = vmatprep.mubr.f32.mxu0 0.0
        %1498 = vmatmul.mubr.f32.gmra.mxu0 %v570
        %v1499 = vpop.f32.mrf.mxu0
        %v1500 = vadd.f32 %v1267, %v1499
        %v1501 = vpop.f32.mrf.mxu0
        %v1502 = vadd.f32 %v1269, %v1501
        %1503 = vmatprep.mubr.f32.mxu0 0.0
        %1504 = vmatmul.mubr.f32.gmra.mxu0 %v573
        %v1505 = vpop.f32.mrf.mxu0
        %v1506 = vadd.f32 %v1273, %v1505
        %v1507 = vpop.f32.mrf.mxu0
        %v1508 = vadd.f32 %v1275, %v1507
        %1509 = vmatprep.mubr.f32.mxu0 0.0
        %1510 = vmatmul.mubr.f32.gmra.mxu0 %v576
        %v1511 = vpop.f32.mrf.mxu0
        %v1512 = vadd.f32 %v1279, %v1511
        %v1513 = vpop.f32.mrf.mxu0
        %v1514 = vadd.f32 %v1281, %v1513
        %1515 = vmatprep.mubr.f32.mxu0 0.0
        %1516 = vmatmul.mubr.f32.gmra.mxu0 %v579
        %v1517 = vpop.f32.mrf.mxu0
        %v1518 = vadd.f32 %v1285, %v1517
        %v1519 = vpop.f32.mrf.mxu0
        %v1520 = vadd.f32 %v1287, %v1519
        %1521 = vmatprep.mubr.f32.mxu0 0.0
        %1522 = vmatmul.mubr.f32.gmra.mxu0 %v582
        %v1523 = vpop.f32.mrf.mxu0
        %v1524 = vadd.f32 %v1291, %v1523
        %v1525 = vpop.f32.mrf.mxu0
        %v1526 = vadd.f32 %v1293, %v1525
        %1527 = vmatprep.mubr.f32.mxu0 0.0
        %1528 = vmatmul.mubr.f32.gmra.mxu0 %v585
        %v1529 = vpop.f32.mrf.mxu0
        %v1530 = vadd.f32 %v1297, %v1529
        %v1531 = vpop.f32.mrf.mxu0
        %v1532 = vadd.f32 %v1299, %v1531
        %1533 = vdwg.mxu0
        %s1534 = scalar_lea.vmem [#allocation5], 128
        %v1535 = vld [vmem:[%s1534] sm:$0xff]
        %v1536 = vld [vmem:[%s1534 + $0x8] sm:$0xff]
        %v1537 = vld [vmem:[%s1534 + $0x10] sm:$0xff]
        %v1538 = vld [vmem:[%s1534 + $0x18] sm:$0xff]
        %v1539 = vld [vmem:[%s1534 + $0x20] sm:$0xff]
        %v1540 = vld [vmem:[%s1534 + $0x28] sm:$0xff]
        %v1541 = vld [vmem:[%s1534 + $0x30] sm:$0xff]
        %v1542 = vld [vmem:[%s1534 + $0x38] sm:$0xff]
        %v1544 = vsel %vm505, %v477, 0
        %1546 = vmatprep.subr.mxu0 0.0
        %1547 = vmatpush1.msra.mxu0 0.0
        %1548 = vmatprep.subr.mxu0 0.0
        %1549 = vmatpush1.msra.mxu0 0.0
        %1550 = vmatprep.subr.mxu0 0.0
        %1551 = vmatpush1.msra.mxu0 0.0
        %1552 = vmatprep.subr.mxu0 0.0
        %1553 = vmatpush1.msra.mxu0 0.0
        %1554 = vmatprep.subr.mxu0 0.0
        %1555 = vmatpush1.msra.mxu0 0.0
        %1556 = vmatprep.subr.mxu0 0.0
        %1557 = vmatpush1.msra.mxu0 0.0
        %1558 = vmatprep.subr.mxu0 0.0
        %1559 = vmatpush1.msra.mxu0 0.0
        %1560 = vmatprep.subr.mxu0 0.0
        %1561 = vmatpush1.msra.mxu0 0.0
        %1562 = vmatprep.subr.mxu0 0.0
        %1563 = vmatpush1.msra.mxu0 0.0
        %1564 = vmatprep.subr.mxu0 0.0
        %1565 = vmatpush1.msra.mxu0 0.0
        %1566 = vmatprep.subr.mxu0 0.0
        %1567 = vmatpush1.msra.mxu0 0.0
        %1568 = vmatprep.subr.mxu0 0.0
        %1569 = vmatpush1.msra.mxu0 0.0
        %1570 = vmatprep.subr.mxu0 %v1542
        %1571 = vmatpush1.msra.mxu0 %v1541
        %1572 = vmatprep.subr.mxu0 %v1540
        %1573 = vmatpush1.msra.mxu0 %v1539
        %1574 = vmatprep.subr.mxu0 %v1538
        %1575 = vmatpush1.msra.mxu0 %v1537
        %1576 = vmatprep.subr.mxu0 %v1536
        %1577 = vmatpush1.msra.mxu0 %v1535
        %1578 = vmatprep.subr.mxu0 0.0
        %1579 = vmatpush2.msra.mxu0 0.0
        %1580 = vmatprep.subr.mxu0 0.0
        %1581 = vmatpush2.msra.mxu0 0.0
        %1582 = vmatprep.subr.mxu0 0.0
        %1583 = vmatpush2.msra.mxu0 0.0
        %1584 = vmatprep.subr.mxu0 0.0
        %1585 = vmatpush2.msra.mxu0 0.0
        %1586 = vmatprep.subr.mxu0 0.0
        %1587 = vmatpush2.msra.mxu0 0.0
        %1588 = vmatprep.subr.mxu0 0.0
        %1589 = vmatpush2.msra.mxu0 0.0
        %1590 = vmatprep.subr.mxu0 0.0
        %1591 = vmatpush2.msra.mxu0 0.0
        %1592 = vmatprep.subr.mxu0 0.0
        %1593 = vmatpush2.msra.mxu0 0.0
        %1594 = vmatprep.subr.mxu0 0.0
        %1595 = vmatpush2.msra.mxu0 0.0
        %1596 = vmatprep.subr.mxu0 0.0
        %1597 = vmatpush2.msra.mxu0 0.0
        %1598 = vmatprep.subr.mxu0 0.0
        %1599 = vmatpush2.msra.mxu0 0.0
        %1600 = vmatprep.subr.mxu0 0.0
        %1601 = vmatpush2.msra.mxu0 0.0
        %1602 = vmatprep.subr.mxu0 0.0
        %1603 = vmatpush2.msra.mxu0 0.0
        %1604 = vmatprep.subr.mxu0 0.0
        %1605 = vmatpush2.msra.mxu0 0.0
        %1606 = vmatprep.subr.mxu0 0.0
        %1607 = vmatpush2.msra.mxu0 0.0
        %1608 = vmatprep.subr.mxu0 0.0
        %1609 = vmatpush2.msra.mxu0 0.0
        %1610 = vmatprep.mubr.f32.mxu0 0.0
        %1611 = vmatmul.mubr.f32.gmra.mxu0 %v510
        %v1612 = vpop.f32.mrf.mxu0
        %v1613 = vadd.f32 0.0, %v1612
        %v1614 = vpop.f32.mrf.mxu0
        %v1615 = vadd.f32 0.0, %v1614
        %1616 = vmatprep.mubr.f32.mxu0 0.0
        %1617 = vmatmul.mubr.f32.gmra.mxu0 %v513
        %v1618 = vpop.f32.mrf.mxu0
        %v1619 = vadd.f32 0.0, %v1618
        %v1620 = vpop.f32.mrf.mxu0
        %v1621 = vadd.f32 0.0, %v1620
        %1622 = vmatprep.mubr.f32.mxu0 0.0
        %1623 = vmatmul.mubr.f32.gmra.mxu0 %v516
        %v1624 = vpop.f32.mrf.mxu0
        %v1625 = vadd.f32 0.0, %v1624
        %v1626 = vpop.f32.mrf.mxu0
        %v1627 = vadd.f32 0.0, %v1626
        %1628 = vmatprep.mubr.f32.mxu0 0.0
        %1629 = vmatmul.mubr.f32.gmra.mxu0 %v519
        %v1630 = vpop.f32.mrf.mxu0
        %v1631 = vadd.f32 0.0, %v1630
        %v1632 = vpop.f32.mrf.mxu0
        %v1633 = vadd.f32 0.0, %v1632
        %1634 = vmatprep.mubr.f32.mxu0 0.0
        %1635 = vmatmul.mubr.f32.gmra.mxu0 %v522
        %v1636 = vpop.f32.mrf.mxu0
        %v1637 = vadd.f32 0.0, %v1636
        %v1638 = vpop.f32.mrf.mxu0
        %v1639 = vadd.f32 0.0, %v1638
        %1640 = vmatprep.mubr.f32.mxu0 0.0
        %1641 = vmatmul.mubr.f32.gmra.mxu0 %v525
        %v1642 = vpop.f32.mrf.mxu0
        %v1643 = vadd.f32 0.0, %v1642
        %v1644 = vpop.f32.mrf.mxu0
        %v1645 = vadd.f32 0.0, %v1644
        %1646 = vmatprep.mubr.f32.mxu0 0.0
        %1647 = vmatmul.mubr.f32.gmra.mxu0 %v528
        %v1648 = vpop.f32.mrf.mxu0
        %v1649 = vadd.f32 0.0, %v1648
        %v1650 = vpop.f32.mrf.mxu0
        %v1651 = vadd.f32 0.0, %v1650
        %1652 = vmatprep.mubr.f32.mxu0 0.0
        %1653 = vmatmul.mubr.f32.gmra.mxu0 %v531
        %v1654 = vpop.f32.mrf.mxu0
        %v1655 = vadd.f32 0.0, %v1654
        %v1656 = vpop.f32.mrf.mxu0
        %v1657 = vadd.f32 0.0, %v1656
        %1658 = vmatprep.mubr.f32.mxu0 0.0
        %1659 = vmatmul.mubr.f32.gmra.mxu0 %v534
        %v1660 = vpop.f32.mrf.mxu0
        %v1661 = vadd.f32 0.0, %v1660
        %v1662 = vpop.f32.mrf.mxu0
        %v1663 = vadd.f32 0.0, %v1662
        %1664 = vmatprep.mubr.f32.mxu0 0.0
        %1665 = vmatmul.mubr.f32.gmra.mxu0 %v537
        %v1666 = vpop.f32.mrf.mxu0
        %v1667 = vadd.f32 0.0, %v1666
        %v1668 = vpop.f32.mrf.mxu0
        %v1669 = vadd.f32 0.0, %v1668
        %1670 = vmatprep.mubr.f32.mxu0 0.0
        %1671 = vmatmul.mubr.f32.gmra.mxu0 %v540
        %v1672 = vpop.f32.mrf.mxu0
        %v1673 = vadd.f32 0.0, %v1672
        %v1674 = vpop.f32.mrf.mxu0
        %v1675 = vadd.f32 0.0, %v1674
        %1676 = vmatprep.mubr.f32.mxu0 0.0
        %1677 = vmatmul.mubr.f32.gmra.mxu0 %v543
        %v1678 = vpop.f32.mrf.mxu0
        %v1679 = vadd.f32 0.0, %v1678
        %v1680 = vpop.f32.mrf.mxu0
        %v1681 = vadd.f32 0.0, %v1680
        %1682 = vmatprep.mubr.f32.mxu0 0.0
        %1683 = vmatmul.mubr.f32.gmra.mxu0 %v546
        %v1684 = vpop.f32.mrf.mxu0
        %v1685 = vadd.f32 0.0, %v1684
        %v1686 = vpop.f32.mrf.mxu0
        %v1687 = vadd.f32 0.0, %v1686
        %1688 = vmatprep.mubr.f32.mxu0 0.0
        %1689 = vmatmul.mubr.f32.gmra.mxu0 %v549
        %v1690 = vpop.f32.mrf.mxu0
        %v1691 = vadd.f32 0.0, %v1690
        %v1692 = vpop.f32.mrf.mxu0
        %v1693 = vadd.f32 0.0, %v1692
        %1694 = vmatprep.mubr.f32.mxu0 0.0
        %1695 = vmatmul.mubr.f32.gmra.mxu0 %v552
        %v1696 = vpop.f32.mrf.mxu0
        %v1697 = vadd.f32 0.0, %v1696
        %v1698 = vpop.f32.mrf.mxu0
        %v1699 = vadd.f32 0.0, %v1698
        %1700 = vmatprep.mubr.f32.mxu0 0.0
        %1701 = vmatmul.mubr.f32.gmra.mxu0 %v555
        %v1702 = vpop.f32.mrf.mxu0
        %v1703 = vadd.f32 0.0, %v1702
        %v1704 = vpop.f32.mrf.mxu0
        %v1705 = vadd.f32 0.0, %v1704
        %1706 = vmatprep.mubr.f32.mxu0 0.0
        %1707 = vmatmul.mubr.f32.gmra.mxu0 %v558
        %v1708 = vpop.f32.mrf.mxu0
        %v1709 = vadd.f32 0.0, %v1708
        %v1710 = vpop.f32.mrf.mxu0
        %v1711 = vadd.f32 0.0, %v1710
        %1712 = vmatprep.mubr.f32.mxu0 0.0
        %1713 = vmatmul.mubr.f32.gmra.mxu0 %v561
        %v1714 = vpop.f32.mrf.mxu0
        %v1715 = vadd.f32 0.0, %v1714
        %v1716 = vpop.f32.mrf.mxu0
        %v1717 = vadd.f32 0.0, %v1716
        %1718 = vmatprep.mubr.f32.mxu0 0.0
        %1719 = vmatmul.mubr.f32.gmra.mxu0 %v564
        %v1720 = vpop.f32.mrf.mxu0
        %v1721 = vadd.f32 0.0, %v1720
        %v1722 = vpop.f32.mrf.mxu0
        %v1723 = vadd.f32 0.0, %v1722
        %1724 = vmatprep.mubr.f32.mxu0 0.0
        %1725 = vmatmul.mubr.f32.gmra.mxu0 %v567
        %v1726 = vpop.f32.mrf.mxu0
        %v1727 = vadd.f32 0.0, %v1726
        %v1728 = vpop.f32.mrf.mxu0
        %v1729 = vadd.f32 0.0, %v1728
        %1730 = vmatprep.mubr.f32.mxu0 0.0
        %1731 = vmatmul.mubr.f32.gmra.mxu0 %v570
        %v1732 = vpop.f32.mrf.mxu0
        %v1733 = vadd.f32 0.0, %v1732
        %v1734 = vpop.f32.mrf.mxu0
        %v1735 = vadd.f32 0.0, %v1734
        %1736 = vmatprep.mubr.f32.mxu0 0.0
        %1737 = vmatmul.mubr.f32.gmra.mxu0 %v573
        %v1738 = vpop.f32.mrf.mxu0
        %v1739 = vadd.f32 0.0, %v1738
        %v1740 = vpop.f32.mrf.mxu0
        %v1741 = vadd.f32 0.0, %v1740
        %1742 = vmatprep.mubr.f32.mxu0 0.0
        %1743 = vmatmul.mubr.f32.gmra.mxu0 %v576
        %v1744 = vpop.f32.mrf.mxu0
        %v1745 = vadd.f32 0.0, %v1744
        %v1746 = vpop.f32.mrf.mxu0
        %v1747 = vadd.f32 0.0, %v1746
        %1748 = vmatprep.mubr.f32.mxu0 0.0
        %1749 = vmatmul.mubr.f32.gmra.mxu0 %v579
        %v1750 = vpop.f32.mrf.mxu0
        %v1751 = vadd.f32 0.0, %v1750
        %v1752 = vpop.f32.mrf.mxu0
        %v1753 = vadd.f32 0.0, %v1752
        %1754 = vmatprep.mubr.f32.mxu0 0.0
        %1755 = vmatmul.mubr.f32.gmra.mxu0 %v582
        %v1756 = vpop.f32.mrf.mxu0
        %v1757 = vadd.f32 0.0, %v1756
        %v1758 = vpop.f32.mrf.mxu0
        %v1759 = vadd.f32 0.0, %v1758
        %1760 = vmatprep.mubr.f32.mxu0 0.0
        %1761 = vmatmul.mubr.f32.gmra.mxu0 %v585
        %v1762 = vpop.f32.mrf.mxu0
        %v1763 = vadd.f32 0.0, %v1762
        %v1764 = vpop.f32.mrf.mxu0
        %v1765 = vadd.f32 0.0, %v1764
        %1766 = vmatprep.mubr.f32.mxu0 0.0
        %1767 = vmatmul.mubr.f32.gmra.mxu0 %v588
        %v1768 = vpop.f32.mrf.mxu0
        %v1769 = vadd.f32 0.0, %v1768
        %v1770 = vpop.f32.mrf.mxu0
        %v1771 = vadd.f32 0.0, %v1770
        %1772 = vmatprep.mubr.f32.mxu0 0.0
        %1773 = vmatmul.mubr.f32.gmra.mxu0 %v1544
        %v1774 = vpop.f32.mrf.mxu0
        %v1775 = vadd.f32 0.0, %v1774
        %v1776 = vpop.f32.mrf.mxu0
        %v1777 = vadd.f32 0.0, %v1776
        %1778 = vdwg.mxu0
        %v1779 = vadd.f32 %v893, %v1613
        %v1780 = vadd.f32 %v895, %v1615
        %v1781 = vadd.f32 %v899, %v1619
        %v1782 = vadd.f32 %v901, %v1621
        %v1783 = vadd.f32 %v905, %v1625
        %v1784 = vadd.f32 %v907, %v1627
        %v1785 = vadd.f32 %v911, %v1631
        %v1786 = vadd.f32 %v913, %v1633
        %v1787 = vadd.f32 %v917, %v1637
        %v1788 = vadd.f32 %v919, %v1639
        %v1789 = vadd.f32 %v923, %v1643
        %v1790 = vadd.f32 %v925, %v1645
        %v1791 = vadd.f32 %v929, %v1649
        %v1792 = vadd.f32 %v931, %v1651
        %v1793 = vadd.f32 %v935, %v1655
        %v1794 = vadd.f32 %v937, %v1657
        %v1795 = vadd.f32 %v941, %v1661
        %v1796 = vadd.f32 %v943, %v1663
        %v1797 = vadd.f32 %v947, %v1667
        %v1798 = vadd.f32 %v949, %v1669
        %v1799 = vadd.f32 %v953, %v1673
        %v1800 = vadd.f32 %v955, %v1675
        %v1801 = vadd.f32 %v959, %v1679
        %v1802 = vadd.f32 %v961, %v1681
        %v1803 = vadd.f32 %v965, %v1685
        %v1804 = vadd.f32 %v967, %v1687
        %v1805 = vadd.f32 %v971, %v1691
        %v1806 = vadd.f32 %v973, %v1693
        %v1807 = vadd.f32 %v977, %v1697
        %v1808 = vadd.f32 %v979, %v1699
        %v1809 = vadd.f32 %v983, %v1703
        %v1810 = vadd.f32 %v985, %v1705
        %v1811 = vadd.f32 %v989, %v1709
        %v1812 = vadd.f32 %v991, %v1711
        %v1813 = vadd.f32 %v995, %v1715
        %v1814 = vadd.f32 %v997, %v1717
        %v1815 = vadd.f32 %v1001, %v1721
        %v1816 = vadd.f32 %v1003, %v1723
        %v1817 = vadd.f32 %v1007, %v1727
        %v1818 = vadd.f32 %v1009, %v1729
        %v1819 = vadd.f32 %v1013, %v1733
        %v1820 = vadd.f32 %v1015, %v1735
        %v1821 = vadd.f32 %v1019, %v1739
        %v1822 = vadd.f32 %v1021, %v1741
        %v1823 = vadd.f32 %v1025, %v1745
        %v1824 = vadd.f32 %v1027, %v1747
        %v1825 = vadd.f32 %v1031, %v1751
        %v1826 = vadd.f32 %v1033, %v1753
        %v1827 = vadd.f32 %v1037, %v1757
        %v1828 = vadd.f32 %v1039, %v1759
        %v1829 = vadd.f32 %v1043, %v1763
        %v1830 = vadd.f32 %v1045, %v1765
        %v1831 = vadd.f32 %v1049, %v1769
        %v1832 = vadd.f32 %v1051, %v1771
        %v1833 = vadd.f32 %v1055, %v1775
        %v1834 = vadd.f32 %v1057, %v1777
        %s1835 = scalar_lea.vmem [#allocation7], 128
        %v1836 = vld [vmem:[%s1835] sm:$0xff]
        %v1837 = vld [vmem:[%s1835 + $0x8] sm:$0xff]
        %v1838 = vld [vmem:[%s1835 + $0x10] sm:$0xff]
        %v1839 = vld [vmem:[%s1835 + $0x18] sm:$0xff]
        %v1840 = vld [vmem:[%s1835 + $0x20] sm:$0xff]
        %v1841 = vld [vmem:[%s1835 + $0x28] sm:$0xff]
        %v1842 = vld [vmem:[%s1835 + $0x30] sm:$0xff]
        %v1843 = vld [vmem:[%s1835 + $0x38] sm:$0xff]
        %1844 = vmatprep.subr.mxu0 0.0
        %1845 = vmatpush1.msra.mxu0 0.0
        %1846 = vmatprep.subr.mxu0 0.0
        %1847 = vmatpush1.msra.mxu0 0.0
        %1848 = vmatprep.subr.mxu0 0.0
        %1849 = vmatpush1.msra.mxu0 0.0
        %1850 = vmatprep.subr.mxu0 0.0
        %1851 = vmatpush1.msra.mxu0 0.0
        %1852 = vmatprep.subr.mxu0 0.0
        %1853 = vmatpush1.msra.mxu0 0.0
        %1854 = vmatprep.subr.mxu0 0.0
        %1855 = vmatpush1.msra.mxu0 0.0
        %1856 = vmatprep.subr.mxu0 0.0
        %1857 = vmatpush1.msra.mxu0 0.0
        %1858 = vmatprep.subr.mxu0 0.0
        %1859 = vmatpush1.msra.mxu0 0.0
        %1860 = vmatprep.subr.mxu0 0.0
        %1861 = vmatpush1.msra.mxu0 0.0
        %1862 = vmatprep.subr.mxu0 0.0
        %1863 = vmatpush1.msra.mxu0 0.0
        %1864 = vmatprep.subr.mxu0 0.0
        %1865 = vmatpush1.msra.mxu0 0.0
        %1866 = vmatprep.subr.mxu0 0.0
        %1867 = vmatpush1.msra.mxu0 0.0
        %1868 = vmatprep.subr.mxu0 %v1843
        %1869 = vmatpush1.msra.mxu0 %v1842
        %1870 = vmatprep.subr.mxu0 %v1841
        %1871 = vmatpush1.msra.mxu0 %v1840
        %1872 = vmatprep.subr.mxu0 %v1839
        %1873 = vmatpush1.msra.mxu0 %v1838
        %1874 = vmatprep.subr.mxu0 %v1837
        %1875 = vmatpush1.msra.mxu0 %v1836
        %1876 = vmatprep.subr.mxu0 0.0
        %1877 = vmatpush2.msra.mxu0 0.0
        %1878 = vmatprep.subr.mxu0 0.0
        %1879 = vmatpush2.msra.mxu0 0.0
        %1880 = vmatprep.subr.mxu0 0.0
        %1881 = vmatpush2.msra.mxu0 0.0
        %1882 = vmatprep.subr.mxu0 0.0
        %1883 = vmatpush2.msra.mxu0 0.0
        %1884 = vmatprep.subr.mxu0 0.0
        %1885 = vmatpush2.msra.mxu0 0.0
        %1886 = vmatprep.subr.mxu0 0.0
        %1887 = vmatpush2.msra.mxu0 0.0
        %1888 = vmatprep.subr.mxu0 0.0
        %1889 = vmatpush2.msra.mxu0 0.0
        %1890 = vmatprep.subr.mxu0 0.0
        %1891 = vmatpush2.msra.mxu0 0.0
        %1892 = vmatprep.subr.mxu0 0.0
        %1893 = vmatpush2.msra.mxu0 0.0
        %1894 = vmatprep.subr.mxu0 0.0
        %1895 = vmatpush2.msra.mxu0 0.0
        %1896 = vmatprep.subr.mxu0 0.0
        %1897 = vmatpush2.msra.mxu0 0.0
        %1898 = vmatprep.subr.mxu0 0.0
        %1899 = vmatpush2.msra.mxu0 0.0
        %1900 = vmatprep.subr.mxu0 0.0
        %1901 = vmatpush2.msra.mxu0 0.0
        %1902 = vmatprep.subr.mxu0 0.0
        %1903 = vmatpush2.msra.mxu0 0.0
        %1904 = vmatprep.subr.mxu0 0.0
        %1905 = vmatpush2.msra.mxu0 0.0
        %1906 = vmatprep.subr.mxu0 0.0
        %1907 = vmatpush2.msra.mxu0 0.0
        %1908 = vmatprep.mubr.f32.mxu0 0.0
        %1909 = vmatmul.mubr.f32.gmra.mxu0 %v510
        %v1910 = vpop.f32.mrf.mxu0
        %v1911 = vadd.f32 0.0, %v1910
        %v1912 = vpop.f32.mrf.mxu0
        %v1913 = vadd.f32 0.0, %v1912
        %1914 = vmatprep.mubr.f32.mxu0 0.0
        %1915 = vmatmul.mubr.f32.gmra.mxu0 %v513
        %v1916 = vpop.f32.mrf.mxu0
        %v1917 = vadd.f32 0.0, %v1916
        %v1918 = vpop.f32.mrf.mxu0
        %v1919 = vadd.f32 0.0, %v1918
        %1920 = vmatprep.mubr.f32.mxu0 0.0
        %1921 = vmatmul.mubr.f32.gmra.mxu0 %v516
        %v1922 = vpop.f32.mrf.mxu0
        %v1923 = vadd.f32 0.0, %v1922
        %v1924 = vpop.f32.mrf.mxu0
        %v1925 = vadd.f32 0.0, %v1924
        %1926 = vmatprep.mubr.f32.mxu0 0.0
        %1927 = vmatmul.mubr.f32.gmra.mxu0 %v519
        %v1928 = vpop.f32.mrf.mxu0
        %v1929 = vadd.f32 0.0, %v1928
        %v1930 = vpop.f32.mrf.mxu0
        %v1931 = vadd.f32 0.0, %v1930
        %1932 = vmatprep.mubr.f32.mxu0 0.0
        %1933 = vmatmul.mubr.f32.gmra.mxu0 %v522
        %v1934 = vpop.f32.mrf.mxu0
        %v1935 = vadd.f32 0.0, %v1934
        %v1936 = vpop.f32.mrf.mxu0
        %v1937 = vadd.f32 0.0, %v1936
        %1938 = vmatprep.mubr.f32.mxu0 0.0
        %1939 = vmatmul.mubr.f32.gmra.mxu0 %v525
        %v1940 = vpop.f32.mrf.mxu0
        %v1941 = vadd.f32 0.0, %v1940
        %v1942 = vpop.f32.mrf.mxu0
        %v1943 = vadd.f32 0.0, %v1942
        %1944 = vmatprep.mubr.f32.mxu0 0.0
        %1945 = vmatmul.mubr.f32.gmra.mxu0 %v528
        %v1946 = vpop.f32.mrf.mxu0
        %v1947 = vadd.f32 0.0, %v1946
        %v1948 = vpop.f32.mrf.mxu0
        %v1949 = vadd.f32 0.0, %v1948
        %1950 = vmatprep.mubr.f32.mxu0 0.0
        %1951 = vmatmul.mubr.f32.gmra.mxu0 %v531
        %v1952 = vpop.f32.mrf.mxu0
        %v1953 = vadd.f32 0.0, %v1952
        %v1954 = vpop.f32.mrf.mxu0
        %v1955 = vadd.f32 0.0, %v1954
        %1956 = vmatprep.mubr.f32.mxu0 0.0
        %1957 = vmatmul.mubr.f32.gmra.mxu0 %v534
        %v1958 = vpop.f32.mrf.mxu0
        %v1959 = vadd.f32 0.0, %v1958
        %v1960 = vpop.f32.mrf.mxu0
        %v1961 = vadd.f32 0.0, %v1960
        %1962 = vmatprep.mubr.f32.mxu0 0.0
        %1963 = vmatmul.mubr.f32.gmra.mxu0 %v537
        %v1964 = vpop.f32.mrf.mxu0
        %v1965 = vadd.f32 0.0, %v1964
        %v1966 = vpop.f32.mrf.mxu0
        %v1967 = vadd.f32 0.0, %v1966
        %1968 = vmatprep.mubr.f32.mxu0 0.0
        %1969 = vmatmul.mubr.f32.gmra.mxu0 %v540
        %v1970 = vpop.f32.mrf.mxu0
        %v1971 = vadd.f32 0.0, %v1970
        %v1972 = vpop.f32.mrf.mxu0
        %v1973 = vadd.f32 0.0, %v1972
        %1974 = vmatprep.mubr.f32.mxu0 0.0
        %1975 = vmatmul.mubr.f32.gmra.mxu0 %v543
        %v1976 = vpop.f32.mrf.mxu0
        %v1977 = vadd.f32 0.0, %v1976
        %v1978 = vpop.f32.mrf.mxu0
        %v1979 = vadd.f32 0.0, %v1978
        %1980 = vmatprep.mubr.f32.mxu0 0.0
        %1981 = vmatmul.mubr.f32.gmra.mxu0 %v546
        %v1982 = vpop.f32.mrf.mxu0
        %v1983 = vadd.f32 0.0, %v1982
        %v1984 = vpop.f32.mrf.mxu0
        %v1985 = vadd.f32 0.0, %v1984
        %1986 = vmatprep.mubr.f32.mxu0 0.0
        %1987 = vmatmul.mubr.f32.gmra.mxu0 %v549
        %v1988 = vpop.f32.mrf.mxu0
        %v1989 = vadd.f32 0.0, %v1988
        %v1990 = vpop.f32.mrf.mxu0
        %v1991 = vadd.f32 0.0, %v1990
        %1992 = vmatprep.mubr.f32.mxu0 0.0
        %1993 = vmatmul.mubr.f32.gmra.mxu0 %v552
        %v1994 = vpop.f32.mrf.mxu0
        %v1995 = vadd.f32 0.0, %v1994
        %v1996 = vpop.f32.mrf.mxu0
        %v1997 = vadd.f32 0.0, %v1996
        %1998 = vmatprep.mubr.f32.mxu0 0.0
        %1999 = vmatmul.mubr.f32.gmra.mxu0 %v555
        %v2000 = vpop.f32.mrf.mxu0
        %v2001 = vadd.f32 0.0, %v2000
        %v2002 = vpop.f32.mrf.mxu0
        %v2003 = vadd.f32 0.0, %v2002
        %2004 = vmatprep.mubr.f32.mxu0 0.0
        %2005 = vmatmul.mubr.f32.gmra.mxu0 %v558
        %v2006 = vpop.f32.mrf.mxu0
        %v2007 = vadd.f32 0.0, %v2006
        %v2008 = vpop.f32.mrf.mxu0
        %v2009 = vadd.f32 0.0, %v2008
        %2010 = vmatprep.mubr.f32.mxu0 0.0
        %2011 = vmatmul.mubr.f32.gmra.mxu0 %v561
        %v2012 = vpop.f32.mrf.mxu0
        %v2013 = vadd.f32 0.0, %v2012
        %v2014 = vpop.f32.mrf.mxu0
        %v2015 = vadd.f32 0.0, %v2014
        %2016 = vmatprep.mubr.f32.mxu0 0.0
        %2017 = vmatmul.mubr.f32.gmra.mxu0 %v564
        %v2018 = vpop.f32.mrf.mxu0
        %v2019 = vadd.f32 0.0, %v2018
        %v2020 = vpop.f32.mrf.mxu0
        %v2021 = vadd.f32 0.0, %v2020
        %2022 = vmatprep.mubr.f32.mxu0 0.0
        %2023 = vmatmul.mubr.f32.gmra.mxu0 %v567
        %v2024 = vpop.f32.mrf.mxu0
        %v2025 = vadd.f32 0.0, %v2024
        %v2026 = vpop.f32.mrf.mxu0
        %v2027 = vadd.f32 0.0, %v2026
        %2028 = vmatprep.mubr.f32.mxu0 0.0
        %2029 = vmatmul.mubr.f32.gmra.mxu0 %v570
        %v2030 = vpop.f32.mrf.mxu0
        %v2031 = vadd.f32 0.0, %v2030
        %v2032 = vpop.f32.mrf.mxu0
        %v2033 = vadd.f32 0.0, %v2032
        %2034 = vmatprep.mubr.f32.mxu0 0.0
        %2035 = vmatmul.mubr.f32.gmra.mxu0 %v573
        %v2036 = vpop.f32.mrf.mxu0
        %v2037 = vadd.f32 0.0, %v2036
        %v2038 = vpop.f32.mrf.mxu0
        %v2039 = vadd.f32 0.0, %v2038
        %2040 = vmatprep.mubr.f32.mxu0 0.0
        %2041 = vmatmul.mubr.f32.gmra.mxu0 %v576
        %v2042 = vpop.f32.mrf.mxu0
        %v2043 = vadd.f32 0.0, %v2042
        %v2044 = vpop.f32.mrf.mxu0
        %v2045 = vadd.f32 0.0, %v2044
        %2046 = vmatprep.mubr.f32.mxu0 0.0
        %2047 = vmatmul.mubr.f32.gmra.mxu0 %v579
        %v2048 = vpop.f32.mrf.mxu0
        %v2049 = vadd.f32 0.0, %v2048
        %v2050 = vpop.f32.mrf.mxu0
        %v2051 = vadd.f32 0.0, %v2050
        %2052 = vmatprep.mubr.f32.mxu0 0.0
        %2053 = vmatmul.mubr.f32.gmra.mxu0 %v582
        %v2054 = vpop.f32.mrf.mxu0
        %v2055 = vadd.f32 0.0, %v2054
        %v2056 = vpop.f32.mrf.mxu0
        %v2057 = vadd.f32 0.0, %v2056
        %2058 = vmatprep.mubr.f32.mxu0 0.0
        %2059 = vmatmul.mubr.f32.gmra.mxu0 %v585
        %v2060 = vpop.f32.mrf.mxu0
        %v2061 = vadd.f32 0.0, %v2060
        %v2062 = vpop.f32.mrf.mxu0
        %v2063 = vadd.f32 0.0, %v2062
        %2064 = vmatprep.mubr.f32.mxu0 0.0
        %2065 = vmatmul.mubr.f32.gmra.mxu0 %v588
        %v2066 = vpop.f32.mrf.mxu0
        %v2067 = vadd.f32 0.0, %v2066
        %v2068 = vpop.f32.mrf.mxu0
        %v2069 = vadd.f32 0.0, %v2068
        %2070 = vmatprep.mubr.f32.mxu0 0.0
        %2071 = vmatmul.mubr.f32.gmra.mxu0 %v1544
        %v2072 = vpop.f32.mrf.mxu0
        %v2073 = vadd.f32 0.0, %v2072
        %v2074 = vpop.f32.mrf.mxu0
        %v2075 = vadd.f32 0.0, %v2074
        %2076 = vdwg.mxu0
        %v2077 = vadd.f32 %v1368, %v1911
        %v2078 = vadd.f32 %v1370, %v1913
        %v2079 = vadd.f32 %v1374, %v1917
        %v2080 = vadd.f32 %v1376, %v1919
        %v2081 = vadd.f32 %v1380, %v1923
        %v2082 = vadd.f32 %v1382, %v1925
        %v2083 = vadd.f32 %v1386, %v1929
        %v2084 = vadd.f32 %v1388, %v1931
        %v2085 = vadd.f32 %v1392, %v1935
        %v2086 = vadd.f32 %v1394, %v1937
        %v2087 = vadd.f32 %v1398, %v1941
        %v2088 = vadd.f32 %v1400, %v1943
        %v2089 = vadd.f32 %v1404, %v1947
        %v2090 = vadd.f32 %v1406, %v1949
        %v2091 = vadd.f32 %v1410, %v1953
        %v2092 = vadd.f32 %v1412, %v1955
        %v2093 = vadd.f32 %v1416, %v1959
        %v2094 = vadd.f32 %v1418, %v1961
        %v2095 = vadd.f32 %v1422, %v1965
        %v2096 = vadd.f32 %v1424, %v1967
        %v2097 = vadd.f32 %v1428, %v1971
        %v2098 = vadd.f32 %v1430, %v1973
        %v2099 = vadd.f32 %v1434, %v1977
        %v2100 = vadd.f32 %v1436, %v1979
        %v2101 = vadd.f32 %v1440, %v1983
        %v2102 = vadd.f32 %v1442, %v1985
        %v2103 = vadd.f32 %v1446, %v1989
        %v2104 = vadd.f32 %v1448, %v1991
        %v2105 = vadd.f32 %v1452, %v1995
        %v2106 = vadd.f32 %v1454, %v1997
        %v2107 = vadd.f32 %v1458, %v2001
        %v2108 = vadd.f32 %v1460, %v2003
        %v2109 = vadd.f32 %v1464, %v2007
        %v2110 = vadd.f32 %v1466, %v2009
        %v2111 = vadd.f32 %v1470, %v2013
        %v2112 = vadd.f32 %v1472, %v2015
        %v2113 = vadd.f32 %v1476, %v2019
        %v2114 = vadd.f32 %v1478, %v2021
        %v2115 = vadd.f32 %v1482, %v2025
        %v2116 = vadd.f32 %v1484, %v2027
        %v2117 = vadd.f32 %v1488, %v2031
        %v2118 = vadd.f32 %v1490, %v2033
        %v2119 = vadd.f32 %v1494, %v2037
        %v2120 = vadd.f32 %v1496, %v2039
        %v2121 = vadd.f32 %v1500, %v2043
        %v2122 = vadd.f32 %v1502, %v2045
        %v2123 = vadd.f32 %v1506, %v2049
        %v2124 = vadd.f32 %v1508, %v2051
        %v2125 = vadd.f32 %v1512, %v2055
        %v2126 = vadd.f32 %v1514, %v2057
        %v2127 = vadd.f32 %v1518, %v2061
        %v2128 = vadd.f32 %v1520, %v2063
        %v2129 = vadd.f32 %v1524, %v2067
        %v2130 = vadd.f32 %v1526, %v2069
        %v2131 = vadd.f32 %v1530, %v2073
        %v2132 = vadd.f32 %v1532, %v2075
        %s2133 = scalar_lea.vmem [#allocation5], 192
        %v2134 = vld [vmem:[%s2133] sm:$0xff]
        %v2135 = vld [vmem:[%s2133 + $0x8] sm:$0xff]
        %v2136 = vld [vmem:[%s2133 + $0x10] sm:$0xff]
        %v2137 = vld [vmem:[%s2133 + $0x18] sm:$0xff]
        %v2138 = vld [vmem:[%s2133 + $0x20] sm:$0xff]
        %v2139 = vld [vmem:[%s2133 + $0x28] sm:$0xff]
        %v2140 = vld [vmem:[%s2133 + $0x30] sm:$0xff]
        %v2141 = vld [vmem:[%s2133 + $0x38] sm:$0xff]
        %v2143 = vsel %vm505, %v478, 0
        %2145 = vmatprep.subr.mxu0 0.0
        %2146 = vmatpush1.msra.mxu0 0.0
        %2147 = vmatprep.subr.mxu0 0.0
        %2148 = vmatpush1.msra.mxu0 0.0
        %2149 = vmatprep.subr.mxu0 0.0
        %2150 = vmatpush1.msra.mxu0 0.0
        %2151 = vmatprep.subr.mxu0 0.0
        %2152 = vmatpush1.msra.mxu0 0.0
        %2153 = vmatprep.subr.mxu0 0.0
        %2154 = vmatpush1.msra.mxu0 0.0
        %2155 = vmatprep.subr.mxu0 0.0
        %2156 = vmatpush1.msra.mxu0 0.0
        %2157 = vmatprep.subr.mxu0 0.0
        %2158 = vmatpush1.msra.mxu0 0.0
        %2159 = vmatprep.subr.mxu0 0.0
        %2160 = vmatpush1.msra.mxu0 0.0
        %2161 = vmatprep.subr.mxu0 0.0
        %2162 = vmatpush1.msra.mxu0 0.0
        %2163 = vmatprep.subr.mxu0 0.0
        %2164 = vmatpush1.msra.mxu0 0.0
        %2165 = vmatprep.subr.mxu0 0.0
        %2166 = vmatpush1.msra.mxu0 0.0
        %2167 = vmatprep.subr.mxu0 0.0
        %2168 = vmatpush1.msra.mxu0 0.0
        %2169 = vmatprep.subr.mxu0 %v2141
        %2170 = vmatpush1.msra.mxu0 %v2140
        %2171 = vmatprep.subr.mxu0 %v2139
        %2172 = vmatpush1.msra.mxu0 %v2138
        %2173 = vmatprep.subr.mxu0 %v2137
        %2174 = vmatpush1.msra.mxu0 %v2136
        %2175 = vmatprep.subr.mxu0 %v2135
        %2176 = vmatpush1.msra.mxu0 %v2134
        %2177 = vmatprep.subr.mxu0 0.0
        %2178 = vmatpush2.msra.mxu0 0.0
        %2179 = vmatprep.subr.mxu0 0.0
        %2180 = vmatpush2.msra.mxu0 0.0
        %2181 = vmatprep.subr.mxu0 0.0
        %2182 = vmatpush2.msra.mxu0 0.0
        %2183 = vmatprep.subr.mxu0 0.0
        %2184 = vmatpush2.msra.mxu0 0.0
        %2185 = vmatprep.subr.mxu0 0.0
        %2186 = vmatpush2.msra.mxu0 0.0
        %2187 = vmatprep.subr.mxu0 0.0
        %2188 = vmatpush2.msra.mxu0 0.0
        %2189 = vmatprep.subr.mxu0 0.0
        %2190 = vmatpush2.msra.mxu0 0.0
        %2191 = vmatprep.subr.mxu0 0.0
        %2192 = vmatpush2.msra.mxu0 0.0
        %2193 = vmatprep.subr.mxu0 0.0
        %2194 = vmatpush2.msra.mxu0 0.0
        %2195 = vmatprep.subr.mxu0 0.0
        %2196 = vmatpush2.msra.mxu0 0.0
        %2197 = vmatprep.subr.mxu0 0.0
        %2198 = vmatpush2.msra.mxu0 0.0
        %2199 = vmatprep.subr.mxu0 0.0
        %2200 = vmatpush2.msra.mxu0 0.0
        %2201 = vmatprep.subr.mxu0 0.0
        %2202 = vmatpush2.msra.mxu0 0.0
        %2203 = vmatprep.subr.mxu0 0.0
        %2204 = vmatpush2.msra.mxu0 0.0
        %2205 = vmatprep.subr.mxu0 0.0
        %2206 = vmatpush2.msra.mxu0 0.0
        %2207 = vmatprep.subr.mxu0 0.0
        %2208 = vmatpush2.msra.mxu0 0.0
        %2209 = vmatprep.mubr.f32.mxu0 0.0
        %2210 = vmatmul.mubr.f32.gmra.mxu0 %v513
        %v2211 = vpop.f32.mrf.mxu0
        %v2212 = vadd.f32 0.0, %v2211
        %v2213 = vpop.f32.mrf.mxu0
        %v2214 = vadd.f32 0.0, %v2213
        %2215 = vmatprep.mubr.f32.mxu0 0.0
        %2216 = vmatmul.mubr.f32.gmra.mxu0 %v516
        %v2217 = vpop.f32.mrf.mxu0
        %v2218 = vadd.f32 0.0, %v2217
        %v2219 = vpop.f32.mrf.mxu0
        %v2220 = vadd.f32 0.0, %v2219
        %2221 = vmatprep.mubr.f32.mxu0 0.0
        %2222 = vmatmul.mubr.f32.gmra.mxu0 %v519
        %v2223 = vpop.f32.mrf.mxu0
        %v2224 = vadd.f32 0.0, %v2223
        %v2225 = vpop.f32.mrf.mxu0
        %v2226 = vadd.f32 0.0, %v2225
        %2227 = vmatprep.mubr.f32.mxu0 0.0
        %2228 = vmatmul.mubr.f32.gmra.mxu0 %v522
        %v2229 = vpop.f32.mrf.mxu0
        %v2230 = vadd.f32 0.0, %v2229
        %v2231 = vpop.f32.mrf.mxu0
        %v2232 = vadd.f32 0.0, %v2231
        %2233 = vmatprep.mubr.f32.mxu0 0.0
        %2234 = vmatmul.mubr.f32.gmra.mxu0 %v525
        %v2235 = vpop.f32.mrf.mxu0
        %v2236 = vadd.f32 0.0, %v2235
        %v2237 = vpop.f32.mrf.mxu0
        %v2238 = vadd.f32 0.0, %v2237
        %2239 = vmatprep.mubr.f32.mxu0 0.0
        %2240 = vmatmul.mubr.f32.gmra.mxu0 %v528
        %v2241 = vpop.f32.mrf.mxu0
        %v2242 = vadd.f32 0.0, %v2241
        %v2243 = vpop.f32.mrf.mxu0
        %v2244 = vadd.f32 0.0, %v2243
        %2245 = vmatprep.mubr.f32.mxu0 0.0
        %2246 = vmatmul.mubr.f32.gmra.mxu0 %v531
        %v2247 = vpop.f32.mrf.mxu0
        %v2248 = vadd.f32 0.0, %v2247
        %v2249 = vpop.f32.mrf.mxu0
        %v2250 = vadd.f32 0.0, %v2249
        %2251 = vmatprep.mubr.f32.mxu0 0.0
        %2252 = vmatmul.mubr.f32.gmra.mxu0 %v534
        %v2253 = vpop.f32.mrf.mxu0
        %v2254 = vadd.f32 0.0, %v2253
        %v2255 = vpop.f32.mrf.mxu0
        %v2256 = vadd.f32 0.0, %v2255
        %2257 = vmatprep.mubr.f32.mxu0 0.0
        %2258 = vmatmul.mubr.f32.gmra.mxu0 %v537
        %v2259 = vpop.f32.mrf.mxu0
        %v2260 = vadd.f32 0.0, %v2259
        %v2261 = vpop.f32.mrf.mxu0
        %v2262 = vadd.f32 0.0, %v2261
        %2263 = vmatprep.mubr.f32.mxu0 0.0
        %2264 = vmatmul.mubr.f32.gmra.mxu0 %v540
        %v2265 = vpop.f32.mrf.mxu0
        %v2266 = vadd.f32 0.0, %v2265
        %v2267 = vpop.f32.mrf.mxu0
        %v2268 = vadd.f32 0.0, %v2267
        %2269 = vmatprep.mubr.f32.mxu0 0.0
        %2270 = vmatmul.mubr.f32.gmra.mxu0 %v543
        %v2271 = vpop.f32.mrf.mxu0
        %v2272 = vadd.f32 0.0, %v2271
        %v2273 = vpop.f32.mrf.mxu0
        %v2274 = vadd.f32 0.0, %v2273
        %2275 = vmatprep.mubr.f32.mxu0 0.0
        %2276 = vmatmul.mubr.f32.gmra.mxu0 %v546
        %v2277 = vpop.f32.mrf.mxu0
        %v2278 = vadd.f32 0.0, %v2277
        %v2279 = vpop.f32.mrf.mxu0
        %v2280 = vadd.f32 0.0, %v2279
        %2281 = vmatprep.mubr.f32.mxu0 0.0
        %2282 = vmatmul.mubr.f32.gmra.mxu0 %v549
        %v2283 = vpop.f32.mrf.mxu0
        %v2284 = vadd.f32 0.0, %v2283
        %v2285 = vpop.f32.mrf.mxu0
        %v2286 = vadd.f32 0.0, %v2285
        %2287 = vmatprep.mubr.f32.mxu0 0.0
        %2288 = vmatmul.mubr.f32.gmra.mxu0 %v552
        %v2289 = vpop.f32.mrf.mxu0
        %v2290 = vadd.f32 0.0, %v2289
        %v2291 = vpop.f32.mrf.mxu0
        %v2292 = vadd.f32 0.0, %v2291
        %2293 = vmatprep.mubr.f32.mxu0 0.0
        %2294 = vmatmul.mubr.f32.gmra.mxu0 %v555
        %v2295 = vpop.f32.mrf.mxu0
        %v2296 = vadd.f32 0.0, %v2295
        %v2297 = vpop.f32.mrf.mxu0
        %v2298 = vadd.f32 0.0, %v2297
        %2299 = vmatprep.mubr.f32.mxu0 0.0
        %2300 = vmatmul.mubr.f32.gmra.mxu0 %v558
        %v2301 = vpop.f32.mrf.mxu0
        %v2302 = vadd.f32 0.0, %v2301
        %v2303 = vpop.f32.mrf.mxu0
        %v2304 = vadd.f32 0.0, %v2303
        %2305 = vmatprep.mubr.f32.mxu0 0.0
        %2306 = vmatmul.mubr.f32.gmra.mxu0 %v561
        %v2307 = vpop.f32.mrf.mxu0
        %v2308 = vadd.f32 0.0, %v2307
        %v2309 = vpop.f32.mrf.mxu0
        %v2310 = vadd.f32 0.0, %v2309
        %2311 = vmatprep.mubr.f32.mxu0 0.0
        %2312 = vmatmul.mubr.f32.gmra.mxu0 %v564
        %v2313 = vpop.f32.mrf.mxu0
        %v2314 = vadd.f32 0.0, %v2313
        %v2315 = vpop.f32.mrf.mxu0
        %v2316 = vadd.f32 0.0, %v2315
        %2317 = vmatprep.mubr.f32.mxu0 0.0
        %2318 = vmatmul.mubr.f32.gmra.mxu0 %v567
        %v2319 = vpop.f32.mrf.mxu0
        %v2320 = vadd.f32 0.0, %v2319
        %v2321 = vpop.f32.mrf.mxu0
        %v2322 = vadd.f32 0.0, %v2321
        %2323 = vmatprep.mubr.f32.mxu0 0.0
        %2324 = vmatmul.mubr.f32.gmra.mxu0 %v570
        %v2325 = vpop.f32.mrf.mxu0
        %v2326 = vadd.f32 0.0, %v2325
        %v2327 = vpop.f32.mrf.mxu0
        %v2328 = vadd.f32 0.0, %v2327
        %2329 = vmatprep.mubr.f32.mxu0 0.0
        %2330 = vmatmul.mubr.f32.gmra.mxu0 %v573
        %v2331 = vpop.f32.mrf.mxu0
        %v2332 = vadd.f32 0.0, %v2331
        %v2333 = vpop.f32.mrf.mxu0
        %v2334 = vadd.f32 0.0, %v2333
        %2335 = vmatprep.mubr.f32.mxu0 0.0
        %2336 = vmatmul.mubr.f32.gmra.mxu0 %v576
        %v2337 = vpop.f32.mrf.mxu0
        %v2338 = vadd.f32 0.0, %v2337
        %v2339 = vpop.f32.mrf.mxu0
        %v2340 = vadd.f32 0.0, %v2339
        %2341 = vmatprep.mubr.f32.mxu0 0.0
        %2342 = vmatmul.mubr.f32.gmra.mxu0 %v579
        %v2343 = vpop.f32.mrf.mxu0
        %v2344 = vadd.f32 0.0, %v2343
        %v2345 = vpop.f32.mrf.mxu0
        %v2346 = vadd.f32 0.0, %v2345
        %2347 = vmatprep.mubr.f32.mxu0 0.0
        %2348 = vmatmul.mubr.f32.gmra.mxu0 %v582
        %v2349 = vpop.f32.mrf.mxu0
        %v2350 = vadd.f32 0.0, %v2349
        %v2351 = vpop.f32.mrf.mxu0
        %v2352 = vadd.f32 0.0, %v2351
        %2353 = vmatprep.mubr.f32.mxu0 0.0
        %2354 = vmatmul.mubr.f32.gmra.mxu0 %v585
        %v2355 = vpop.f32.mrf.mxu0
        %v2356 = vadd.f32 0.0, %v2355
        %v2357 = vpop.f32.mrf.mxu0
        %v2358 = vadd.f32 0.0, %v2357
        %2359 = vmatprep.mubr.f32.mxu0 0.0
        %2360 = vmatmul.mubr.f32.gmra.mxu0 %v588
        %v2361 = vpop.f32.mrf.mxu0
        %v2362 = vadd.f32 0.0, %v2361
        %v2363 = vpop.f32.mrf.mxu0
        %v2364 = vadd.f32 0.0, %v2363
        %2365 = vmatprep.mubr.f32.mxu0 0.0
        %2366 = vmatmul.mubr.f32.gmra.mxu0 %v1544
        %v2367 = vpop.f32.mrf.mxu0
        %v2368 = vadd.f32 0.0, %v2367
        %v2369 = vpop.f32.mrf.mxu0
        %v2370 = vadd.f32 0.0, %v2369
        %2371 = vmatprep.mubr.f32.mxu0 0.0
        %2372 = vmatmul.mubr.f32.gmra.mxu0 %v2143
        %v2373 = vpop.f32.mrf.mxu0
        %v2374 = vadd.f32 0.0, %v2373
        %v2375 = vpop.f32.mrf.mxu0
        %v2376 = vadd.f32 0.0, %v2375
        %2377 = vdwg.mxu0
        %v2378 = vadd.f32 %v1779, %v2212
        %v2379 = vadd.f32 %v1780, %v2214
        %v2380 = vadd.f32 %v1781, %v2218
        %v2381 = vadd.f32 %v1782, %v2220
        %v2382 = vadd.f32 %v1783, %v2224
        %v2383 = vadd.f32 %v1784, %v2226
        %v2384 = vadd.f32 %v1785, %v2230
        %v2385 = vadd.f32 %v1786, %v2232
        %v2386 = vadd.f32 %v1787, %v2236
        %v2387 = vadd.f32 %v1788, %v2238
        %v2388 = vadd.f32 %v1789, %v2242
        %v2389 = vadd.f32 %v1790, %v2244
        %v2390 = vadd.f32 %v1791, %v2248
        %v2391 = vadd.f32 %v1792, %v2250
        %v2392 = vadd.f32 %v1793, %v2254
        %v2393 = vadd.f32 %v1794, %v2256
        %v2394 = vadd.f32 %v1795, %v2260
        %v2395 = vadd.f32 %v1796, %v2262
        %v2396 = vadd.f32 %v1797, %v2266
        %v2397 = vadd.f32 %v1798, %v2268
        %v2398 = vadd.f32 %v1799, %v2272
        %v2399 = vadd.f32 %v1800, %v2274
        %v2400 = vadd.f32 %v1801, %v2278
        %v2401 = vadd.f32 %v1802, %v2280
        %v2402 = vadd.f32 %v1803, %v2284
        %v2403 = vadd.f32 %v1804, %v2286
        %v2404 = vadd.f32 %v1805, %v2290
        %v2405 = vadd.f32 %v1806, %v2292
        %v2406 = vadd.f32 %v1807, %v2296
        %v2407 = vadd.f32 %v1808, %v2298
        %v2408 = vadd.f32 %v1809, %v2302
        %v2409 = vadd.f32 %v1810, %v2304
        %v2410 = vadd.f32 %v1811, %v2308
        %v2411 = vadd.f32 %v1812, %v2310
        %v2412 = vadd.f32 %v1813, %v2314
        %v2413 = vadd.f32 %v1814, %v2316
        %v2414 = vadd.f32 %v1815, %v2320
        %v2415 = vadd.f32 %v1816, %v2322
        %v2416 = vadd.f32 %v1817, %v2326
        %v2417 = vadd.f32 %v1818, %v2328
        %v2418 = vadd.f32 %v1819, %v2332
        %v2419 = vadd.f32 %v1820, %v2334
        %v2420 = vadd.f32 %v1821, %v2338
        %v2421 = vadd.f32 %v1822, %v2340
        %v2422 = vadd.f32 %v1823, %v2344
        %v2423 = vadd.f32 %v1824, %v2346
        %v2424 = vadd.f32 %v1825, %v2350
        %v2425 = vadd.f32 %v1826, %v2352
        %v2426 = vadd.f32 %v1827, %v2356
        %v2427 = vadd.f32 %v1828, %v2358
        %v2428 = vadd.f32 %v1829, %v2362
        %v2429 = vadd.f32 %v1830, %v2364
        %v2430 = vadd.f32 %v1831, %v2368
        %v2431 = vadd.f32 %v1832, %v2370
        %v2432 = vadd.f32 %v1833, %v2374
        %v2433 = vadd.f32 %v1834, %v2376
        %s2434 = scalar_lea.vmem [#allocation7], 192
        %v2435 = vld [vmem:[%s2434] sm:$0xff]
        %v2436 = vld [vmem:[%s2434 + $0x8] sm:$0xff]
        %v2437 = vld [vmem:[%s2434 + $0x10] sm:$0xff]
        %v2438 = vld [vmem:[%s2434 + $0x18] sm:$0xff]
        %v2439 = vld [vmem:[%s2434 + $0x20] sm:$0xff]
        %v2440 = vld [vmem:[%s2434 + $0x28] sm:$0xff]
        %v2441 = vld [vmem:[%s2434 + $0x30] sm:$0xff]
        %v2442 = vld [vmem:[%s2434 + $0x38] sm:$0xff]
        %2443 = vmatprep.subr.mxu0 0.0
        %2444 = vmatpush1.msra.mxu0 0.0
        %2445 = vmatprep.subr.mxu0 0.0
        %2446 = vmatpush1.msra.mxu0 0.0
        %2447 = vmatprep.subr.mxu0 0.0
        %2448 = vmatpush1.msra.mxu0 0.0
        %2449 = vmatprep.subr.mxu0 0.0
        %2450 = vmatpush1.msra.mxu0 0.0
        %2451 = vmatprep.subr.mxu0 0.0
        %2452 = vmatpush1.msra.mxu0 0.0
        %2453 = vmatprep.subr.mxu0 0.0
        %2454 = vmatpush1.msra.mxu0 0.0
        %2455 = vmatprep.subr.mxu0 0.0
        %2456 = vmatpush1.msra.mxu0 0.0
        %2457 = vmatprep.subr.mxu0 0.0
        %2458 = vmatpush1.msra.mxu0 0.0
        %2459 = vmatprep.subr.mxu0 0.0
        %2460 = vmatpush1.msra.mxu0 0.0
        %2461 = vmatprep.subr.mxu0 0.0
        %2462 = vmatpush1.msra.mxu0 0.0
        %2463 = vmatprep.subr.mxu0 0.0
        %2464 = vmatpush1.msra.mxu0 0.0
        %2465 = vmatprep.subr.mxu0 0.0
        %2466 = vmatpush1.msra.mxu0 0.0
        %2467 = vmatprep.subr.mxu0 %v2442
        %2468 = vmatpush1.msra.mxu0 %v2441
        %2469 = vmatprep.subr.mxu0 %v2440
        %2470 = vmatpush1.msra.mxu0 %v2439
        %2471 = vmatprep.subr.mxu0 %v2438
        %2472 = vmatpush1.msra.mxu0 %v2437
        %2473 = vmatprep.subr.mxu0 %v2436
        %2474 = vmatpush1.msra.mxu0 %v2435
        %2475 = vmatprep.subr.mxu0 0.0
        %2476 = vmatpush2.msra.mxu0 0.0
        %2477 = vmatprep.subr.mxu0 0.0
        %2478 = vmatpush2.msra.mxu0 0.0
        %2479 = vmatprep.subr.mxu0 0.0
        %2480 = vmatpush2.msra.mxu0 0.0
        %2481 = vmatprep.subr.mxu0 0.0
        %2482 = vmatpush2.msra.mxu0 0.0
        %2483 = vmatprep.subr.mxu0 0.0
        %2484 = vmatpush2.msra.mxu0 0.0
        %2485 = vmatprep.subr.mxu0 0.0
        %2486 = vmatpush2.msra.mxu0 0.0
        %2487 = vmatprep.subr.mxu0 0.0
        %2488 = vmatpush2.msra.mxu0 0.0
        %2489 = vmatprep.subr.mxu0 0.0
        %2490 = vmatpush2.msra.mxu0 0.0
        %2491 = vmatprep.subr.mxu0 0.0
        %2492 = vmatpush2.msra.mxu0 0.0
        %2493 = vmatprep.subr.mxu0 0.0
        %2494 = vmatpush2.msra.mxu0 0.0
        %2495 = vmatprep.subr.mxu0 0.0
        %2496 = vmatpush2.msra.mxu0 0.0
        %2497 = vmatprep.subr.mxu0 0.0
        %2498 = vmatpush2.msra.mxu0 0.0
        %2499 = vmatprep.subr.mxu0 0.0
        %2500 = vmatpush2.msra.mxu0 0.0
        %2501 = vmatprep.subr.mxu0 0.0
        %2502 = vmatpush2.msra.mxu0 0.0
        %2503 = vmatprep.subr.mxu0 0.0
        %2504 = vmatpush2.msra.mxu0 0.0
        %2505 = vmatprep.subr.mxu0 0.0
        %2506 = vmatpush2.msra.mxu0 0.0
        %2507 = vmatprep.mubr.f32.mxu0 0.0
        %2508 = vmatmul.mubr.f32.gmra.mxu0 %v513
        %v2509 = vpop.f32.mrf.mxu0
        %v2510 = vadd.f32 0.0, %v2509
        %v2511 = vpop.f32.mrf.mxu0
        %v2512 = vadd.f32 0.0, %v2511
        %2513 = vmatprep.mubr.f32.mxu0 0.0
        %2514 = vmatmul.mubr.f32.gmra.mxu0 %v516
        %v2515 = vpop.f32.mrf.mxu0
        %v2516 = vadd.f32 0.0, %v2515
        %v2517 = vpop.f32.mrf.mxu0
        %v2518 = vadd.f32 0.0, %v2517
        %2519 = vmatprep.mubr.f32.mxu0 0.0
        %2520 = vmatmul.mubr.f32.gmra.mxu0 %v519
        %v2521 = vpop.f32.mrf.mxu0
        %v2522 = vadd.f32 0.0, %v2521
        %v2523 = vpop.f32.mrf.mxu0
        %v2524 = vadd.f32 0.0, %v2523
        %2525 = vmatprep.mubr.f32.mxu0 0.0
        %2526 = vmatmul.mubr.f32.gmra.mxu0 %v522
        %v2527 = vpop.f32.mrf.mxu0
        %v2528 = vadd.f32 0.0, %v2527
        %v2529 = vpop.f32.mrf.mxu0
        %v2530 = vadd.f32 0.0, %v2529
        %2531 = vmatprep.mubr.f32.mxu0 0.0
        %2532 = vmatmul.mubr.f32.gmra.mxu0 %v525
        %v2533 = vpop.f32.mrf.mxu0
        %v2534 = vadd.f32 0.0, %v2533
        %v2535 = vpop.f32.mrf.mxu0
        %v2536 = vadd.f32 0.0, %v2535
        %2537 = vmatprep.mubr.f32.mxu0 0.0
        %2538 = vmatmul.mubr.f32.gmra.mxu0 %v528
        %v2539 = vpop.f32.mrf.mxu0
        %v2540 = vadd.f32 0.0, %v2539
        %v2541 = vpop.f32.mrf.mxu0
        %v2542 = vadd.f32 0.0, %v2541
        %2543 = vmatprep.mubr.f32.mxu0 0.0
        %2544 = vmatmul.mubr.f32.gmra.mxu0 %v531
        %v2545 = vpop.f32.mrf.mxu0
        %v2546 = vadd.f32 0.0, %v2545
        %v2547 = vpop.f32.mrf.mxu0
        %v2548 = vadd.f32 0.0, %v2547
        %2549 = vmatprep.mubr.f32.mxu0 0.0
        %2550 = vmatmul.mubr.f32.gmra.mxu0 %v534
        %v2551 = vpop.f32.mrf.mxu0
        %v2552 = vadd.f32 0.0, %v2551
        %v2553 = vpop.f32.mrf.mxu0
        %v2554 = vadd.f32 0.0, %v2553
        %2555 = vmatprep.mubr.f32.mxu0 0.0
        %2556 = vmatmul.mubr.f32.gmra.mxu0 %v537
        %v2557 = vpop.f32.mrf.mxu0
        %v2558 = vadd.f32 0.0, %v2557
        %v2559 = vpop.f32.mrf.mxu0
        %v2560 = vadd.f32 0.0, %v2559
        %2561 = vmatprep.mubr.f32.mxu0 0.0
        %2562 = vmatmul.mubr.f32.gmra.mxu0 %v540
        %v2563 = vpop.f32.mrf.mxu0
        %v2564 = vadd.f32 0.0, %v2563
        %v2565 = vpop.f32.mrf.mxu0
        %v2566 = vadd.f32 0.0, %v2565
        %2567 = vmatprep.mubr.f32.mxu0 0.0
        %2568 = vmatmul.mubr.f32.gmra.mxu0 %v543
        %v2569 = vpop.f32.mrf.mxu0
        %v2570 = vadd.f32 0.0, %v2569
        %v2571 = vpop.f32.mrf.mxu0
        %v2572 = vadd.f32 0.0, %v2571
        %2573 = vmatprep.mubr.f32.mxu0 0.0
        %2574 = vmatmul.mubr.f32.gmra.mxu0 %v546
        %v2575 = vpop.f32.mrf.mxu0
        %v2576 = vadd.f32 0.0, %v2575
        %v2577 = vpop.f32.mrf.mxu0
        %v2578 = vadd.f32 0.0, %v2577
        %2579 = vmatprep.mubr.f32.mxu0 0.0
        %2580 = vmatmul.mubr.f32.gmra.mxu0 %v549
        %v2581 = vpop.f32.mrf.mxu0
        %v2582 = vadd.f32 0.0, %v2581
        %v2583 = vpop.f32.mrf.mxu0
        %v2584 = vadd.f32 0.0, %v2583
        %2585 = vmatprep.mubr.f32.mxu0 0.0
        %2586 = vmatmul.mubr.f32.gmra.mxu0 %v552
        %v2587 = vpop.f32.mrf.mxu0
        %v2588 = vadd.f32 0.0, %v2587
        %v2589 = vpop.f32.mrf.mxu0
        %v2590 = vadd.f32 0.0, %v2589
        %2591 = vmatprep.mubr.f32.mxu0 0.0
        %2592 = vmatmul.mubr.f32.gmra.mxu0 %v555
        %v2593 = vpop.f32.mrf.mxu0
        %v2594 = vadd.f32 0.0, %v2593
        %v2595 = vpop.f32.mrf.mxu0
        %v2596 = vadd.f32 0.0, %v2595
        %2597 = vmatprep.mubr.f32.mxu0 0.0
        %2598 = vmatmul.mubr.f32.gmra.mxu0 %v558
        %v2599 = vpop.f32.mrf.mxu0
        %v2600 = vadd.f32 0.0, %v2599
        %v2601 = vpop.f32.mrf.mxu0
        %v2602 = vadd.f32 0.0, %v2601
        %2603 = vmatprep.mubr.f32.mxu0 0.0
        %2604 = vmatmul.mubr.f32.gmra.mxu0 %v561
        %v2605 = vpop.f32.mrf.mxu0
        %v2606 = vadd.f32 0.0, %v2605
        %v2607 = vpop.f32.mrf.mxu0
        %v2608 = vadd.f32 0.0, %v2607
        %2609 = vmatprep.mubr.f32.mxu0 0.0
        %2610 = vmatmul.mubr.f32.gmra.mxu0 %v564
        %v2611 = vpop.f32.mrf.mxu0
        %v2612 = vadd.f32 0.0, %v2611
        %v2613 = vpop.f32.mrf.mxu0
        %v2614 = vadd.f32 0.0, %v2613
        %2615 = vmatprep.mubr.f32.mxu0 0.0
        %2616 = vmatmul.mubr.f32.gmra.mxu0 %v567
        %v2617 = vpop.f32.mrf.mxu0
        %v2618 = vadd.f32 0.0, %v2617
        %v2619 = vpop.f32.mrf.mxu0
        %v2620 = vadd.f32 0.0, %v2619
        %2621 = vmatprep.mubr.f32.mxu0 0.0
        %2622 = vmatmul.mubr.f32.gmra.mxu0 %v570
        %v2623 = vpop.f32.mrf.mxu0
        %v2624 = vadd.f32 0.0, %v2623
        %v2625 = vpop.f32.mrf.mxu0
        %v2626 = vadd.f32 0.0, %v2625
        %2627 = vmatprep.mubr.f32.mxu0 0.0
        %2628 = vmatmul.mubr.f32.gmra.mxu0 %v573
        %v2629 = vpop.f32.mrf.mxu0
        %v2630 = vadd.f32 0.0, %v2629
        %v2631 = vpop.f32.mrf.mxu0
        %v2632 = vadd.f32 0.0, %v2631
        %2633 = vmatprep.mubr.f32.mxu0 0.0
        %2634 = vmatmul.mubr.f32.gmra.mxu0 %v576
        %v2635 = vpop.f32.mrf.mxu0
        %v2636 = vadd.f32 0.0, %v2635
        %v2637 = vpop.f32.mrf.mxu0
        %v2638 = vadd.f32 0.0, %v2637
        %2639 = vmatprep.mubr.f32.mxu0 0.0
        %2640 = vmatmul.mubr.f32.gmra.mxu0 %v579
        %v2641 = vpop.f32.mrf.mxu0
        %v2642 = vadd.f32 0.0, %v2641
        %v2643 = vpop.f32.mrf.mxu0
        %v2644 = vadd.f32 0.0, %v2643
        %2645 = vmatprep.mubr.f32.mxu0 0.0
        %2646 = vmatmul.mubr.f32.gmra.mxu0 %v582
        %v2647 = vpop.f32.mrf.mxu0
        %v2648 = vadd.f32 0.0, %v2647
        %v2649 = vpop.f32.mrf.mxu0
        %v2650 = vadd.f32 0.0, %v2649
        %2651 = vmatprep.mubr.f32.mxu0 0.0
        %2652 = vmatmul.mubr.f32.gmra.mxu0 %v585
        %v2653 = vpop.f32.mrf.mxu0
        %v2654 = vadd.f32 0.0, %v2653
        %v2655 = vpop.f32.mrf.mxu0
        %v2656 = vadd.f32 0.0, %v2655
        %2657 = vmatprep.mubr.f32.mxu0 0.0
        %2658 = vmatmul.mubr.f32.gmra.mxu0 %v588
        %v2659 = vpop.f32.mrf.mxu0
        %v2660 = vadd.f32 0.0, %v2659
        %v2661 = vpop.f32.mrf.mxu0
        %v2662 = vadd.f32 0.0, %v2661
        %2663 = vmatprep.mubr.f32.mxu0 0.0
        %2664 = vmatmul.mubr.f32.gmra.mxu0 %v1544
        %v2665 = vpop.f32.mrf.mxu0
        %v2666 = vadd.f32 0.0, %v2665
        %v2667 = vpop.f32.mrf.mxu0
        %v2668 = vadd.f32 0.0, %v2667
        %2669 = vmatprep.mubr.f32.mxu0 0.0
        %2670 = vmatmul.mubr.f32.gmra.mxu0 %v2143
        %v2671 = vpop.f32.mrf.mxu0
        %v2672 = vadd.f32 0.0, %v2671
        %v2673 = vpop.f32.mrf.mxu0
        %v2674 = vadd.f32 0.0, %v2673
        %2675 = vdwg.mxu0
        %v2676 = vadd.f32 %v2077, %v2510
        %v2677 = vadd.f32 %v2078, %v2512
        %v2678 = vadd.f32 %v2079, %v2516
        %v2679 = vadd.f32 %v2080, %v2518
        %v2680 = vadd.f32 %v2081, %v2522
        %v2681 = vadd.f32 %v2082, %v2524
        %v2682 = vadd.f32 %v2083, %v2528
        %v2683 = vadd.f32 %v2084, %v2530
        %v2684 = vadd.f32 %v2085, %v2534
        %v2685 = vadd.f32 %v2086, %v2536
        %v2686 = vadd.f32 %v2087, %v2540
        %v2687 = vadd.f32 %v2088, %v2542
        %v2688 = vadd.f32 %v2089, %v2546
        %v2689 = vadd.f32 %v2090, %v2548
        %v2690 = vadd.f32 %v2091, %v2552
        %v2691 = vadd.f32 %v2092, %v2554
        %v2692 = vadd.f32 %v2093, %v2558
        %v2693 = vadd.f32 %v2094, %v2560
        %v2694 = vadd.f32 %v2095, %v2564
        %v2695 = vadd.f32 %v2096, %v2566
        %v2696 = vadd.f32 %v2097, %v2570
        %v2697 = vadd.f32 %v2098, %v2572
        %v2698 = vadd.f32 %v2099, %v2576
        %v2699 = vadd.f32 %v2100, %v2578
        %v2700 = vadd.f32 %v2101, %v2582
        %v2701 = vadd.f32 %v2102, %v2584
        %v2702 = vadd.f32 %v2103, %v2588
        %v2703 = vadd.f32 %v2104, %v2590
        %v2704 = vadd.f32 %v2105, %v2594
        %v2705 = vadd.f32 %v2106, %v2596
        %v2706 = vadd.f32 %v2107, %v2600
        %v2707 = vadd.f32 %v2108, %v2602
        %v2708 = vadd.f32 %v2109, %v2606
        %v2709 = vadd.f32 %v2110, %v2608
        %v2710 = vadd.f32 %v2111, %v2612
        %v2711 = vadd.f32 %v2112, %v2614
        %v2712 = vadd.f32 %v2113, %v2618
        %v2713 = vadd.f32 %v2114, %v2620
        %v2714 = vadd.f32 %v2115, %v2624
        %v2715 = vadd.f32 %v2116, %v2626
        %v2716 = vadd.f32 %v2117, %v2630
        %v2717 = vadd.f32 %v2118, %v2632
        %v2718 = vadd.f32 %v2119, %v2636
        %v2719 = vadd.f32 %v2120, %v2638
        %v2720 = vadd.f32 %v2121, %v2642
        %v2721 = vadd.f32 %v2122, %v2644
        %v2722 = vadd.f32 %v2123, %v2648
        %v2723 = vadd.f32 %v2124, %v2650
        %v2724 = vadd.f32 %v2125, %v2654
        %v2725 = vadd.f32 %v2126, %v2656
        %v2726 = vadd.f32 %v2127, %v2660
        %v2727 = vadd.f32 %v2128, %v2662
        %v2728 = vadd.f32 %v2129, %v2666
        %v2729 = vadd.f32 %v2130, %v2668
        %v2730 = vadd.f32 %v2131, %v2672
        %v2731 = vadd.f32 %v2132, %v2674
        %s2732 = scalar_lea.vmem [#allocation5], 256
        %v2733 = vld [vmem:[%s2732] sm:$0xff]
        %v2734 = vld [vmem:[%s2732 + $0x8] sm:$0xff]
        %v2735 = vld [vmem:[%s2732 + $0x10] sm:$0xff]
        %v2736 = vld [vmem:[%s2732 + $0x18] sm:$0xff]
        %v2737 = vld [vmem:[%s2732 + $0x20] sm:$0xff]
        %v2738 = vld [vmem:[%s2732 + $0x28] sm:$0xff]
        %v2739 = vld [vmem:[%s2732 + $0x30] sm:$0xff]
        %v2740 = vld [vmem:[%s2732 + $0x38] sm:$0xff]
        %v2742 = vsel %vm505, %v479, 0
        %2744 = vmatprep.subr.mxu0 0.0
        %2745 = vmatpush1.msra.mxu0 0.0
        %2746 = vmatprep.subr.mxu0 0.0
        %2747 = vmatpush1.msra.mxu0 0.0
        %2748 = vmatprep.subr.mxu0 0.0
        %2749 = vmatpush1.msra.mxu0 0.0
        %2750 = vmatprep.subr.mxu0 0.0
        %2751 = vmatpush1.msra.mxu0 0.0
        %2752 = vmatprep.subr.mxu0 0.0
        %2753 = vmatpush1.msra.mxu0 0.0
        %2754 = vmatprep.subr.mxu0 0.0
        %2755 = vmatpush1.msra.mxu0 0.0
        %2756 = vmatprep.subr.mxu0 0.0
        %2757 = vmatpush1.msra.mxu0 0.0
        %2758 = vmatprep.subr.mxu0 0.0
        %2759 = vmatpush1.msra.mxu0 0.0
        %2760 = vmatprep.subr.mxu0 0.0
        %2761 = vmatpush1.msra.mxu0 0.0
        %2762 = vmatprep.subr.mxu0 0.0
        %2763 = vmatpush1.msra.mxu0 0.0
        %2764 = vmatprep.subr.mxu0 0.0
        %2765 = vmatpush1.msra.mxu0 0.0
        %2766 = vmatprep.subr.mxu0 0.0
        %2767 = vmatpush1.msra.mxu0 0.0
        %2768 = vmatprep.subr.mxu0 %v2740
        %2769 = vmatpush1.msra.mxu0 %v2739
        %2770 = vmatprep.subr.mxu0 %v2738
        %2771 = vmatpush1.msra.mxu0 %v2737
        %2772 = vmatprep.subr.mxu0 %v2736
        %2773 = vmatpush1.msra.mxu0 %v2735
        %2774 = vmatprep.subr.mxu0 %v2734
        %2775 = vmatpush1.msra.mxu0 %v2733
        %2776 = vmatprep.subr.mxu0 0.0
        %2777 = vmatpush2.msra.mxu0 0.0
        %2778 = vmatprep.subr.mxu0 0.0
        %2779 = vmatpush2.msra.mxu0 0.0
        %2780 = vmatprep.subr.mxu0 0.0
        %2781 = vmatpush2.msra.mxu0 0.0
        %2782 = vmatprep.subr.mxu0 0.0
        %2783 = vmatpush2.msra.mxu0 0.0
        %2784 = vmatprep.subr.mxu0 0.0
        %2785 = vmatpush2.msra.mxu0 0.0
        %2786 = vmatprep.subr.mxu0 0.0
        %2787 = vmatpush2.msra.mxu0 0.0
        %2788 = vmatprep.subr.mxu0 0.0
        %2789 = vmatpush2.msra.mxu0 0.0
        %2790 = vmatprep.subr.mxu0 0.0
        %2791 = vmatpush2.msra.mxu0 0.0
        %2792 = vmatprep.subr.mxu0 0.0
        %2793 = vmatpush2.msra.mxu0 0.0
        %2794 = vmatprep.subr.mxu0 0.0
        %2795 = vmatpush2.msra.mxu0 0.0
        %2796 = vmatprep.subr.mxu0 0.0
        %2797 = vmatpush2.msra.mxu0 0.0
        %2798 = vmatprep.subr.mxu0 0.0
        %2799 = vmatpush2.msra.mxu0 0.0
        %2800 = vmatprep.subr.mxu0 0.0
        %2801 = vmatpush2.msra.mxu0 0.0
        %2802 = vmatprep.subr.mxu0 0.0
        %2803 = vmatpush2.msra.mxu0 0.0
        %2804 = vmatprep.subr.mxu0 0.0
        %2805 = vmatpush2.msra.mxu0 0.0
        %2806 = vmatprep.subr.mxu0 0.0
        %2807 = vmatpush2.msra.mxu0 0.0
        %2808 = vmatprep.mubr.f32.mxu0 0.0
        %2809 = vmatmul.mubr.f32.gmra.mxu0 %v516
        %v2810 = vpop.f32.mrf.mxu0
        %v2811 = vadd.f32 0.0, %v2810
        %v2812 = vpop.f32.mrf.mxu0
        %v2813 = vadd.f32 0.0, %v2812
        %2814 = vmatprep.mubr.f32.mxu0 0.0
        %2815 = vmatmul.mubr.f32.gmra.mxu0 %v519
        %v2816 = vpop.f32.mrf.mxu0
        %v2817 = vadd.f32 0.0, %v2816
        %v2818 = vpop.f32.mrf.mxu0
        %v2819 = vadd.f32 0.0, %v2818
        %2820 = vmatprep.mubr.f32.mxu0 0.0
        %2821 = vmatmul.mubr.f32.gmra.mxu0 %v522
        %v2822 = vpop.f32.mrf.mxu0
        %v2823 = vadd.f32 0.0, %v2822
        %v2824 = vpop.f32.mrf.mxu0
        %v2825 = vadd.f32 0.0, %v2824
        %2826 = vmatprep.mubr.f32.mxu0 0.0
        %2827 = vmatmul.mubr.f32.gmra.mxu0 %v525
        %v2828 = vpop.f32.mrf.mxu0
        %v2829 = vadd.f32 0.0, %v2828
        %v2830 = vpop.f32.mrf.mxu0
        %v2831 = vadd.f32 0.0, %v2830
        %2832 = vmatprep.mubr.f32.mxu0 0.0
        %2833 = vmatmul.mubr.f32.gmra.mxu0 %v528
        %v2834 = vpop.f32.mrf.mxu0
        %v2835 = vadd.f32 0.0, %v2834
        %v2836 = vpop.f32.mrf.mxu0
        %v2837 = vadd.f32 0.0, %v2836
        %2838 = vmatprep.mubr.f32.mxu0 0.0
        %2839 = vmatmul.mubr.f32.gmra.mxu0 %v531
        %v2840 = vpop.f32.mrf.mxu0
        %v2841 = vadd.f32 0.0, %v2840
        %v2842 = vpop.f32.mrf.mxu0
        %v2843 = vadd.f32 0.0, %v2842
        %2844 = vmatprep.mubr.f32.mxu0 0.0
        %2845 = vmatmul.mubr.f32.gmra.mxu0 %v534
        %v2846 = vpop.f32.mrf.mxu0
        %v2847 = vadd.f32 0.0, %v2846
        %v2848 = vpop.f32.mrf.mxu0
        %v2849 = vadd.f32 0.0, %v2848
        %2850 = vmatprep.mubr.f32.mxu0 0.0
        %2851 = vmatmul.mubr.f32.gmra.mxu0 %v537
        %v2852 = vpop.f32.mrf.mxu0
        %v2853 = vadd.f32 0.0, %v2852
        %v2854 = vpop.f32.mrf.mxu0
        %v2855 = vadd.f32 0.0, %v2854
        %2856 = vmatprep.mubr.f32.mxu0 0.0
        %2857 = vmatmul.mubr.f32.gmra.mxu0 %v540
        %v2858 = vpop.f32.mrf.mxu0
        %v2859 = vadd.f32 0.0, %v2858
        %v2860 = vpop.f32.mrf.mxu0
        %v2861 = vadd.f32 0.0, %v2860
        %2862 = vmatprep.mubr.f32.mxu0 0.0
        %2863 = vmatmul.mubr.f32.gmra.mxu0 %v543
        %v2864 = vpop.f32.mrf.mxu0
        %v2865 = vadd.f32 0.0, %v2864
        %v2866 = vpop.f32.mrf.mxu0
        %v2867 = vadd.f32 0.0, %v2866
        %2868 = vmatprep.mubr.f32.mxu0 0.0
        %2869 = vmatmul.mubr.f32.gmra.mxu0 %v546
        %v2870 = vpop.f32.mrf.mxu0
        %v2871 = vadd.f32 0.0, %v2870
        %v2872 = vpop.f32.mrf.mxu0
        %v2873 = vadd.f32 0.0, %v2872
        %2874 = vmatprep.mubr.f32.mxu0 0.0
        %2875 = vmatmul.mubr.f32.gmra.mxu0 %v549
        %v2876 = vpop.f32.mrf.mxu0
        %v2877 = vadd.f32 0.0, %v2876
        %v2878 = vpop.f32.mrf.mxu0
        %v2879 = vadd.f32 0.0, %v2878
        %2880 = vmatprep.mubr.f32.mxu0 0.0
        %2881 = vmatmul.mubr.f32.gmra.mxu0 %v552
        %v2882 = vpop.f32.mrf.mxu0
        %v2883 = vadd.f32 0.0, %v2882
        %v2884 = vpop.f32.mrf.mxu0
        %v2885 = vadd.f32 0.0, %v2884
        %2886 = vmatprep.mubr.f32.mxu0 0.0
        %2887 = vmatmul.mubr.f32.gmra.mxu0 %v555
        %v2888 = vpop.f32.mrf.mxu0
        %v2889 = vadd.f32 0.0, %v2888
        %v2890 = vpop.f32.mrf.mxu0
        %v2891 = vadd.f32 0.0, %v2890
        %2892 = vmatprep.mubr.f32.mxu0 0.0
        %2893 = vmatmul.mubr.f32.gmra.mxu0 %v558
        %v2894 = vpop.f32.mrf.mxu0
        %v2895 = vadd.f32 0.0, %v2894
        %v2896 = vpop.f32.mrf.mxu0
        %v2897 = vadd.f32 0.0, %v2896
        %2898 = vmatprep.mubr.f32.mxu0 0.0
        %2899 = vmatmul.mubr.f32.gmra.mxu0 %v561
        %v2900 = vpop.f32.mrf.mxu0
        %v2901 = vadd.f32 0.0, %v2900
        %v2902 = vpop.f32.mrf.mxu0
        %v2903 = vadd.f32 0.0, %v2902
        %2904 = vmatprep.mubr.f32.mxu0 0.0
        %2905 = vmatmul.mubr.f32.gmra.mxu0 %v564
        %v2906 = vpop.f32.mrf.mxu0
        %v2907 = vadd.f32 0.0, %v2906
        %v2908 = vpop.f32.mrf.mxu0
        %v2909 = vadd.f32 0.0, %v2908
        %2910 = vmatprep.mubr.f32.mxu0 0.0
        %2911 = vmatmul.mubr.f32.gmra.mxu0 %v567
        %v2912 = vpop.f32.mrf.mxu0
        %v2913 = vadd.f32 0.0, %v2912
        %v2914 = vpop.f32.mrf.mxu0
        %v2915 = vadd.f32 0.0, %v2914
        %2916 = vmatprep.mubr.f32.mxu0 0.0
        %2917 = vmatmul.mubr.f32.gmra.mxu0 %v570
        %v2918 = vpop.f32.mrf.mxu0
        %v2919 = vadd.f32 0.0, %v2918
        %v2920 = vpop.f32.mrf.mxu0
        %v2921 = vadd.f32 0.0, %v2920
        %2922 = vmatprep.mubr.f32.mxu0 0.0
        %2923 = vmatmul.mubr.f32.gmra.mxu0 %v573
        %v2924 = vpop.f32.mrf.mxu0
        %v2925 = vadd.f32 0.0, %v2924
        %v2926 = vpop.f32.mrf.mxu0
        %v2927 = vadd.f32 0.0, %v2926
        %2928 = vmatprep.mubr.f32.mxu0 0.0
        %2929 = vmatmul.mubr.f32.gmra.mxu0 %v576
        %v2930 = vpop.f32.mrf.mxu0
        %v2931 = vadd.f32 0.0, %v2930
        %v2932 = vpop.f32.mrf.mxu0
        %v2933 = vadd.f32 0.0, %v2932
        %2934 = vmatprep.mubr.f32.mxu0 0.0
        %2935 = vmatmul.mubr.f32.gmra.mxu0 %v579
        %v2936 = vpop.f32.mrf.mxu0
        %v2937 = vadd.f32 0.0, %v2936
        %v2938 = vpop.f32.mrf.mxu0
        %v2939 = vadd.f32 0.0, %v2938
        %2940 = vmatprep.mubr.f32.mxu0 0.0
        %2941 = vmatmul.mubr.f32.gmra.mxu0 %v582
        %v2942 = vpop.f32.mrf.mxu0
        %v2943 = vadd.f32 0.0, %v2942
        %v2944 = vpop.f32.mrf.mxu0
        %v2945 = vadd.f32 0.0, %v2944
        %2946 = vmatprep.mubr.f32.mxu0 0.0
        %2947 = vmatmul.mubr.f32.gmra.mxu0 %v585
        %v2948 = vpop.f32.mrf.mxu0
        %v2949 = vadd.f32 0.0, %v2948
        %v2950 = vpop.f32.mrf.mxu0
        %v2951 = vadd.f32 0.0, %v2950
        %2952 = vmatprep.mubr.f32.mxu0 0.0
        %2953 = vmatmul.mubr.f32.gmra.mxu0 %v588
        %v2954 = vpop.f32.mrf.mxu0
        %v2955 = vadd.f32 0.0, %v2954
        %v2956 = vpop.f32.mrf.mxu0
        %v2957 = vadd.f32 0.0, %v2956
        %2958 = vmatprep.mubr.f32.mxu0 0.0
        %2959 = vmatmul.mubr.f32.gmra.mxu0 %v1544
        %v2960 = vpop.f32.mrf.mxu0
        %v2961 = vadd.f32 0.0, %v2960
        %v2962 = vpop.f32.mrf.mxu0
        %v2963 = vadd.f32 0.0, %v2962
        %2964 = vmatprep.mubr.f32.mxu0 0.0
        %2965 = vmatmul.mubr.f32.gmra.mxu0 %v2143
        %v2966 = vpop.f32.mrf.mxu0
        %v2967 = vadd.f32 0.0, %v2966
        %v2968 = vpop.f32.mrf.mxu0
        %v2969 = vadd.f32 0.0, %v2968
        %2970 = vmatprep.mubr.f32.mxu0 0.0
        %2971 = vmatmul.mubr.f32.gmra.mxu0 %v2742
        %v2972 = vpop.f32.mrf.mxu0
        %v2973 = vadd.f32 0.0, %v2972
        %v2974 = vpop.f32.mrf.mxu0
        %v2975 = vadd.f32 0.0, %v2974
        %2976 = vdwg.mxu0
        %v2977 = vadd.f32 %v2378, %v2811
        %v2978 = vadd.f32 %v2379, %v2813
        %v2979 = vadd.f32 %v2380, %v2817
        %v2980 = vadd.f32 %v2381, %v2819
        %v2981 = vadd.f32 %v2382, %v2823
        %v2982 = vadd.f32 %v2383, %v2825
        %v2983 = vadd.f32 %v2384, %v2829
        %v2984 = vadd.f32 %v2385, %v2831
        %v2985 = vadd.f32 %v2386, %v2835
        %v2986 = vadd.f32 %v2387, %v2837
        %v2987 = vadd.f32 %v2388, %v2841
        %v2988 = vadd.f32 %v2389, %v2843
        %v2989 = vadd.f32 %v2390, %v2847
        %v2990 = vadd.f32 %v2391, %v2849
        %v2991 = vadd.f32 %v2392, %v2853
        %v2992 = vadd.f32 %v2393, %v2855
        %v2993 = vadd.f32 %v2394, %v2859
        %v2994 = vadd.f32 %v2395, %v2861
        %v2995 = vadd.f32 %v2396, %v2865
        %v2996 = vadd.f32 %v2397, %v2867
        %v2997 = vadd.f32 %v2398, %v2871
        %v2998 = vadd.f32 %v2399, %v2873
        %v2999 = vadd.f32 %v2400, %v2877
        %v3000 = vadd.f32 %v2401, %v2879
        %v3001 = vadd.f32 %v2402, %v2883
        %v3002 = vadd.f32 %v2403, %v2885
        %v3003 = vadd.f32 %v2404, %v2889
        %v3004 = vadd.f32 %v2405, %v2891
        %v3005 = vadd.f32 %v2406, %v2895
        %v3006 = vadd.f32 %v2407, %v2897
        %v3007 = vadd.f32 %v2408, %v2901
        %v3008 = vadd.f32 %v2409, %v2903
        %v3009 = vadd.f32 %v2410, %v2907
        %v3010 = vadd.f32 %v2411, %v2909
        %v3011 = vadd.f32 %v2412, %v2913
        %v3012 = vadd.f32 %v2413, %v2915
        %v3013 = vadd.f32 %v2414, %v2919
        %v3014 = vadd.f32 %v2415, %v2921
        %v3015 = vadd.f32 %v2416, %v2925
        %v3016 = vadd.f32 %v2417, %v2927
        %v3017 = vadd.f32 %v2418, %v2931
        %v3018 = vadd.f32 %v2419, %v2933
        %v3019 = vadd.f32 %v2420, %v2937
        %v3020 = vadd.f32 %v2421, %v2939
        %v3021 = vadd.f32 %v2422, %v2943
        %v3022 = vadd.f32 %v2423, %v2945
        %v3023 = vadd.f32 %v2424, %v2949
        %v3024 = vadd.f32 %v2425, %v2951
        %v3025 = vadd.f32 %v2426, %v2955
        %v3026 = vadd.f32 %v2427, %v2957
        %v3027 = vadd.f32 %v2428, %v2961
        %v3028 = vadd.f32 %v2429, %v2963
        %v3029 = vadd.f32 %v2430, %v2967
        %v3030 = vadd.f32 %v2431, %v2969
        %v3031 = vadd.f32 %v2432, %v2973
        %v3032 = vadd.f32 %v2433, %v2975
        %s3033 = scalar_lea.vmem [#allocation7], 256
        %v3034 = vld [vmem:[%s3033] sm:$0xff]
        %v3035 = vld [vmem:[%s3033 + $0x8] sm:$0xff]
        %v3036 = vld [vmem:[%s3033 + $0x10] sm:$0xff]
        %v3037 = vld [vmem:[%s3033 + $0x18] sm:$0xff]
        %v3038 = vld [vmem:[%s3033 + $0x20] sm:$0xff]
        %v3039 = vld [vmem:[%s3033 + $0x28] sm:$0xff]
        %v3040 = vld [vmem:[%s3033 + $0x30] sm:$0xff]
        %v3041 = vld [vmem:[%s3033 + $0x38] sm:$0xff]
        %3042 = vmatprep.subr.mxu0 0.0
        %3043 = vmatpush1.msra.mxu0 0.0
        %3044 = vmatprep.subr.mxu0 0.0
        %3045 = vmatpush1.msra.mxu0 0.0
        %3046 = vmatprep.subr.mxu0 0.0
        %3047 = vmatpush1.msra.mxu0 0.0
        %3048 = vmatprep.subr.mxu0 0.0
        %3049 = vmatpush1.msra.mxu0 0.0
        %3050 = vmatprep.subr.mxu0 0.0
        %3051 = vmatpush1.msra.mxu0 0.0
        %3052 = vmatprep.subr.mxu0 0.0
        %3053 = vmatpush1.msra.mxu0 0.0
        %3054 = vmatprep.subr.mxu0 0.0
        %3055 = vmatpush1.msra.mxu0 0.0
        %3056 = vmatprep.subr.mxu0 0.0
        %3057 = vmatpush1.msra.mxu0 0.0
        %3058 = vmatprep.subr.mxu0 0.0
        %3059 = vmatpush1.msra.mxu0 0.0
        %3060 = vmatprep.subr.mxu0 0.0
        %3061 = vmatpush1.msra.mxu0 0.0
        %3062 = vmatprep.subr.mxu0 0.0
        %3063 = vmatpush1.msra.mxu0 0.0
        %3064 = vmatprep.subr.mxu0 0.0
        %3065 = vmatpush1.msra.mxu0 0.0
        %3066 = vmatprep.subr.mxu0 %v3041
        %3067 = vmatpush1.msra.mxu0 %v3040
        %3068 = vmatprep.subr.mxu0 %v3039
        %3069 = vmatpush1.msra.mxu0 %v3038
        %3070 = vmatprep.subr.mxu0 %v3037
        %3071 = vmatpush1.msra.mxu0 %v3036
        %3072 = vmatprep.subr.mxu0 %v3035
        %3073 = vmatpush1.msra.mxu0 %v3034
        %3074 = vmatprep.subr.mxu0 0.0
        %3075 = vmatpush2.msra.mxu0 0.0
        %3076 = vmatprep.subr.mxu0 0.0
        %3077 = vmatpush2.msra.mxu0 0.0
        %3078 = vmatprep.subr.mxu0 0.0
        %3079 = vmatpush2.msra.mxu0 0.0
        %3080 = vmatprep.subr.mxu0 0.0
        %3081 = vmatpush2.msra.mxu0 0.0
        %3082 = vmatprep.subr.mxu0 0.0
        %3083 = vmatpush2.msra.mxu0 0.0
        %3084 = vmatprep.subr.mxu0 0.0
        %3085 = vmatpush2.msra.mxu0 0.0
        %3086 = vmatprep.subr.mxu0 0.0
        %3087 = vmatpush2.msra.mxu0 0.0
        %3088 = vmatprep.subr.mxu0 0.0
        %3089 = vmatpush2.msra.mxu0 0.0
        %3090 = vmatprep.subr.mxu0 0.0
        %3091 = vmatpush2.msra.mxu0 0.0
        %3092 = vmatprep.subr.mxu0 0.0
        %3093 = vmatpush2.msra.mxu0 0.0
        %3094 = vmatprep.subr.mxu0 0.0
        %3095 = vmatpush2.msra.mxu0 0.0
        %3096 = vmatprep.subr.mxu0 0.0
        %3097 = vmatpush2.msra.mxu0 0.0
        %3098 = vmatprep.subr.mxu0 0.0
        %3099 = vmatpush2.msra.mxu0 0.0
        %3100 = vmatprep.subr.mxu0 0.0
        %3101 = vmatpush2.msra.mxu0 0.0
        %3102 = vmatprep.subr.mxu0 0.0
        %3103 = vmatpush2.msra.mxu0 0.0
        %3104 = vmatprep.subr.mxu0 0.0
        %3105 = vmatpush2.msra.mxu0 0.0
        %3106 = vmatprep.mubr.f32.mxu0 0.0
        %3107 = vmatmul.mubr.f32.gmra.mxu0 %v516
        %v3108 = vpop.f32.mrf.mxu0
        %v3109 = vadd.f32 0.0, %v3108
        %v3110 = vpop.f32.mrf.mxu0
        %v3111 = vadd.f32 0.0, %v3110
        %3112 = vmatprep.mubr.f32.mxu0 0.0
        %3113 = vmatmul.mubr.f32.gmra.mxu0 %v519
        %v3114 = vpop.f32.mrf.mxu0
        %v3115 = vadd.f32 0.0, %v3114
        %v3116 = vpop.f32.mrf.mxu0
        %v3117 = vadd.f32 0.0, %v3116
        %3118 = vmatprep.mubr.f32.mxu0 0.0
        %3119 = vmatmul.mubr.f32.gmra.mxu0 %v522
        %v3120 = vpop.f32.mrf.mxu0
        %v3121 = vadd.f32 0.0, %v3120
        %v3122 = vpop.f32.mrf.mxu0
        %v3123 = vadd.f32 0.0, %v3122
        %3124 = vmatprep.mubr.f32.mxu0 0.0
        %3125 = vmatmul.mubr.f32.gmra.mxu0 %v525
        %v3126 = vpop.f32.mrf.mxu0
        %v3127 = vadd.f32 0.0, %v3126
        %v3128 = vpop.f32.mrf.mxu0
        %v3129 = vadd.f32 0.0, %v3128
        %3130 = vmatprep.mubr.f32.mxu0 0.0
        %3131 = vmatmul.mubr.f32.gmra.mxu0 %v528
        %v3132 = vpop.f32.mrf.mxu0
        %v3133 = vadd.f32 0.0, %v3132
        %v3134 = vpop.f32.mrf.mxu0
        %v3135 = vadd.f32 0.0, %v3134
        %3136 = vmatprep.mubr.f32.mxu0 0.0
        %3137 = vmatmul.mubr.f32.gmra.mxu0 %v531
        %v3138 = vpop.f32.mrf.mxu0
        %v3139 = vadd.f32 0.0, %v3138
        %v3140 = vpop.f32.mrf.mxu0
        %v3141 = vadd.f32 0.0, %v3140
        %3142 = vmatprep.mubr.f32.mxu0 0.0
        %3143 = vmatmul.mubr.f32.gmra.mxu0 %v534
        %v3144 = vpop.f32.mrf.mxu0
        %v3145 = vadd.f32 0.0, %v3144
        %v3146 = vpop.f32.mrf.mxu0
        %v3147 = vadd.f32 0.0, %v3146
        %3148 = vmatprep.mubr.f32.mxu0 0.0
        %3149 = vmatmul.mubr.f32.gmra.mxu0 %v537
        %v3150 = vpop.f32.mrf.mxu0
        %v3151 = vadd.f32 0.0, %v3150
        %v3152 = vpop.f32.mrf.mxu0
        %v3153 = vadd.f32 0.0, %v3152
        %3154 = vmatprep.mubr.f32.mxu0 0.0
        %3155 = vmatmul.mubr.f32.gmra.mxu0 %v540
        %v3156 = vpop.f32.mrf.mxu0
        %v3157 = vadd.f32 0.0, %v3156
        %v3158 = vpop.f32.mrf.mxu0
        %v3159 = vadd.f32 0.0, %v3158
        %3160 = vmatprep.mubr.f32.mxu0 0.0
        %3161 = vmatmul.mubr.f32.gmra.mxu0 %v543
        %v3162 = vpop.f32.mrf.mxu0
        %v3163 = vadd.f32 0.0, %v3162
        %v3164 = vpop.f32.mrf.mxu0
        %v3165 = vadd.f32 0.0, %v3164
        %3166 = vmatprep.mubr.f32.mxu0 0.0
        %3167 = vmatmul.mubr.f32.gmra.mxu0 %v546
        %v3168 = vpop.f32.mrf.mxu0
        %v3169 = vadd.f32 0.0, %v3168
        %v3170 = vpop.f32.mrf.mxu0
        %v3171 = vadd.f32 0.0, %v3170
        %3172 = vmatprep.mubr.f32.mxu0 0.0
        %3173 = vmatmul.mubr.f32.gmra.mxu0 %v549
        %v3174 = vpop.f32.mrf.mxu0
        %v3175 = vadd.f32 0.0, %v3174
        %v3176 = vpop.f32.mrf.mxu0
        %v3177 = vadd.f32 0.0, %v3176
        %3178 = vmatprep.mubr.f32.mxu0 0.0
        %3179 = vmatmul.mubr.f32.gmra.mxu0 %v552
        %v3180 = vpop.f32.mrf.mxu0
        %v3181 = vadd.f32 0.0, %v3180
        %v3182 = vpop.f32.mrf.mxu0
        %v3183 = vadd.f32 0.0, %v3182
        %3184 = vmatprep.mubr.f32.mxu0 0.0
        %3185 = vmatmul.mubr.f32.gmra.mxu0 %v555
        %v3186 = vpop.f32.mrf.mxu0
        %v3187 = vadd.f32 0.0, %v3186
        %v3188 = vpop.f32.mrf.mxu0
        %v3189 = vadd.f32 0.0, %v3188
        %3190 = vmatprep.mubr.f32.mxu0 0.0
        %3191 = vmatmul.mubr.f32.gmra.mxu0 %v558
        %v3192 = vpop.f32.mrf.mxu0
        %v3193 = vadd.f32 0.0, %v3192
        %v3194 = vpop.f32.mrf.mxu0
        %v3195 = vadd.f32 0.0, %v3194
        %3196 = vmatprep.mubr.f32.mxu0 0.0
        %3197 = vmatmul.mubr.f32.gmra.mxu0 %v561
        %v3198 = vpop.f32.mrf.mxu0
        %v3199 = vadd.f32 0.0, %v3198
        %v3200 = vpop.f32.mrf.mxu0
        %v3201 = vadd.f32 0.0, %v3200
        %3202 = vmatprep.mubr.f32.mxu0 0.0
        %3203 = vmatmul.mubr.f32.gmra.mxu0 %v564
        %v3204 = vpop.f32.mrf.mxu0
        %v3205 = vadd.f32 0.0, %v3204
        %v3206 = vpop.f32.mrf.mxu0
        %v3207 = vadd.f32 0.0, %v3206
        %3208 = vmatprep.mubr.f32.mxu0 0.0
        %3209 = vmatmul.mubr.f32.gmra.mxu0 %v567
        %v3210 = vpop.f32.mrf.mxu0
        %v3211 = vadd.f32 0.0, %v3210
        %v3212 = vpop.f32.mrf.mxu0
        %v3213 = vadd.f32 0.0, %v3212
        %3214 = vmatprep.mubr.f32.mxu0 0.0
        %3215 = vmatmul.mubr.f32.gmra.mxu0 %v570
        %v3216 = vpop.f32.mrf.mxu0
        %v3217 = vadd.f32 0.0, %v3216
        %v3218 = vpop.f32.mrf.mxu0
        %v3219 = vadd.f32 0.0, %v3218
        %3220 = vmatprep.mubr.f32.mxu0 0.0
        %3221 = vmatmul.mubr.f32.gmra.mxu0 %v573
        %v3222 = vpop.f32.mrf.mxu0
        %v3223 = vadd.f32 0.0, %v3222
        %v3224 = vpop.f32.mrf.mxu0
        %v3225 = vadd.f32 0.0, %v3224
        %3226 = vmatprep.mubr.f32.mxu0 0.0
        %3227 = vmatmul.mubr.f32.gmra.mxu0 %v576
        %v3228 = vpop.f32.mrf.mxu0
        %v3229 = vadd.f32 0.0, %v3228
        %v3230 = vpop.f32.mrf.mxu0
        %v3231 = vadd.f32 0.0, %v3230
        %3232 = vmatprep.mubr.f32.mxu0 0.0
        %3233 = vmatmul.mubr.f32.gmra.mxu0 %v579
        %v3234 = vpop.f32.mrf.mxu0
        %v3235 = vadd.f32 0.0, %v3234
        %v3236 = vpop.f32.mrf.mxu0
        %v3237 = vadd.f32 0.0, %v3236
        %3238 = vmatprep.mubr.f32.mxu0 0.0
        %3239 = vmatmul.mubr.f32.gmra.mxu0 %v582
        %v3240 = vpop.f32.mrf.mxu0
        %v3241 = vadd.f32 0.0, %v3240
        %v3242 = vpop.f32.mrf.mxu0
        %v3243 = vadd.f32 0.0, %v3242
        %3244 = vmatprep.mubr.f32.mxu0 0.0
        %3245 = vmatmul.mubr.f32.gmra.mxu0 %v585
        %v3246 = vpop.f32.mrf.mxu0
        %v3247 = vadd.f32 0.0, %v3246
        %v3248 = vpop.f32.mrf.mxu0
        %v3249 = vadd.f32 0.0, %v3248
        %3250 = vmatprep.mubr.f32.mxu0 0.0
        %3251 = vmatmul.mubr.f32.gmra.mxu0 %v588
        %v3252 = vpop.f32.mrf.mxu0
        %v3253 = vadd.f32 0.0, %v3252
        %v3254 = vpop.f32.mrf.mxu0
        %v3255 = vadd.f32 0.0, %v3254
        %3256 = vmatprep.mubr.f32.mxu0 0.0
        %3257 = vmatmul.mubr.f32.gmra.mxu0 %v1544
        %v3258 = vpop.f32.mrf.mxu0
        %v3259 = vadd.f32 0.0, %v3258
        %v3260 = vpop.f32.mrf.mxu0
        %v3261 = vadd.f32 0.0, %v3260
        %3262 = vmatprep.mubr.f32.mxu0 0.0
        %3263 = vmatmul.mubr.f32.gmra.mxu0 %v2143
        %v3264 = vpop.f32.mrf.mxu0
        %v3265 = vadd.f32 0.0, %v3264
        %v3266 = vpop.f32.mrf.mxu0
        %v3267 = vadd.f32 0.0, %v3266
        %3268 = vmatprep.mubr.f32.mxu0 0.0
        %3269 = vmatmul.mubr.f32.gmra.mxu0 %v2742
        %v3270 = vpop.f32.mrf.mxu0
        %v3271 = vadd.f32 0.0, %v3270
        %v3272 = vpop.f32.mrf.mxu0
        %v3273 = vadd.f32 0.0, %v3272
        %3274 = vdwg.mxu0
        %v3275 = vadd.f32 %v2676, %v3109
        %v3276 = vadd.f32 %v2677, %v3111
        %v3277 = vadd.f32 %v2678, %v3115
        %v3278 = vadd.f32 %v2679, %v3117
        %v3279 = vadd.f32 %v2680, %v3121
        %v3280 = vadd.f32 %v2681, %v3123
        %v3281 = vadd.f32 %v2682, %v3127
        %v3282 = vadd.f32 %v2683, %v3129
        %v3283 = vadd.f32 %v2684, %v3133
        %v3284 = vadd.f32 %v2685, %v3135
        %v3285 = vadd.f32 %v2686, %v3139
        %v3286 = vadd.f32 %v2687, %v3141
        %v3287 = vadd.f32 %v2688, %v3145
        %v3288 = vadd.f32 %v2689, %v3147
        %v3289 = vadd.f32 %v2690, %v3151
        %v3290 = vadd.f32 %v2691, %v3153
        %v3291 = vadd.f32 %v2692, %v3157
        %v3292 = vadd.f32 %v2693, %v3159
        %v3293 = vadd.f32 %v2694, %v3163
        %v3294 = vadd.f32 %v2695, %v3165
        %v3295 = vadd.f32 %v2696, %v3169
        %v3296 = vadd.f32 %v2697, %v3171
        %v3297 = vadd.f32 %v2698, %v3175
        %v3298 = vadd.f32 %v2699, %v3177
        %v3299 = vadd.f32 %v2700, %v3181
        %v3300 = vadd.f32 %v2701, %v3183
        %v3301 = vadd.f32 %v2702, %v3187
        %v3302 = vadd.f32 %v2703, %v3189
        %v3303 = vadd.f32 %v2704, %v3193
        %v3304 = vadd.f32 %v2705, %v3195
        %v3305 = vadd.f32 %v2706, %v3199
        %v3306 = vadd.f32 %v2707, %v3201
        %v3307 = vadd.f32 %v2708, %v3205
        %v3308 = vadd.f32 %v2709, %v3207
        %v3309 = vadd.f32 %v2710, %v3211
        %v3310 = vadd.f32 %v2711, %v3213
        %v3311 = vadd.f32 %v2712, %v3217
        %v3312 = vadd.f32 %v2713, %v3219
        %v3313 = vadd.f32 %v2714, %v3223
        %v3314 = vadd.f32 %v2715, %v3225
        %v3315 = vadd.f32 %v2716, %v3229
        %v3316 = vadd.f32 %v2717, %v3231
        %v3317 = vadd.f32 %v2718, %v3235
        %v3318 = vadd.f32 %v2719, %v3237
        %v3319 = vadd.f32 %v2720, %v3241
        %v3320 = vadd.f32 %v2721, %v3243
        %v3321 = vadd.f32 %v2722, %v3247
        %v3322 = vadd.f32 %v2723, %v3249
        %v3323 = vadd.f32 %v2724, %v3253
        %v3324 = vadd.f32 %v2725, %v3255
        %v3325 = vadd.f32 %v2726, %v3259
        %v3326 = vadd.f32 %v2727, %v3261
        %v3327 = vadd.f32 %v2728, %v3265
        %v3328 = vadd.f32 %v2729, %v3267
        %v3329 = vadd.f32 %v2730, %v3271
        %v3330 = vadd.f32 %v2731, %v3273
        %v3331 = vmax.f32 %v2977, %v3275
        %v3332 = vmax.f32 %v2978, %v3276
        %v3333 = vmax.f32 %v2979, %v3277
        %v3334 = vmax.f32 %v2980, %v3278
        %v3335 = vmax.f32 %v2981, %v3279
        %v3336 = vmax.f32 %v2982, %v3280
        %v3337 = vmax.f32 %v2983, %v3281
        %v3338 = vmax.f32 %v2984, %v3282
        %v3339 = vmax.f32 %v2985, %v3283
        %v3340 = vmax.f32 %v2986, %v3284
        %v3341 = vmax.f32 %v2987, %v3285
        %v3342 = vmax.f32 %v2988, %v3286
        %v3343 = vmax.f32 %v2989, %v3287
        %v3344 = vmax.f32 %v2990, %v3288
        %v3345 = vmax.f32 %v2991, %v3289
        %v3346 = vmax.f32 %v2992, %v3290
        %v3347 = vmax.f32 %v2993, %v3291
        %v3348 = vmax.f32 %v2994, %v3292
        %v3349 = vmax.f32 %v2995, %v3293
        %v3350 = vmax.f32 %v2996, %v3294
        %v3351 = vmax.f32 %v2997, %v3295
        %v3352 = vmax.f32 %v2998, %v3296
        %v3353 = vmax.f32 %v2999, %v3297
        %v3354 = vmax.f32 %v3000, %v3298
        %v3355 = vmax.f32 %v3001, %v3299
        %v3356 = vmax.f32 %v3002, %v3300
        %v3357 = vmax.f32 %v3003, %v3301
        %v3358 = vmax.f32 %v3004, %v3302
        %v3359 = vmax.f32 %v3005, %v3303
        %v3360 = vmax.f32 %v3006, %v3304
        %v3361 = vmax.f32 %v3007, %v3305
        %v3362 = vmax.f32 %v3008, %v3306
        %v3363 = vmax.f32 %v3009, %v3307
        %v3364 = vmax.f32 %v3010, %v3308
        %v3365 = vmax.f32 %v3011, %v3309
        %v3366 = vmax.f32 %v3012, %v3310
        %v3367 = vmax.f32 %v3013, %v3311
        %v3368 = vmax.f32 %v3014, %v3312
        %v3369 = vmax.f32 %v3015, %v3313
        %v3370 = vmax.f32 %v3016, %v3314
        %v3371 = vmax.f32 %v3017, %v3315
        %v3372 = vmax.f32 %v3018, %v3316
        %v3373 = vmax.f32 %v3019, %v3317
        %v3374 = vmax.f32 %v3020, %v3318
        %v3375 = vmax.f32 %v3021, %v3319
        %v3376 = vmax.f32 %v3022, %v3320
        %v3377 = vmax.f32 %v3023, %v3321
        %v3378 = vmax.f32 %v3024, %v3322
        %v3379 = vmax.f32 %v3025, %v3323
        %v3380 = vmax.f32 %v3026, %v3324
        %v3381 = vmax.f32 %v3027, %v3325
        %v3382 = vmax.f32 %v3028, %v3326
        %v3383 = vmax.f32 %v3029, %v3327
        %v3384 = vmax.f32 %v3030, %v3328
        %v3385 = vmax.f32 %v3031, %v3329
        %v3386 = vmax.f32 %v3032, %v3330
        %v3387 = vmax.f32 %v3331, %v3333
        %v3388 = vmax.f32 %v3332, %v3334
        %v3389 = vmax.f32 %v3335, %v3337
        %v3390 = vmax.f32 %v3336, %v3338
        %v3391 = vmax.f32 %v3339, %v3341
        %v3392 = vmax.f32 %v3340, %v3342
        %v3393 = vmax.f32 %v3343, %v3345
        %v3394 = vmax.f32 %v3344, %v3346
        %v3395 = vmax.f32 %v3347, %v3349
        %v3396 = vmax.f32 %v3348, %v3350
        %v3397 = vmax.f32 %v3351, %v3353
        %v3398 = vmax.f32 %v3352, %v3354
        %v3399 = vmax.f32 %v3355, %v3357
        %v3400 = vmax.f32 %v3356, %v3358
        %v3401 = vmax.f32 %v3359, %v3361
        %v3402 = vmax.f32 %v3360, %v3362
        %v3403 = vmax.f32 %v3363, %v3365
        %v3404 = vmax.f32 %v3364, %v3366
        %v3405 = vmax.f32 %v3367, %v3369
        %v3406 = vmax.f32 %v3368, %v3370
        %v3407 = vmax.f32 %v3371, %v3373
        %v3408 = vmax.f32 %v3372, %v3374
        %v3409 = vmax.f32 %v3375, %v3377
        %v3410 = vmax.f32 %v3376, %v3378
        %v3411 = vmax.f32 %v3379, %v3381
        %v3412 = vmax.f32 %v3380, %v3382
        %v3413 = vmax.f32 %v3383, %v3385
        %v3414 = vmax.f32 %v3384, %v3386
        %v3415 = vld [vmem:[%s3] sm:$0x3]
        %v3417 = vlaneseq
        %v3418 = vshrl.u32 %v3417, 7
        %v3419 = vsub.s32 0, %v3418
        %v3420 = vrot.slane %v3415, %v3419
        %v3421 = vlaneseq
        %v3422 = vshrl.u32 %v3421, 7
        %v3423 = vsub.s32 1, %v3422
        %v3424 = vrot.slane %v3415, %v3423
        %v3427 = vadd.f32 %v3387, %v3420
        %v3428 = vadd.f32 %v3388, %v3424
        %v3429 = vadd.f32 %v3389, %v3420
        %v3430 = vadd.f32 %v3390, %v3424
        %v3431 = vadd.f32 %v3391, %v3420
        %v3432 = vadd.f32 %v3392, %v3424
        %v3433 = vadd.f32 %v3393, %v3420
        %v3434 = vadd.f32 %v3394, %v3424
        %v3435 = vadd.f32 %v3395, %v3420
        %v3436 = vadd.f32 %v3396, %v3424
        %v3437 = vadd.f32 %v3397, %v3420
        %v3438 = vadd.f32 %v3398, %v3424
        %v3439 = vadd.f32 %v3399, %v3420
        %v3440 = vadd.f32 %v3400, %v3424
        %v3441 = vadd.f32 %v3401, %v3420
        %v3442 = vadd.f32 %v3402, %v3424
        %v3443 = vadd.f32 %v3403, %v3420
        %v3444 = vadd.f32 %v3404, %v3424
        %v3445 = vadd.f32 %v3405, %v3420
        %v3446 = vadd.f32 %v3406, %v3424
        %v3447 = vadd.f32 %v3407, %v3420
        %v3448 = vadd.f32 %v3408, %v3424
        %v3449 = vadd.f32 %v3409, %v3420
        %v3450 = vadd.f32 %v3410, %v3424
        %v3451 = vadd.f32 %v3411, %v3420
        %v3452 = vadd.f32 %v3412, %v3424
        %v3453 = vadd.f32 %v3413, %v3420
        %v3454 = vadd.f32 %v3414, %v3424
        %v3455 = vmax.f32 %v3427, 0.0
        %v3456 = vmax.f32 %v3428, 0.0
        %v3457 = vmax.f32 %v3429, 0.0
        %v3458 = vmax.f32 %v3430, 0.0
        %v3459 = vmax.f32 %v3431, 0.0
        %v3460 = vmax.f32 %v3432, 0.0
        %v3461 = vmax.f32 %v3433, 0.0
        %v3462 = vmax.f32 %v3434, 0.0
        %v3463 = vmax.f32 %v3435, 0.0
        %v3464 = vmax.f32 %v3436, 0.0
        %v3465 = vmax.f32 %v3437, 0.0
        %v3466 = vmax.f32 %v3438, 0.0
        %v3467 = vmax.f32 %v3439, 0.0
        %v3468 = vmax.f32 %v3440, 0.0
        %v3469 = vmax.f32 %v3441, 0.0
        %v3470 = vmax.f32 %v3442, 0.0
        %v3471 = vmax.f32 %v3443, 0.0
        %v3472 = vmax.f32 %v3444, 0.0
        %v3473 = vmax.f32 %v3445, 0.0
        %v3474 = vmax.f32 %v3446, 0.0
        %v3475 = vmax.f32 %v3447, 0.0
        %v3476 = vmax.f32 %v3448, 0.0
        %v3477 = vmax.f32 %v3449, 0.0
        %v3478 = vmax.f32 %v3450, 0.0
        %v3479 = vmax.f32 %v3451, 0.0
        %v3480 = vmax.f32 %v3452, 0.0
        %v3481 = vmax.f32 %v3453, 0.0
        %v3482 = vmax.f32 %v3454, 0.0
        %v3483 = vld [vmem:[%s4] sm:$0xff]
        %v3484 = vld [vmem:[%s4 + $0x8] sm:$0xff]
        %v3485 = vld [vmem:[%s4 + $0x10] sm:$0xff]
        %v3486 = vld [vmem:[%s4 + $0x18] sm:$0xff]
        %v3487 = vld [vmem:[%s4 + $0x20] sm:$0xff]
        %v3488 = vld [vmem:[%s4 + $0x28] sm:$0xff]
        %v3489 = vld [vmem:[%s4 + $0x30] sm:$0xff]
        %v3490 = vld [vmem:[%s4 + $0x38] sm:$0xff]
        %v3491 = vld [vmem:[%s4 + $0x40] sm:$0xff]
        %v3492 = vld [vmem:[%s4 + $0x48] sm:$0xff]
        %v3493 = vld [vmem:[%s4 + $0x50] sm:$0xff]
        %v3494 = vld [vmem:[%s4 + $0x58] sm:$0xff]
        %v3495 = vld [vmem:[%s4 + $0x60] sm:$0xff]
        %v3496 = vld [vmem:[%s4 + $0x68] sm:$0xff]
        %v3497 = vld [vmem:[%s4 + $0x70] sm:$0xff]
        %v3498 = vld [vmem:[%s4 + $0x78] sm:$0xff]
        %v3499 = vld [vmem:[%s4 + $0x80] sm:$0xff]
        %v3500 = vld [vmem:[%s4 + $0x88] sm:$0xf]
        %v3501 = vld [vmem:[#allocation8] sm:$0xff]
        %v3502 = vld [vmem:[#allocation8 + $0x8] sm:$0xff]
        %v3503 = vld [vmem:[#allocation8 + $0x10] sm:$0xff]
        %v3504 = vld [vmem:[#allocation8 + $0x18] sm:$0xff]
        %v3505 = vld [vmem:[#allocation8 + $0x20] sm:$0xff]
        %v3506 = vld [vmem:[#allocation8 + $0x28] sm:$0xff]
        %v3507 = vld [vmem:[#allocation8 + $0x30] sm:$0xff]
        %v3508 = vld [vmem:[#allocation8 + $0x38] sm:$0xff]
        %v3509 = vld [vmem:[#allocation8 + $0x40] sm:$0xff]
        %v3510 = vld [vmem:[#allocation8 + $0x48] sm:$0xff]
        %v3511 = vld [vmem:[#allocation8 + $0x50] sm:$0xff]
        %v3512 = vld [vmem:[#allocation8 + $0x58] sm:$0xff]
        %v3513 = vld [vmem:[#allocation8 + $0x60] sm:$0xff]
        %v3514 = vld [vmem:[#allocation8 + $0x68] sm:$0xff]
        %v3515 = vld [vmem:[#allocation8 + $0x70] sm:$0xff]
        %v3516 = vld [vmem:[#allocation8 + $0x78] sm:$0xff]
        %v3517 = vld [vmem:[#allocation8 + $0x80] sm:$0xff]
        %v3518 = vld [vmem:[#allocation8 + $0x88] sm:$0xf]
        %s3519 = scalar_lea.vmem %s4, 144
        %v3520 = vld [vmem:[%s3519] sm:$0xff]
        %v3521 = vld [vmem:[%s3519 + $0x8] sm:$0xff]
        %v3522 = vld [vmem:[%s3519 + $0x10] sm:$0xff]
        %v3523 = vld [vmem:[%s3519 + $0x18] sm:$0xff]
        %v3524 = vld [vmem:[%s3519 + $0x20] sm:$0xff]
        %v3525 = vld [vmem:[%s3519 + $0x28] sm:$0xff]
        %v3526 = vld [vmem:[%s3519 + $0x30] sm:$0xff]
        %v3527 = vld [vmem:[%s3519 + $0x38] sm:$0xff]
        %v3528 = vld [vmem:[%s3519 + $0x40] sm:$0xff]
        %v3529 = vld [vmem:[%s3519 + $0x48] sm:$0xff]
        %v3530 = vld [vmem:[%s3519 + $0x50] sm:$0xff]
        %v3531 = vld [vmem:[%s3519 + $0x58] sm:$0xff]
        %v3532 = vld [vmem:[%s3519 + $0x60] sm:$0xff]
        %v3533 = vld [vmem:[%s3519 + $0x68] sm:$0xff]
        %v3534 = vld [vmem:[%s3519 + $0x70] sm:$0xff]
        %v3535 = vld [vmem:[%s3519 + $0x78] sm:$0xff]
        %v3536 = vld [vmem:[%s3519 + $0x80] sm:$0xff]
        %v3537 = vld [vmem:[%s3519 + $0x88] sm:$0xf]
        %vm3538 = vcmask 97280
        %v3540 = vsel %vm3538, %v3458, 0
        %v3543 = vsel %vm3538, %v3460, 0
        %v3546 = vsel %vm3538, %v3462, 0
        %v3549 = vsel %vm3538, %v3464, 0
        %v3552 = vsel %vm3538, %v3466, 0
        %v3555 = vsel %vm3538, %v3468, 0
        %v3558 = vsel %vm3538, %v3470, 0
        %v3561 = vsel %vm3538, %v3472, 0
        %v3564 = vsel %vm3538, %v3474, 0
        %v3567 = vsel %vm3538, %v3476, 0
        %vm3569 = vcmask 1043456
        %v3571 = vsel %vm3569, %v3537, 0
        %3573 = vmatprep.subr.mxu0 0.0
        %3574 = vmatpush1.msra.mxu0 %v3535
        %3575 = vmatprep.subr.mxu0 0.0
        %3576 = vmatpush1.msra.mxu0 %v3534
        %3577 = vmatprep.subr.mxu0 0.0
        %3578 = vmatpush1.msra.mxu0 %v3533
        %3579 = vmatprep.subr.mxu0 0.0
        %3580 = vmatpush1.msra.mxu0 %v3532
        %3581 = vmatprep.subr.mxu0 0.0
        %3582 = vmatpush1.msra.mxu0 %v3531
        %3583 = vmatprep.subr.mxu0 0.0
        %3584 = vmatpush1.msra.mxu0 %v3530
        %3585 = vmatprep.subr.mxu0 0.0
        %3586 = vmatpush1.msra.mxu0 %v3529
        %3587 = vmatprep.subr.mxu0 0.0
        %3588 = vmatpush1.msra.mxu0 %v3528
        %3589 = vmatprep.subr.mxu0 0.0
        %3590 = vmatpush1.msra.mxu0 %v3527
        %3591 = vmatprep.subr.mxu0 0.0
        %3592 = vmatpush1.msra.mxu0 %v3526
        %3593 = vmatprep.subr.mxu0 0.0
        %3594 = vmatpush1.msra.mxu0 %v3525
        %3595 = vmatprep.subr.mxu0 0.0
        %3596 = vmatpush1.msra.mxu0 %v3524
        %3597 = vmatprep.subr.mxu0 0.0
        %3598 = vmatpush1.msra.mxu0 %v3523
        %3599 = vmatprep.subr.mxu0 0.0
        %3600 = vmatpush1.msra.mxu0 %v3522
        %3601 = vmatprep.subr.mxu0 0.0
        %3602 = vmatpush1.msra.mxu0 %v3521
        %3603 = vmatprep.subr.mxu0 0.0
        %3604 = vmatpush1.msra.mxu0 %v3520
        %3605 = vmatprep.subr.mxu0 0.0
        %3606 = vmatpush2.msra.mxu0 0.0
        %3607 = vmatprep.subr.mxu0 0.0
        %3608 = vmatpush2.msra.mxu0 0.0
        %3609 = vmatprep.subr.mxu0 0.0
        %3610 = vmatpush2.msra.mxu0 0.0
        %3611 = vmatprep.subr.mxu0 0.0
        %3612 = vmatpush2.msra.mxu0 0.0
        %3613 = vmatprep.subr.mxu0 0.0
        %3614 = vmatpush2.msra.mxu0 0.0
        %3615 = vmatprep.subr.mxu0 0.0
        %3616 = vmatpush2.msra.mxu0 0.0
        %3617 = vmatprep.subr.mxu0 0.0
        %3618 = vmatpush2.msra.mxu0 0.0
        %3619 = vmatprep.subr.mxu0 0.0
        %3620 = vmatpush2.msra.mxu0 0.0
        %3621 = vmatprep.subr.mxu0 0.0
        %3622 = vmatpush2.msra.mxu0 0.0
        %3623 = vmatprep.subr.mxu0 0.0
        %3624 = vmatpush2.msra.mxu0 0.0
        %3625 = vmatprep.subr.mxu0 0.0
        %3626 = vmatpush2.msra.mxu0 0.0
        %3627 = vmatprep.subr.mxu0 0.0
        %3628 = vmatpush2.msra.mxu0 0.0
        %3629 = vmatprep.subr.mxu0 0.0
        %3630 = vmatpush2.msra.mxu0 0.0
        %3631 = vmatprep.subr.mxu0 0.0
        %3632 = vmatpush2.msra.mxu0 0.0
        %3633 = vmatprep.subr.mxu0 0.0
        %3634 = vmatpush2.msra.mxu0 %v3571
        %3635 = vmatprep.subr.mxu0 0.0
        %3636 = vmatpush2.msra.mxu0 %v3536
        %3637 = vmatprep.mubr.f32.mxu0 %v3540
        %3638 = vmatmul.mubr.f32.gmra.mxu0 %v3457
        %v3639 = vpop.f32.mrf.mxu0
        %v3640 = vadd.f32 0.0, %v3639
        %v3641 = vpop.f32.mrf.mxu0
        %3642 = vmatprep.mubr.f32.mxu0 %v3543
        %3643 = vmatmul.mubr.f32.gmra.mxu0 %v3459
        %v3644 = vpop.f32.mrf.mxu0
        %v3645 = vadd.f32 0.0, %v3644
        %v3646 = vpop.f32.mrf.mxu0
        %3647 = vmatprep.mubr.f32.mxu0 %v3546
        %3648 = vmatmul.mubr.f32.gmra.mxu0 %v3461
        %v3649 = vpop.f32.mrf.mxu0
        %v3650 = vadd.f32 0.0, %v3649
        %v3651 = vpop.f32.mrf.mxu0
        %3652 = vmatprep.mubr.f32.mxu0 %v3549
        %3653 = vmatmul.mubr.f32.gmra.mxu0 %v3463
        %v3654 = vpop.f32.mrf.mxu0
        %v3655 = vadd.f32 0.0, %v3654
        %v3656 = vpop.f32.mrf.mxu0
        %3657 = vmatprep.mubr.f32.mxu0 %v3552
        %3658 = vmatmul.mubr.f32.gmra.mxu0 %v3465
        %v3659 = vpop.f32.mrf.mxu0
        %v3660 = vadd.f32 0.0, %v3659
        %v3661 = vpop.f32.mrf.mxu0
        %3662 = vmatprep.mubr.f32.mxu0 %v3555
        %3663 = vmatmul.mubr.f32.gmra.mxu0 %v3467
        %v3664 = vpop.f32.mrf.mxu0
        %v3665 = vadd.f32 0.0, %v3664
        %v3666 = vpop.f32.mrf.mxu0
        %3667 = vmatprep.mubr.f32.mxu0 %v3558
        %3668 = vmatmul.mubr.f32.gmra.mxu0 %v3469
        %v3669 = vpop.f32.mrf.mxu0
        %v3670 = vadd.f32 0.0, %v3669
        %v3671 = vpop.f32.mrf.mxu0
        %3672 = vmatprep.mubr.f32.mxu0 %v3561
        %3673 = vmatmul.mubr.f32.gmra.mxu0 %v3471
        %v3674 = vpop.f32.mrf.mxu0
        %v3675 = vadd.f32 0.0, %v3674
        %v3676 = vpop.f32.mrf.mxu0
        %3677 = vmatprep.mubr.f32.mxu0 %v3564
        %3678 = vmatmul.mubr.f32.gmra.mxu0 %v3473
        %v3679 = vpop.f32.mrf.mxu0
        %v3680 = vadd.f32 0.0, %v3679
        %v3681 = vpop.f32.mrf.mxu0
        %3682 = vmatprep.mubr.f32.mxu0 %v3567
        %3683 = vmatmul.mubr.f32.gmra.mxu0 %v3475
        %v3684 = vpop.f32.mrf.mxu0
        %v3685 = vadd.f32 0.0, %v3684
        %v3686 = vpop.f32.mrf.mxu0
        %3687 = vdwg.mxu0
        %v3689 = vsel %vm3538, %v3456, 0
        %v3692 = vsel %vm3569, %v3500, 0
        %3694 = vmatprep.subr.mxu0 0.0
        %3695 = vmatpush1.msra.mxu0 %v3498
        %3696 = vmatprep.subr.mxu0 0.0
        %3697 = vmatpush1.msra.mxu0 %v3497
        %3698 = vmatprep.subr.mxu0 0.0
        %3699 = vmatpush1.msra.mxu0 %v3496
        %3700 = vmatprep.subr.mxu0 0.0
        %3701 = vmatpush1.msra.mxu0 %v3495
        %3702 = vmatprep.subr.mxu0 0.0
        %3703 = vmatpush1.msra.mxu0 %v3494
        %3704 = vmatprep.subr.mxu0 0.0
        %3705 = vmatpush1.msra.mxu0 %v3493
        %3706 = vmatprep.subr.mxu0 0.0
        %3707 = vmatpush1.msra.mxu0 %v3492
        %3708 = vmatprep.subr.mxu0 0.0
        %3709 = vmatpush1.msra.mxu0 %v3491
        %3710 = vmatprep.subr.mxu0 0.0
        %3711 = vmatpush1.msra.mxu0 %v3490
        %3712 = vmatprep.subr.mxu0 0.0
        %3713 = vmatpush1.msra.mxu0 %v3489
        %3714 = vmatprep.subr.mxu0 0.0
        %3715 = vmatpush1.msra.mxu0 %v3488
        %3716 = vmatprep.subr.mxu0 0.0
        %3717 = vmatpush1.msra.mxu0 %v3487
        %3718 = vmatprep.subr.mxu0 0.0
        %3719 = vmatpush1.msra.mxu0 %v3486
        %3720 = vmatprep.subr.mxu0 0.0
        %3721 = vmatpush1.msra.mxu0 %v3485
        %3722 = vmatprep.subr.mxu0 0.0
        %3723 = vmatpush1.msra.mxu0 %v3484
        %3724 = vmatprep.subr.mxu0 0.0
        %3725 = vmatpush1.msra.mxu0 %v3483
        %3726 = vmatprep.subr.mxu0 0.0
        %3727 = vmatpush2.msra.mxu0 0.0
        %3728 = vmatprep.subr.mxu0 0.0
        %3729 = vmatpush2.msra.mxu0 0.0
        %3730 = vmatprep.subr.mxu0 0.0
        %3731 = vmatpush2.msra.mxu0 0.0
        %3732 = vmatprep.subr.mxu0 0.0
        %3733 = vmatpush2.msra.mxu0 0.0
        %3734 = vmatprep.subr.mxu0 0.0
        %3735 = vmatpush2.msra.mxu0 0.0
        %3736 = vmatprep.subr.mxu0 0.0
        %3737 = vmatpush2.msra.mxu0 0.0
        %3738 = vmatprep.subr.mxu0 0.0
        %3739 = vmatpush2.msra.mxu0 0.0
        %3740 = vmatprep.subr.mxu0 0.0
        %3741 = vmatpush2.msra.mxu0 0.0
        %3742 = vmatprep.subr.mxu0 0.0
        %3743 = vmatpush2.msra.mxu0 0.0
        %3744 = vmatprep.subr.mxu0 0.0
        %3745 = vmatpush2.msra.mxu0 0.0
        %3746 = vmatprep.subr.mxu0 0.0
        %3747 = vmatpush2.msra.mxu0 0.0
        %3748 = vmatprep.subr.mxu0 0.0
        %3749 = vmatpush2.msra.mxu0 0.0
        %3750 = vmatprep.subr.mxu0 0.0
        %3751 = vmatpush2.msra.mxu0 0.0
        %3752 = vmatprep.subr.mxu0 0.0
        %3753 = vmatpush2.msra.mxu0 0.0
        %3754 = vmatprep.subr.mxu0 0.0
        %3755 = vmatpush2.msra.mxu0 %v3692
        %3756 = vmatprep.subr.mxu0 0.0
        %3757 = vmatpush2.msra.mxu0 %v3499
        %3758 = vmatprep.mubr.f32.mxu0 %v3689
        %3759 = vmatmul.mubr.f32.gmra.mxu0 %v3455
        %v3760 = vpop.f32.mrf.mxu0
        %v3761 = vadd.f32 %v3640, %v3760
        %v3762 = vpop.f32.mrf.mxu0
        %3763 = vmatprep.mubr.f32.mxu0 %v3540
        %3764 = vmatmul.mubr.f32.gmra.mxu0 %v3457
        %v3765 = vpop.f32.mrf.mxu0
        %v3766 = vadd.f32 %v3645, %v3765
        %v3767 = vpop.f32.mrf.mxu0
        %3768 = vmatprep.mubr.f32.mxu0 %v3543
        %3769 = vmatmul.mubr.f32.gmra.mxu0 %v3459
        %v3770 = vpop.f32.mrf.mxu0
        %v3771 = vadd.f32 %v3650, %v3770
        %v3772 = vpop.f32.mrf.mxu0
        %3773 = vmatprep.mubr.f32.mxu0 %v3546
        %3774 = vmatmul.mubr.f32.gmra.mxu0 %v3461
        %v3775 = vpop.f32.mrf.mxu0
        %v3776 = vadd.f32 %v3655, %v3775
        %v3777 = vpop.f32.mrf.mxu0
        %3778 = vmatprep.mubr.f32.mxu0 %v3549
        %3779 = vmatmul.mubr.f32.gmra.mxu0 %v3463
        %v3780 = vpop.f32.mrf.mxu0
        %v3781 = vadd.f32 %v3660, %v3780
        %v3782 = vpop.f32.mrf.mxu0
        %3783 = vmatprep.mubr.f32.mxu0 %v3552
        %3784 = vmatmul.mubr.f32.gmra.mxu0 %v3465
        %v3785 = vpop.f32.mrf.mxu0
        %v3786 = vadd.f32 %v3665, %v3785
        %v3787 = vpop.f32.mrf.mxu0
        %3788 = vmatprep.mubr.f32.mxu0 %v3555
        %3789 = vmatmul.mubr.f32.gmra.mxu0 %v3467
        %v3790 = vpop.f32.mrf.mxu0
        %v3791 = vadd.f32 %v3670, %v3790
        %v3792 = vpop.f32.mrf.mxu0
        %3793 = vmatprep.mubr.f32.mxu0 %v3558
        %3794 = vmatmul.mubr.f32.gmra.mxu0 %v3469
        %v3795 = vpop.f32.mrf.mxu0
        %v3796 = vadd.f32 %v3675, %v3795
        %v3797 = vpop.f32.mrf.mxu0
        %3798 = vmatprep.mubr.f32.mxu0 %v3561
        %3799 = vmatmul.mubr.f32.gmra.mxu0 %v3471
        %v3800 = vpop.f32.mrf.mxu0
        %v3801 = vadd.f32 %v3680, %v3800
        %v3802 = vpop.f32.mrf.mxu0
        %3803 = vmatprep.mubr.f32.mxu0 %v3564
        %3804 = vmatmul.mubr.f32.gmra.mxu0 %v3473
        %v3805 = vpop.f32.mrf.mxu0
        %v3806 = vadd.f32 %v3685, %v3805
        %v3807 = vpop.f32.mrf.mxu0
        %3808 = vdwg.mxu0
        %s3809 = scalar_lea.vmem [#allocation8], 144
        %v3810 = vld [vmem:[%s3809] sm:$0xff]
        %v3811 = vld [vmem:[%s3809 + $0x8] sm:$0xff]
        %v3812 = vld [vmem:[%s3809 + $0x10] sm:$0xff]
        %v3813 = vld [vmem:[%s3809 + $0x18] sm:$0xff]
        %v3814 = vld [vmem:[%s3809 + $0x20] sm:$0xff]
        %v3815 = vld [vmem:[%s3809 + $0x28] sm:$0xff]
        %v3816 = vld [vmem:[%s3809 + $0x30] sm:$0xff]
        %v3817 = vld [vmem:[%s3809 + $0x38] sm:$0xff]
        %v3818 = vld [vmem:[%s3809 + $0x40] sm:$0xff]
        %v3819 = vld [vmem:[%s3809 + $0x48] sm:$0xff]
        %v3820 = vld [vmem:[%s3809 + $0x50] sm:$0xff]
        %v3821 = vld [vmem:[%s3809 + $0x58] sm:$0xff]
        %v3822 = vld [vmem:[%s3809 + $0x60] sm:$0xff]
        %v3823 = vld [vmem:[%s3809 + $0x68] sm:$0xff]
        %v3824 = vld [vmem:[%s3809 + $0x70] sm:$0xff]
        %v3825 = vld [vmem:[%s3809 + $0x78] sm:$0xff]
        %v3826 = vld [vmem:[%s3809 + $0x80] sm:$0xff]
        %v3827 = vld [vmem:[%s3809 + $0x88] sm:$0xf]
        %v3829 = vsel %vm3569, %v3827, 0
        %3831 = vmatprep.subr.mxu0 0.0
        %3832 = vmatpush1.msra.mxu0 %v3825
        %3833 = vmatprep.subr.mxu0 0.0
        %3834 = vmatpush1.msra.mxu0 %v3824
        %3835 = vmatprep.subr.mxu0 0.0
        %3836 = vmatpush1.msra.mxu0 %v3823
        %3837 = vmatprep.subr.mxu0 0.0
        %3838 = vmatpush1.msra.mxu0 %v3822
        %3839 = vmatprep.subr.mxu0 0.0
        %3840 = vmatpush1.msra.mxu0 %v3821
        %3841 = vmatprep.subr.mxu0 0.0
        %3842 = vmatpush1.msra.mxu0 %v3820
        %3843 = vmatprep.subr.mxu0 0.0
        %3844 = vmatpush1.msra.mxu0 %v3819
        %3845 = vmatprep.subr.mxu0 0.0
        %3846 = vmatpush1.msra.mxu0 %v3818
        %3847 = vmatprep.subr.mxu0 0.0
        %3848 = vmatpush1.msra.mxu0 %v3817
        %3849 = vmatprep.subr.mxu0 0.0
        %3850 = vmatpush1.msra.mxu0 %v3816
        %3851 = vmatprep.subr.mxu0 0.0
        %3852 = vmatpush1.msra.mxu0 %v3815
        %3853 = vmatprep.subr.mxu0 0.0
        %3854 = vmatpush1.msra.mxu0 %v3814
        %3855 = vmatprep.subr.mxu0 0.0
        %3856 = vmatpush1.msra.mxu0 %v3813
        %3857 = vmatprep.subr.mxu0 0.0
        %3858 = vmatpush1.msra.mxu0 %v3812
        %3859 = vmatprep.subr.mxu0 0.0
        %3860 = vmatpush1.msra.mxu0 %v3811
        %3861 = vmatprep.subr.mxu0 0.0
        %3862 = vmatpush1.msra.mxu0 %v3810
        %3863 = vmatprep.subr.mxu0 0.0
        %3864 = vmatpush2.msra.mxu0 0.0
        %3865 = vmatprep.subr.mxu0 0.0
        %3866 = vmatpush2.msra.mxu0 0.0
        %3867 = vmatprep.subr.mxu0 0.0
        %3868 = vmatpush2.msra.mxu0 0.0
        %3869 = vmatprep.subr.mxu0 0.0
        %3870 = vmatpush2.msra.mxu0 0.0
        %3871 = vmatprep.subr.mxu0 0.0
        %3872 = vmatpush2.msra.mxu0 0.0
        %3873 = vmatprep.subr.mxu0 0.0
        %3874 = vmatpush2.msra.mxu0 0.0
        %3875 = vmatprep.subr.mxu0 0.0
        %3876 = vmatpush2.msra.mxu0 0.0
        %3877 = vmatprep.subr.mxu0 0.0
        %3878 = vmatpush2.msra.mxu0 0.0
        %3879 = vmatprep.subr.mxu0 0.0
        %3880 = vmatpush2.msra.mxu0 0.0
        %3881 = vmatprep.subr.mxu0 0.0
        %3882 = vmatpush2.msra.mxu0 0.0
        %3883 = vmatprep.subr.mxu0 0.0
        %3884 = vmatpush2.msra.mxu0 0.0
        %3885 = vmatprep.subr.mxu0 0.0
        %3886 = vmatpush2.msra.mxu0 0.0
        %3887 = vmatprep.subr.mxu0 0.0
        %3888 = vmatpush2.msra.mxu0 0.0
        %3889 = vmatprep.subr.mxu0 0.0
        %3890 = vmatpush2.msra.mxu0 0.0
        %3891 = vmatprep.subr.mxu0 0.0
        %3892 = vmatpush2.msra.mxu0 %v3829
        %3893 = vmatprep.subr.mxu0 0.0
        %3894 = vmatpush2.msra.mxu0 %v3826
        %3895 = vmatprep.mubr.f32.mxu0 %v3540
        %3896 = vmatmul.mubr.f32.gmra.mxu0 %v3457
        %v3897 = vpop.f32.mrf.mxu0
        %v3898 = vadd.f32 0.0, %v3897
        %v3899 = vpop.f32.mrf.mxu0
        %3900 = vmatprep.mubr.f32.mxu0 %v3543
        %3901 = vmatmul.mubr.f32.gmra.mxu0 %v3459
        %v3902 = vpop.f32.mrf.mxu0
        %v3903 = vadd.f32 0.0, %v3902
        %v3904 = vpop.f32.mrf.mxu0
        %3905 = vmatprep.mubr.f32.mxu0 %v3546
        %3906 = vmatmul.mubr.f32.gmra.mxu0 %v3461
        %v3907 = vpop.f32.mrf.mxu0
        %v3908 = vadd.f32 0.0, %v3907
        %v3909 = vpop.f32.mrf.mxu0
        %3910 = vmatprep.mubr.f32.mxu0 %v3549
        %3911 = vmatmul.mubr.f32.gmra.mxu0 %v3463
        %v3912 = vpop.f32.mrf.mxu0
        %v3913 = vadd.f32 0.0, %v3912
        %v3914 = vpop.f32.mrf.mxu0
        %3915 = vmatprep.mubr.f32.mxu0 %v3552
        %3916 = vmatmul.mubr.f32.gmra.mxu0 %v3465
        %v3917 = vpop.f32.mrf.mxu0
        %v3918 = vadd.f32 0.0, %v3917
        %v3919 = vpop.f32.mrf.mxu0
        %3920 = vmatprep.mubr.f32.mxu0 %v3555
        %3921 = vmatmul.mubr.f32.gmra.mxu0 %v3467
        %v3922 = vpop.f32.mrf.mxu0
        %v3923 = vadd.f32 0.0, %v3922
        %v3924 = vpop.f32.mrf.mxu0
        %3925 = vmatprep.mubr.f32.mxu0 %v3558
        %3926 = vmatmul.mubr.f32.gmra.mxu0 %v3469
        %v3927 = vpop.f32.mrf.mxu0
        %v3928 = vadd.f32 0.0, %v3927
        %v3929 = vpop.f32.mrf.mxu0
        %3930 = vmatprep.mubr.f32.mxu0 %v3561
        %3931 = vmatmul.mubr.f32.gmra.mxu0 %v3471
        %v3932 = vpop.f32.mrf.mxu0
        %v3933 = vadd.f32 0.0, %v3932
        %v3934 = vpop.f32.mrf.mxu0
        %3935 = vmatprep.mubr.f32.mxu0 %v3564
        %3936 = vmatmul.mubr.f32.gmra.mxu0 %v3473
        %v3937 = vpop.f32.mrf.mxu0
        %v3938 = vadd.f32 0.0, %v3937
        %v3939 = vpop.f32.mrf.mxu0
        %3940 = vmatprep.mubr.f32.mxu0 %v3567
        %3941 = vmatmul.mubr.f32.gmra.mxu0 %v3475
        %v3942 = vpop.f32.mrf.mxu0
        %v3943 = vadd.f32 0.0, %v3942
        %v3944 = vpop.f32.mrf.mxu0
        %3945 = vdwg.mxu0
        %v3947 = vsel %vm3569, %v3518, 0
        %3949 = vmatprep.subr.mxu0 0.0
        %3950 = vmatpush1.msra.mxu0 %v3516
        %3951 = vmatprep.subr.mxu0 0.0
        %3952 = vmatpush1.msra.mxu0 %v3515
        %3953 = vmatprep.subr.mxu0 0.0
        %3954 = vmatpush1.msra.mxu0 %v3514
        %3955 = vmatprep.subr.mxu0 0.0
        %3956 = vmatpush1.msra.mxu0 %v3513
        %3957 = vmatprep.subr.mxu0 0.0
        %3958 = vmatpush1.msra.mxu0 %v3512
        %3959 = vmatprep.subr.mxu0 0.0
        %3960 = vmatpush1.msra.mxu0 %v3511
        %3961 = vmatprep.subr.mxu0 0.0
        %3962 = vmatpush1.msra.mxu0 %v3510
        %3963 = vmatprep.subr.mxu0 0.0
        %3964 = vmatpush1.msra.mxu0 %v3509
        %3965 = vmatprep.subr.mxu0 0.0
        %3966 = vmatpush1.msra.mxu0 %v3508
        %3967 = vmatprep.subr.mxu0 0.0
        %3968 = vmatpush1.msra.mxu0 %v3507
        %3969 = vmatprep.subr.mxu0 0.0
        %3970 = vmatpush1.msra.mxu0 %v3506
        %3971 = vmatprep.subr.mxu0 0.0
        %3972 = vmatpush1.msra.mxu0 %v3505
        %3973 = vmatprep.subr.mxu0 0.0
        %3974 = vmatpush1.msra.mxu0 %v3504
        %3975 = vmatprep.subr.mxu0 0.0
        %3976 = vmatpush1.msra.mxu0 %v3503
        %3977 = vmatprep.subr.mxu0 0.0
        %3978 = vmatpush1.msra.mxu0 %v3502
        %3979 = vmatprep.subr.mxu0 0.0
        %3980 = vmatpush1.msra.mxu0 %v3501
        %3981 = vmatprep.subr.mxu0 0.0
        %3982 = vmatpush2.msra.mxu0 0.0
        %3983 = vmatprep.subr.mxu0 0.0
        %3984 = vmatpush2.msra.mxu0 0.0
        %3985 = vmatprep.subr.mxu0 0.0
        %3986 = vmatpush2.msra.mxu0 0.0
        %3987 = vmatprep.subr.mxu0 0.0
        %3988 = vmatpush2.msra.mxu0 0.0
        %3989 = vmatprep.subr.mxu0 0.0
        %3990 = vmatpush2.msra.mxu0 0.0
        %3991 = vmatprep.subr.mxu0 0.0
        %3992 = vmatpush2.msra.mxu0 0.0
        %3993 = vmatprep.subr.mxu0 0.0
        %3994 = vmatpush2.msra.mxu0 0.0
        %3995 = vmatprep.subr.mxu0 0.0
        %3996 = vmatpush2.msra.mxu0 0.0
        %3997 = vmatprep.subr.mxu0 0.0
        %3998 = vmatpush2.msra.mxu0 0.0
        %3999 = vmatprep.subr.mxu0 0.0
        %4000 = vmatpush2.msra.mxu0 0.0
        %4001 = vmatprep.subr.mxu0 0.0
        %4002 = vmatpush2.msra.mxu0 0.0
        %4003 = vmatprep.subr.mxu0 0.0
        %4004 = vmatpush2.msra.mxu0 0.0
        %4005 = vmatprep.subr.mxu0 0.0
        %4006 = vmatpush2.msra.mxu0 0.0
        %4007 = vmatprep.subr.mxu0 0.0
        %4008 = vmatpush2.msra.mxu0 0.0
        %4009 = vmatprep.subr.mxu0 0.0
        %4010 = vmatpush2.msra.mxu0 %v3947
        %4011 = vmatprep.subr.mxu0 0.0
        %4012 = vmatpush2.msra.mxu0 %v3517
        %4013 = vmatprep.mubr.f32.mxu0 %v3689
        %4014 = vmatmul.mubr.f32.gmra.mxu0 %v3455
        %v4015 = vpop.f32.mrf.mxu0
        %v4016 = vadd.f32 %v3898, %v4015
        %v4017 = vpop.f32.mrf.mxu0
        %4018 = vmatprep.mubr.f32.mxu0 %v3540
        %4019 = vmatmul.mubr.f32.gmra.mxu0 %v3457
        %v4020 = vpop.f32.mrf.mxu0
        %v4021 = vadd.f32 %v3903, %v4020
        %v4022 = vpop.f32.mrf.mxu0
        %4023 = vmatprep.mubr.f32.mxu0 %v3543
        %4024 = vmatmul.mubr.f32.gmra.mxu0 %v3459
        %v4025 = vpop.f32.mrf.mxu0
        %v4026 = vadd.f32 %v3908, %v4025
        %v4027 = vpop.f32.mrf.mxu0
        %4028 = vmatprep.mubr.f32.mxu0 %v3546
        %4029 = vmatmul.mubr.f32.gmra.mxu0 %v3461
        %v4030 = vpop.f32.mrf.mxu0
        %v4031 = vadd.f32 %v3913, %v4030
        %v4032 = vpop.f32.mrf.mxu0
        %4033 = vmatprep.mubr.f32.mxu0 %v3549
        %4034 = vmatmul.mubr.f32.gmra.mxu0 %v3463
        %v4035 = vpop.f32.mrf.mxu0
        %v4036 = vadd.f32 %v3918, %v4035
        %v4037 = vpop.f32.mrf.mxu0
        %4038 = vmatprep.mubr.f32.mxu0 %v3552
        %4039 = vmatmul.mubr.f32.gmra.mxu0 %v3465
        %v4040 = vpop.f32.mrf.mxu0
        %v4041 = vadd.f32 %v3923, %v4040
        %v4042 = vpop.f32.mrf.mxu0
        %4043 = vmatprep.mubr.f32.mxu0 %v3555
        %4044 = vmatmul.mubr.f32.gmra.mxu0 %v3467
        %v4045 = vpop.f32.mrf.mxu0
        %v4046 = vadd.f32 %v3928, %v4045
        %v4047 = vpop.f32.mrf.mxu0
        %4048 = vmatprep.mubr.f32.mxu0 %v3558
        %4049 = vmatmul.mubr.f32.gmra.mxu0 %v3469
        %v4050 = vpop.f32.mrf.mxu0
        %v4051 = vadd.f32 %v3933, %v4050
        %v4052 = vpop.f32.mrf.mxu0
        %4053 = vmatprep.mubr.f32.mxu0 %v3561
        %4054 = vmatmul.mubr.f32.gmra.mxu0 %v3471
        %v4055 = vpop.f32.mrf.mxu0
        %v4056 = vadd.f32 %v3938, %v4055
        %v4057 = vpop.f32.mrf.mxu0
        %4058 = vmatprep.mubr.f32.mxu0 %v3564
        %4059 = vmatmul.mubr.f32.gmra.mxu0 %v3473
        %v4060 = vpop.f32.mrf.mxu0
        %v4061 = vadd.f32 %v3943, %v4060
        %v4062 = vpop.f32.mrf.mxu0
        %4063 = vdwg.mxu0
        %s4064 = scalar_lea.vmem %s4, 288
        %v4065 = vld [vmem:[%s4064] sm:$0xff]
        %v4066 = vld [vmem:[%s4064 + $0x8] sm:$0xff]
        %v4067 = vld [vmem:[%s4064 + $0x10] sm:$0xff]
        %v4068 = vld [vmem:[%s4064 + $0x18] sm:$0xff]
        %v4069 = vld [vmem:[%s4064 + $0x20] sm:$0xff]
        %v4070 = vld [vmem:[%s4064 + $0x28] sm:$0xff]
        %v4071 = vld [vmem:[%s4064 + $0x30] sm:$0xff]
        %v4072 = vld [vmem:[%s4064 + $0x38] sm:$0xff]
        %v4073 = vld [vmem:[%s4064 + $0x40] sm:$0xff]
        %v4074 = vld [vmem:[%s4064 + $0x48] sm:$0xff]
        %v4075 = vld [vmem:[%s4064 + $0x50] sm:$0xff]
        %v4076 = vld [vmem:[%s4064 + $0x58] sm:$0xff]
        %v4077 = vld [vmem:[%s4064 + $0x60] sm:$0xff]
        %v4078 = vld [vmem:[%s4064 + $0x68] sm:$0xff]
        %v4079 = vld [vmem:[%s4064 + $0x70] sm:$0xff]
        %v4080 = vld [vmem:[%s4064 + $0x78] sm:$0xff]
        %v4081 = vld [vmem:[%s4064 + $0x80] sm:$0xff]
        %v4082 = vld [vmem:[%s4064 + $0x88] sm:$0xf]
        %v4084 = vsel %vm3538, %v3478, 0
        %v4087 = vsel %vm3569, %v4082, 0
        %4089 = vmatprep.subr.mxu0 0.0
        %4090 = vmatpush1.msra.mxu0 %v4080
        %4091 = vmatprep.subr.mxu0 0.0
        %4092 = vmatpush1.msra.mxu0 %v4079
        %4093 = vmatprep.subr.mxu0 0.0
        %4094 = vmatpush1.msra.mxu0 %v4078
        %4095 = vmatprep.subr.mxu0 0.0
        %4096 = vmatpush1.msra.mxu0 %v4077
        %4097 = vmatprep.subr.mxu0 0.0
        %4098 = vmatpush1.msra.mxu0 %v4076
        %4099 = vmatprep.subr.mxu0 0.0
        %4100 = vmatpush1.msra.mxu0 %v4075
        %4101 = vmatprep.subr.mxu0 0.0
        %4102 = vmatpush1.msra.mxu0 %v4074
        %4103 = vmatprep.subr.mxu0 0.0
        %4104 = vmatpush1.msra.mxu0 %v4073
        %4105 = vmatprep.subr.mxu0 0.0
        %4106 = vmatpush1.msra.mxu0 %v4072
        %4107 = vmatprep.subr.mxu0 0.0
        %4108 = vmatpush1.msra.mxu0 %v4071
        %4109 = vmatprep.subr.mxu0 0.0
        %4110 = vmatpush1.msra.mxu0 %v4070
        %4111 = vmatprep.subr.mxu0 0.0
        %4112 = vmatpush1.msra.mxu0 %v4069
        %4113 = vmatprep.subr.mxu0 0.0
        %4114 = vmatpush1.msra.mxu0 %v4068
        %4115 = vmatprep.subr.mxu0 0.0
        %4116 = vmatpush1.msra.mxu0 %v4067
        %4117 = vmatprep.subr.mxu0 0.0
        %4118 = vmatpush1.msra.mxu0 %v4066
        %4119 = vmatprep.subr.mxu0 0.0
        %4120 = vmatpush1.msra.mxu0 %v4065
        %4121 = vmatprep.subr.mxu0 0.0
        %4122 = vmatpush2.msra.mxu0 0.0
        %4123 = vmatprep.subr.mxu0 0.0
        %4124 = vmatpush2.msra.mxu0 0.0
        %4125 = vmatprep.subr.mxu0 0.0
        %4126 = vmatpush2.msra.mxu0 0.0
        %4127 = vmatprep.subr.mxu0 0.0
        %4128 = vmatpush2.msra.mxu0 0.0
        %4129 = vmatprep.subr.mxu0 0.0
        %4130 = vmatpush2.msra.mxu0 0.0
        %4131 = vmatprep.subr.mxu0 0.0
        %4132 = vmatpush2.msra.mxu0 0.0
        %4133 = vmatprep.subr.mxu0 0.0
        %4134 = vmatpush2.msra.mxu0 0.0
        %4135 = vmatprep.subr.mxu0 0.0
        %4136 = vmatpush2.msra.mxu0 0.0
        %4137 = vmatprep.subr.mxu0 0.0
        %4138 = vmatpush2.msra.mxu0 0.0
        %4139 = vmatprep.subr.mxu0 0.0
        %4140 = vmatpush2.msra.mxu0 0.0
        %4141 = vmatprep.subr.mxu0 0.0
        %4142 = vmatpush2.msra.mxu0 0.0
        %4143 = vmatprep.subr.mxu0 0.0
        %4144 = vmatpush2.msra.mxu0 0.0
        %4145 = vmatprep.subr.mxu0 0.0
        %4146 = vmatpush2.msra.mxu0 0.0
        %4147 = vmatprep.subr.mxu0 0.0
        %4148 = vmatpush2.msra.mxu0 0.0
        %4149 = vmatprep.subr.mxu0 0.0
        %4150 = vmatpush2.msra.mxu0 %v4087
        %4151 = vmatprep.subr.mxu0 0.0
        %4152 = vmatpush2.msra.mxu0 %v4081
        %4153 = vmatprep.mubr.f32.mxu0 %v3543
        %4154 = vmatmul.mubr.f32.gmra.mxu0 %v3459
        %v4155 = vpop.f32.mrf.mxu0
        %v4156 = vadd.f32 0.0, %v4155
        %v4157 = vpop.f32.mrf.mxu0
        %4158 = vmatprep.mubr.f32.mxu0 %v3546
        %4159 = vmatmul.mubr.f32.gmra.mxu0 %v3461
        %v4160 = vpop.f32.mrf.mxu0
        %v4161 = vadd.f32 0.0, %v4160
        %v4162 = vpop.f32.mrf.mxu0
        %4163 = vmatprep.mubr.f32.mxu0 %v3549
        %4164 = vmatmul.mubr.f32.gmra.mxu0 %v3463
        %v4165 = vpop.f32.mrf.mxu0
        %v4166 = vadd.f32 0.0, %v4165
        %v4167 = vpop.f32.mrf.mxu0
        %4168 = vmatprep.mubr.f32.mxu0 %v3552
        %4169 = vmatmul.mubr.f32.gmra.mxu0 %v3465
        %v4170 = vpop.f32.mrf.mxu0
        %v4171 = vadd.f32 0.0, %v4170
        %v4172 = vpop.f32.mrf.mxu0
        %4173 = vmatprep.mubr.f32.mxu0 %v3555
        %4174 = vmatmul.mubr.f32.gmra.mxu0 %v3467
        %v4175 = vpop.f32.mrf.mxu0
        %v4176 = vadd.f32 0.0, %v4175
        %v4177 = vpop.f32.mrf.mxu0
        %4178 = vmatprep.mubr.f32.mxu0 %v3558
        %4179 = vmatmul.mubr.f32.gmra.mxu0 %v3469
        %v4180 = vpop.f32.mrf.mxu0
        %v4181 = vadd.f32 0.0, %v4180
        %v4182 = vpop.f32.mrf.mxu0
        %4183 = vmatprep.mubr.f32.mxu0 %v3561
        %4184 = vmatmul.mubr.f32.gmra.mxu0 %v3471
        %v4185 = vpop.f32.mrf.mxu0
        %v4186 = vadd.f32 0.0, %v4185
        %v4187 = vpop.f32.mrf.mxu0
        %4188 = vmatprep.mubr.f32.mxu0 %v3564
        %4189 = vmatmul.mubr.f32.gmra.mxu0 %v3473
        %v4190 = vpop.f32.mrf.mxu0
        %v4191 = vadd.f32 0.0, %v4190
        %v4192 = vpop.f32.mrf.mxu0
        %4193 = vmatprep.mubr.f32.mxu0 %v3567
        %4194 = vmatmul.mubr.f32.gmra.mxu0 %v3475
        %v4195 = vpop.f32.mrf.mxu0
        %v4196 = vadd.f32 0.0, %v4195
        %v4197 = vpop.f32.mrf.mxu0
        %4198 = vmatprep.mubr.f32.mxu0 %v4084
        %4199 = vmatmul.mubr.f32.gmra.mxu0 %v3477
        %v4200 = vpop.f32.mrf.mxu0
        %v4201 = vadd.f32 0.0, %v4200
        %v4202 = vpop.f32.mrf.mxu0
        %4203 = vdwg.mxu0
        %v4204 = vadd.f32 %v3761, %v4156
        %v4205 = vadd.f32 %v3766, %v4161
        %v4206 = vadd.f32 %v3771, %v4166
        %v4207 = vadd.f32 %v3776, %v4171
        %v4208 = vadd.f32 %v3781, %v4176
        %v4209 = vadd.f32 %v3786, %v4181
        %v4210 = vadd.f32 %v3791, %v4186
        %v4211 = vadd.f32 %v3796, %v4191
        %v4212 = vadd.f32 %v3801, %v4196
        %v4213 = vadd.f32 %v3806, %v4201
        %s4214 = scalar_lea.vmem [#allocation8], 288
        %v4215 = vld [vmem:[%s4214] sm:$0xff]
        %v4216 = vld [vmem:[%s4214 + $0x8] sm:$0xff]
        %v4217 = vld [vmem:[%s4214 + $0x10] sm:$0xff]
        %v4218 = vld [vmem:[%s4214 + $0x18] sm:$0xff]
        %v4219 = vld [vmem:[%s4214 + $0x20] sm:$0xff]
        %v4220 = vld [vmem:[%s4214 + $0x28] sm:$0xff]
        %v4221 = vld [vmem:[%s4214 + $0x30] sm:$0xff]
        %v4222 = vld [vmem:[%s4214 + $0x38] sm:$0xff]
        %v4223 = vld [vmem:[%s4214 + $0x40] sm:$0xff]
        %v4224 = vld [vmem:[%s4214 + $0x48] sm:$0xff]
        %v4225 = vld [vmem:[%s4214 + $0x50] sm:$0xff]
        %v4226 = vld [vmem:[%s4214 + $0x58] sm:$0xff]
        %v4227 = vld [vmem:[%s4214 + $0x60] sm:$0xff]
        %v4228 = vld [vmem:[%s4214 + $0x68] sm:$0xff]
        %v4229 = vld [vmem:[%s4214 + $0x70] sm:$0xff]
        %v4230 = vld [vmem:[%s4214 + $0x78] sm:$0xff]
        %v4231 = vld [vmem:[%s4214 + $0x80] sm:$0xff]
        %v4232 = vld [vmem:[%s4214 + $0x88] sm:$0xf]
        %v4234 = vsel %vm3569, %v4232, 0
        %4236 = vmatprep.subr.mxu0 0.0
        %4237 = vmatpush1.msra.mxu0 %v4230
        %4238 = vmatprep.subr.mxu0 0.0
        %4239 = vmatpush1.msra.mxu0 %v4229
        %4240 = vmatprep.subr.mxu0 0.0
        %4241 = vmatpush1.msra.mxu0 %v4228
        %4242 = vmatprep.subr.mxu0 0.0
        %4243 = vmatpush1.msra.mxu0 %v4227
        %4244 = vmatprep.subr.mxu0 0.0
        %4245 = vmatpush1.msra.mxu0 %v4226
        %4246 = vmatprep.subr.mxu0 0.0
        %4247 = vmatpush1.msra.mxu0 %v4225
        %4248 = vmatprep.subr.mxu0 0.0
        %4249 = vmatpush1.msra.mxu0 %v4224
        %4250 = vmatprep.subr.mxu0 0.0
        %4251 = vmatpush1.msra.mxu0 %v4223
        %4252 = vmatprep.subr.mxu0 0.0
        %4253 = vmatpush1.msra.mxu0 %v4222
        %4254 = vmatprep.subr.mxu0 0.0
        %4255 = vmatpush1.msra.mxu0 %v4221
        %4256 = vmatprep.subr.mxu0 0.0
        %4257 = vmatpush1.msra.mxu0 %v4220
        %4258 = vmatprep.subr.mxu0 0.0
        %4259 = vmatpush1.msra.mxu0 %v4219
        %4260 = vmatprep.subr.mxu0 0.0
        %4261 = vmatpush1.msra.mxu0 %v4218
        %4262 = vmatprep.subr.mxu0 0.0
        %4263 = vmatpush1.msra.mxu0 %v4217
        %4264 = vmatprep.subr.mxu0 0.0
        %4265 = vmatpush1.msra.mxu0 %v4216
        %4266 = vmatprep.subr.mxu0 0.0
        %4267 = vmatpush1.msra.mxu0 %v4215
        %4268 = vmatprep.subr.mxu0 0.0
        %4269 = vmatpush2.msra.mxu0 0.0
        %4270 = vmatprep.subr.mxu0 0.0
        %4271 = vmatpush2.msra.mxu0 0.0
        %4272 = vmatprep.subr.mxu0 0.0
        %4273 = vmatpush2.msra.mxu0 0.0
        %4274 = vmatprep.subr.mxu0 0.0
        %4275 = vmatpush2.msra.mxu0 0.0
        %4276 = vmatprep.subr.mxu0 0.0
        %4277 = vmatpush2.msra.mxu0 0.0
        %4278 = vmatprep.subr.mxu0 0.0
        %4279 = vmatpush2.msra.mxu0 0.0
        %4280 = vmatprep.subr.mxu0 0.0
        %4281 = vmatpush2.msra.mxu0 0.0
        %4282 = vmatprep.subr.mxu0 0.0
        %4283 = vmatpush2.msra.mxu0 0.0
        %4284 = vmatprep.subr.mxu0 0.0
        %4285 = vmatpush2.msra.mxu0 0.0
        %4286 = vmatprep.subr.mxu0 0.0
        %4287 = vmatpush2.msra.mxu0 0.0
        %4288 = vmatprep.subr.mxu0 0.0
        %4289 = vmatpush2.msra.mxu0 0.0
        %4290 = vmatprep.subr.mxu0 0.0
        %4291 = vmatpush2.msra.mxu0 0.0
        %4292 = vmatprep.subr.mxu0 0.0
        %4293 = vmatpush2.msra.mxu0 0.0
        %4294 = vmatprep.subr.mxu0 0.0
        %4295 = vmatpush2.msra.mxu0 0.0
        %4296 = vmatprep.subr.mxu0 0.0
        %4297 = vmatpush2.msra.mxu0 %v4234
        %4298 = vmatprep.subr.mxu0 0.0
        %4299 = vmatpush2.msra.mxu0 %v4231
        %4300 = vmatprep.mubr.f32.mxu0 %v3543
        %4301 = vmatmul.mubr.f32.gmra.mxu0 %v3459
        %v4302 = vpop.f32.mrf.mxu0
        %v4303 = vadd.f32 0.0, %v4302
        %v4304 = vpop.f32.mrf.mxu0
        %4305 = vmatprep.mubr.f32.mxu0 %v3546
        %4306 = vmatmul.mubr.f32.gmra.mxu0 %v3461
        %v4307 = vpop.f32.mrf.mxu0
        %v4308 = vadd.f32 0.0, %v4307
        %v4309 = vpop.f32.mrf.mxu0
        %4310 = vmatprep.mubr.f32.mxu0 %v3549
        %4311 = vmatmul.mubr.f32.gmra.mxu0 %v3463
        %v4312 = vpop.f32.mrf.mxu0
        %v4313 = vadd.f32 0.0, %v4312
        %v4314 = vpop.f32.mrf.mxu0
        %4315 = vmatprep.mubr.f32.mxu0 %v3552
        %4316 = vmatmul.mubr.f32.gmra.mxu0 %v3465
        %v4317 = vpop.f32.mrf.mxu0
        %v4318 = vadd.f32 0.0, %v4317
        %v4319 = vpop.f32.mrf.mxu0
        %4320 = vmatprep.mubr.f32.mxu0 %v3555
        %4321 = vmatmul.mubr.f32.gmra.mxu0 %v3467
        %v4322 = vpop.f32.mrf.mxu0
        %v4323 = vadd.f32 0.0, %v4322
        %v4324 = vpop.f32.mrf.mxu0
        %4325 = vmatprep.mubr.f32.mxu0 %v3558
        %4326 = vmatmul.mubr.f32.gmra.mxu0 %v3469
        %v4327 = vpop.f32.mrf.mxu0
        %v4328 = vadd.f32 0.0, %v4327
        %v4329 = vpop.f32.mrf.mxu0
        %4330 = vmatprep.mubr.f32.mxu0 %v3561
        %4331 = vmatmul.mubr.f32.gmra.mxu0 %v3471
        %v4332 = vpop.f32.mrf.mxu0
        %v4333 = vadd.f32 0.0, %v4332
        %v4334 = vpop.f32.mrf.mxu0
        %4335 = vmatprep.mubr.f32.mxu0 %v3564
        %4336 = vmatmul.mubr.f32.gmra.mxu0 %v3473
        %v4337 = vpop.f32.mrf.mxu0
        %v4338 = vadd.f32 0.0, %v4337
        %v4339 = vpop.f32.mrf.mxu0
        %4340 = vmatprep.mubr.f32.mxu0 %v3567
        %4341 = vmatmul.mubr.f32.gmra.mxu0 %v3475
        %v4342 = vpop.f32.mrf.mxu0
        %v4343 = vadd.f32 0.0, %v4342
        %v4344 = vpop.f32.mrf.mxu0
        %4345 = vmatprep.mubr.f32.mxu0 %v4084
        %4346 = vmatmul.mubr.f32.gmra.mxu0 %v3477
        %v4347 = vpop.f32.mrf.mxu0
        %v4348 = vadd.f32 0.0, %v4347
        %v4349 = vpop.f32.mrf.mxu0
        %4350 = vdwg.mxu0
        %v4351 = vadd.f32 %v4016, %v4303
        %v4352 = vadd.f32 %v4021, %v4308
        %v4353 = vadd.f32 %v4026, %v4313
        %v4354 = vadd.f32 %v4031, %v4318
        %v4355 = vadd.f32 %v4036, %v4323
        %v4356 = vadd.f32 %v4041, %v4328
        %v4357 = vadd.f32 %v4046, %v4333
        %v4358 = vadd.f32 %v4051, %v4338
        %v4359 = vadd.f32 %v4056, %v4343
        %v4360 = vadd.f32 %v4061, %v4348
        %s4361 = scalar_lea.vmem %s4, 432
        %v4362 = vld [vmem:[%s4361] sm:$0xff]
        %v4363 = vld [vmem:[%s4361 + $0x8] sm:$0xff]
        %v4364 = vld [vmem:[%s4361 + $0x10] sm:$0xff]
        %v4365 = vld [vmem:[%s4361 + $0x18] sm:$0xff]
        %v4366 = vld [vmem:[%s4361 + $0x20] sm:$0xff]
        %v4367 = vld [vmem:[%s4361 + $0x28] sm:$0xff]
        %v4368 = vld [vmem:[%s4361 + $0x30] sm:$0xff]
        %v4369 = vld [vmem:[%s4361 + $0x38] sm:$0xff]
        %v4370 = vld [vmem:[%s4361 + $0x40] sm:$0xff]
        %v4371 = vld [vmem:[%s4361 + $0x48] sm:$0xff]
        %v4372 = vld [vmem:[%s4361 + $0x50] sm:$0xff]
        %v4373 = vld [vmem:[%s4361 + $0x58] sm:$0xff]
        %v4374 = vld [vmem:[%s4361 + $0x60] sm:$0xff]
        %v4375 = vld [vmem:[%s4361 + $0x68] sm:$0xff]
        %v4376 = vld [vmem:[%s4361 + $0x70] sm:$0xff]
        %v4377 = vld [vmem:[%s4361 + $0x78] sm:$0xff]
        %v4378 = vld [vmem:[%s4361 + $0x80] sm:$0xff]
        %v4379 = vld [vmem:[%s4361 + $0x88] sm:$0xf]
        %v4381 = vsel %vm3538, %v3480, 0
        %v4384 = vsel %vm3569, %v4379, 0
        %4386 = vmatprep.subr.mxu0 0.0
        %4387 = vmatpush1.msra.mxu0 %v4377
        %4388 = vmatprep.subr.mxu0 0.0
        %4389 = vmatpush1.msra.mxu0 %v4376
        %4390 = vmatprep.subr.mxu0 0.0
        %4391 = vmatpush1.msra.mxu0 %v4375
        %4392 = vmatprep.subr.mxu0 0.0
        %4393 = vmatpush1.msra.mxu0 %v4374
        %4394 = vmatprep.subr.mxu0 0.0
        %4395 = vmatpush1.msra.mxu0 %v4373
        %4396 = vmatprep.subr.mxu0 0.0
        %4397 = vmatpush1.msra.mxu0 %v4372
        %4398 = vmatprep.subr.mxu0 0.0
        %4399 = vmatpush1.msra.mxu0 %v4371
        %4400 = vmatprep.subr.mxu0 0.0
        %4401 = vmatpush1.msra.mxu0 %v4370
        %4402 = vmatprep.subr.mxu0 0.0
        %4403 = vmatpush1.msra.mxu0 %v4369
        %4404 = vmatprep.subr.mxu0 0.0
        %4405 = vmatpush1.msra.mxu0 %v4368
        %4406 = vmatprep.subr.mxu0 0.0
        %4407 = vmatpush1.msra.mxu0 %v4367
        %4408 = vmatprep.subr.mxu0 0.0
        %4409 = vmatpush1.msra.mxu0 %v4366
        %4410 = vmatprep.subr.mxu0 0.0
        %4411 = vmatpush1.msra.mxu0 %v4365
        %4412 = vmatprep.subr.mxu0 0.0
        %4413 = vmatpush1.msra.mxu0 %v4364
        %4414 = vmatprep.subr.mxu0 0.0
        %4415 = vmatpush1.msra.mxu0 %v4363
        %4416 = vmatprep.subr.mxu0 0.0
        %4417 = vmatpush1.msra.mxu0 %v4362
        %4418 = vmatprep.subr.mxu0 0.0
        %4419 = vmatpush2.msra.mxu0 0.0
        %4420 = vmatprep.subr.mxu0 0.0
        %4421 = vmatpush2.msra.mxu0 0.0
        %4422 = vmatprep.subr.mxu0 0.0
        %4423 = vmatpush2.msra.mxu0 0.0
        %4424 = vmatprep.subr.mxu0 0.0
        %4425 = vmatpush2.msra.mxu0 0.0
        %4426 = vmatprep.subr.mxu0 0.0
        %4427 = vmatpush2.msra.mxu0 0.0
        %4428 = vmatprep.subr.mxu0 0.0
        %4429 = vmatpush2.msra.mxu0 0.0
        %4430 = vmatprep.subr.mxu0 0.0
        %4431 = vmatpush2.msra.mxu0 0.0
        %4432 = vmatprep.subr.mxu0 0.0
        %4433 = vmatpush2.msra.mxu0 0.0
        %4434 = vmatprep.subr.mxu0 0.0
        %4435 = vmatpush2.msra.mxu0 0.0
        %4436 = vmatprep.subr.mxu0 0.0
        %4437 = vmatpush2.msra.mxu0 0.0
        %4438 = vmatprep.subr.mxu0 0.0
        %4439 = vmatpush2.msra.mxu0 0.0
        %4440 = vmatprep.subr.mxu0 0.0
        %4441 = vmatpush2.msra.mxu0 0.0
        %4442 = vmatprep.subr.mxu0 0.0
        %4443 = vmatpush2.msra.mxu0 0.0
        %4444 = vmatprep.subr.mxu0 0.0
        %4445 = vmatpush2.msra.mxu0 0.0
        %4446 = vmatprep.subr.mxu0 0.0
        %4447 = vmatpush2.msra.mxu0 %v4384
        %4448 = vmatprep.subr.mxu0 0.0
        %4449 = vmatpush2.msra.mxu0 %v4378
        %4450 = vmatprep.mubr.f32.mxu0 %v3546
        %4451 = vmatmul.mubr.f32.gmra.mxu0 %v3461
        %v4452 = vpop.f32.mrf.mxu0
        %v4453 = vadd.f32 0.0, %v4452
        %v4454 = vpop.f32.mrf.mxu0
        %4455 = vmatprep.mubr.f32.mxu0 %v3549
        %4456 = vmatmul.mubr.f32.gmra.mxu0 %v3463
        %v4457 = vpop.f32.mrf.mxu0
        %v4458 = vadd.f32 0.0, %v4457
        %v4459 = vpop.f32.mrf.mxu0
        %4460 = vmatprep.mubr.f32.mxu0 %v3552
        %4461 = vmatmul.mubr.f32.gmra.mxu0 %v3465
        %v4462 = vpop.f32.mrf.mxu0
        %v4463 = vadd.f32 0.0, %v4462
        %v4464 = vpop.f32.mrf.mxu0
        %4465 = vmatprep.mubr.f32.mxu0 %v3555
        %4466 = vmatmul.mubr.f32.gmra.mxu0 %v3467
        %v4467 = vpop.f32.mrf.mxu0
        %v4468 = vadd.f32 0.0, %v4467
        %v4469 = vpop.f32.mrf.mxu0
        %4470 = vmatprep.mubr.f32.mxu0 %v3558
        %4471 = vmatmul.mubr.f32.gmra.mxu0 %v3469
        %v4472 = vpop.f32.mrf.mxu0
        %v4473 = vadd.f32 0.0, %v4472
        %v4474 = vpop.f32.mrf.mxu0
        %4475 = vmatprep.mubr.f32.mxu0 %v3561
        %4476 = vmatmul.mubr.f32.gmra.mxu0 %v3471
        %v4477 = vpop.f32.mrf.mxu0
        %v4478 = vadd.f32 0.0, %v4477
        %v4479 = vpop.f32.mrf.mxu0
        %4480 = vmatprep.mubr.f32.mxu0 %v3564
        %4481 = vmatmul.mubr.f32.gmra.mxu0 %v3473
        %v4482 = vpop.f32.mrf.mxu0
        %v4483 = vadd.f32 0.0, %v4482
        %v4484 = vpop.f32.mrf.mxu0
        %4485 = vmatprep.mubr.f32.mxu0 %v3567
        %4486 = vmatmul.mubr.f32.gmra.mxu0 %v3475
        %v4487 = vpop.f32.mrf.mxu0
        %v4488 = vadd.f32 0.0, %v4487
        %v4489 = vpop.f32.mrf.mxu0
        %4490 = vmatprep.mubr.f32.mxu0 %v4084
        %4491 = vmatmul.mubr.f32.gmra.mxu0 %v3477
        %v4492 = vpop.f32.mrf.mxu0
        %v4493 = vadd.f32 0.0, %v4492
        %v4494 = vpop.f32.mrf.mxu0
        %4495 = vmatprep.mubr.f32.mxu0 %v4381
        %4496 = vmatmul.mubr.f32.gmra.mxu0 %v3479
        %v4497 = vpop.f32.mrf.mxu0
        %v4498 = vadd.f32 0.0, %v4497
        %v4499 = vpop.f32.mrf.mxu0
        %4500 = vdwg.mxu0
        %v4501 = vadd.f32 %v4204, %v4453
        %v4502 = vadd.f32 %v4205, %v4458
        %v4503 = vadd.f32 %v4206, %v4463
        %v4504 = vadd.f32 %v4207, %v4468
        %v4505 = vadd.f32 %v4208, %v4473
        %v4506 = vadd.f32 %v4209, %v4478
        %v4507 = vadd.f32 %v4210, %v4483
        %v4508 = vadd.f32 %v4211, %v4488
        %v4509 = vadd.f32 %v4212, %v4493
        %v4510 = vadd.f32 %v4213, %v4498
        %s4511 = scalar_lea.vmem [#allocation8], 432
        %v4512 = vld [vmem:[%s4511] sm:$0xff]
        %v4513 = vld [vmem:[%s4511 + $0x8] sm:$0xff]
        %v4514 = vld [vmem:[%s4511 + $0x10] sm:$0xff]
        %v4515 = vld [vmem:[%s4511 + $0x18] sm:$0xff]
        %v4516 = vld [vmem:[%s4511 + $0x20] sm:$0xff]
        %v4517 = vld [vmem:[%s4511 + $0x28] sm:$0xff]
        %v4518 = vld [vmem:[%s4511 + $0x30] sm:$0xff]
        %v4519 = vld [vmem:[%s4511 + $0x38] sm:$0xff]
        %v4520 = vld [vmem:[%s4511 + $0x40] sm:$0xff]
        %v4521 = vld [vmem:[%s4511 + $0x48] sm:$0xff]
        %v4522 = vld [vmem:[%s4511 + $0x50] sm:$0xff]
        %v4523 = vld [vmem:[%s4511 + $0x58] sm:$0xff]
        %v4524 = vld [vmem:[%s4511 + $0x60] sm:$0xff]
        %v4525 = vld [vmem:[%s4511 + $0x68] sm:$0xff]
        %v4526 = vld [vmem:[%s4511 + $0x70] sm:$0xff]
        %v4527 = vld [vmem:[%s4511 + $0x78] sm:$0xff]
        %v4528 = vld [vmem:[%s4511 + $0x80] sm:$0xff]
        %v4529 = vld [vmem:[%s4511 + $0x88] sm:$0xf]
        %v4531 = vsel %vm3569, %v4529, 0
        %4533 = vmatprep.subr.mxu0 0.0
        %4534 = vmatpush1.msra.mxu0 %v4527
        %4535 = vmatprep.subr.mxu0 0.0
        %4536 = vmatpush1.msra.mxu0 %v4526
        %4537 = vmatprep.subr.mxu0 0.0
        %4538 = vmatpush1.msra.mxu0 %v4525
        %4539 = vmatprep.subr.mxu0 0.0
        %4540 = vmatpush1.msra.mxu0 %v4524
        %4541 = vmatprep.subr.mxu0 0.0
        %4542 = vmatpush1.msra.mxu0 %v4523
        %4543 = vmatprep.subr.mxu0 0.0
        %4544 = vmatpush1.msra.mxu0 %v4522
        %4545 = vmatprep.subr.mxu0 0.0
        %4546 = vmatpush1.msra.mxu0 %v4521
        %4547 = vmatprep.subr.mxu0 0.0
        %4548 = vmatpush1.msra.mxu0 %v4520
        %4549 = vmatprep.subr.mxu0 0.0
        %4550 = vmatpush1.msra.mxu0 %v4519
        %4551 = vmatprep.subr.mxu0 0.0
        %4552 = vmatpush1.msra.mxu0 %v4518
        %4553 = vmatprep.subr.mxu0 0.0
        %4554 = vmatpush1.msra.mxu0 %v4517
        %4555 = vmatprep.subr.mxu0 0.0
        %4556 = vmatpush1.msra.mxu0 %v4516
        %4557 = vmatprep.subr.mxu0 0.0
        %4558 = vmatpush1.msra.mxu0 %v4515
        %4559 = vmatprep.subr.mxu0 0.0
        %4560 = vmatpush1.msra.mxu0 %v4514
        %4561 = vmatprep.subr.mxu0 0.0
        %4562 = vmatpush1.msra.mxu0 %v4513
        %4563 = vmatprep.subr.mxu0 0.0
        %4564 = vmatpush1.msra.mxu0 %v4512
        %4565 = vmatprep.subr.mxu0 0.0
        %4566 = vmatpush2.msra.mxu0 0.0
        %4567 = vmatprep.subr.mxu0 0.0
        %4568 = vmatpush2.msra.mxu0 0.0
        %4569 = vmatprep.subr.mxu0 0.0
        %4570 = vmatpush2.msra.mxu0 0.0
        %4571 = vmatprep.subr.mxu0 0.0
        %4572 = vmatpush2.msra.mxu0 0.0
        %4573 = vmatprep.subr.mxu0 0.0
        %4574 = vmatpush2.msra.mxu0 0.0
        %4575 = vmatprep.subr.mxu0 0.0
        %4576 = vmatpush2.msra.mxu0 0.0
        %4577 = vmatprep.subr.mxu0 0.0
        %4578 = vmatpush2.msra.mxu0 0.0
        %4579 = vmatprep.subr.mxu0 0.0
        %4580 = vmatpush2.msra.mxu0 0.0
        %4581 = vmatprep.subr.mxu0 0.0
        %4582 = vmatpush2.msra.mxu0 0.0
        %4583 = vmatprep.subr.mxu0 0.0
        %4584 = vmatpush2.msra.mxu0 0.0
        %4585 = vmatprep.subr.mxu0 0.0
        %4586 = vmatpush2.msra.mxu0 0.0
        %4587 = vmatprep.subr.mxu0 0.0
        %4588 = vmatpush2.msra.mxu0 0.0
        %4589 = vmatprep.subr.mxu0 0.0
        %4590 = vmatpush2.msra.mxu0 0.0
        %4591 = vmatprep.subr.mxu0 0.0
        %4592 = vmatpush2.msra.mxu0 0.0
        %4593 = vmatprep.subr.mxu0 0.0
        %4594 = vmatpush2.msra.mxu0 %v4531
        %4595 = vmatprep.subr.mxu0 0.0
        %4596 = vmatpush2.msra.mxu0 %v4528
        %4597 = vmatprep.mubr.f32.mxu0 %v3546
        %4598 = vmatmul.mubr.f32.gmra.mxu0 %v3461
        %v4599 = vpop.f32.mrf.mxu0
        %v4600 = vadd.f32 0.0, %v4599
        %v4601 = vpop.f32.mrf.mxu0
        %4602 = vmatprep.mubr.f32.mxu0 %v3549
        %4603 = vmatmul.mubr.f32.gmra.mxu0 %v3463
        %v4604 = vpop.f32.mrf.mxu0
        %v4605 = vadd.f32 0.0, %v4604
        %v4606 = vpop.f32.mrf.mxu0
        %4607 = vmatprep.mubr.f32.mxu0 %v3552
        %4608 = vmatmul.mubr.f32.gmra.mxu0 %v3465
        %v4609 = vpop.f32.mrf.mxu0
        %v4610 = vadd.f32 0.0, %v4609
        %v4611 = vpop.f32.mrf.mxu0
        %4612 = vmatprep.mubr.f32.mxu0 %v3555
        %4613 = vmatmul.mubr.f32.gmra.mxu0 %v3467
        %v4614 = vpop.f32.mrf.mxu0
        %v4615 = vadd.f32 0.0, %v4614
        %v4616 = vpop.f32.mrf.mxu0
        %4617 = vmatprep.mubr.f32.mxu0 %v3558
        %4618 = vmatmul.mubr.f32.gmra.mxu0 %v3469
        %v4619 = vpop.f32.mrf.mxu0
        %v4620 = vadd.f32 0.0, %v4619
        %v4621 = vpop.f32.mrf.mxu0
        %4622 = vmatprep.mubr.f32.mxu0 %v3561
        %4623 = vmatmul.mubr.f32.gmra.mxu0 %v3471
        %v4624 = vpop.f32.mrf.mxu0
        %v4625 = vadd.f32 0.0, %v4624
        %v4626 = vpop.f32.mrf.mxu0
        %4627 = vmatprep.mubr.f32.mxu0 %v3564
        %4628 = vmatmul.mubr.f32.gmra.mxu0 %v3473
        %v4629 = vpop.f32.mrf.mxu0
        %v4630 = vadd.f32 0.0, %v4629
        %v4631 = vpop.f32.mrf.mxu0
        %4632 = vmatprep.mubr.f32.mxu0 %v3567
        %4633 = vmatmul.mubr.f32.gmra.mxu0 %v3475
        %v4634 = vpop.f32.mrf.mxu0
        %v4635 = vadd.f32 0.0, %v4634
        %v4636 = vpop.f32.mrf.mxu0
        %4637 = vmatprep.mubr.f32.mxu0 %v4084
        %4638 = vmatmul.mubr.f32.gmra.mxu0 %v3477
        %v4639 = vpop.f32.mrf.mxu0
        %v4640 = vadd.f32 0.0, %v4639
        %v4641 = vpop.f32.mrf.mxu0
        %4642 = vmatprep.mubr.f32.mxu0 %v4381
        %4643 = vmatmul.mubr.f32.gmra.mxu0 %v3479
        %v4644 = vpop.f32.mrf.mxu0
        %v4645 = vadd.f32 0.0, %v4644
        %v4646 = vpop.f32.mrf.mxu0
        %4647 = vdwg.mxu0
        %v4648 = vadd.f32 %v4351, %v4600
        %v4649 = vadd.f32 %v4352, %v4605
        %v4650 = vadd.f32 %v4353, %v4610
        %v4651 = vadd.f32 %v4354, %v4615
        %v4652 = vadd.f32 %v4355, %v4620
        %v4653 = vadd.f32 %v4356, %v4625
        %v4654 = vadd.f32 %v4357, %v4630
        %v4655 = vadd.f32 %v4358, %v4635
        %v4656 = vadd.f32 %v4359, %v4640
        %v4657 = vadd.f32 %v4360, %v4645
        %s4658 = scalar_lea.vmem %s4, 576
        %v4659 = vld [vmem:[%s4658] sm:$0xff]
        %v4660 = vld [vmem:[%s4658 + $0x8] sm:$0xff]
        %v4661 = vld [vmem:[%s4658 + $0x10] sm:$0xff]
        %v4662 = vld [vmem:[%s4658 + $0x18] sm:$0xff]
        %v4663 = vld [vmem:[%s4658 + $0x20] sm:$0xff]
        %v4664 = vld [vmem:[%s4658 + $0x28] sm:$0xff]
        %v4665 = vld [vmem:[%s4658 + $0x30] sm:$0xff]
        %v4666 = vld [vmem:[%s4658 + $0x38] sm:$0xff]
        %v4667 = vld [vmem:[%s4658 + $0x40] sm:$0xff]
        %v4668 = vld [vmem:[%s4658 + $0x48] sm:$0xff]
        %v4669 = vld [vmem:[%s4658 + $0x50] sm:$0xff]
        %v4670 = vld [vmem:[%s4658 + $0x58] sm:$0xff]
        %v4671 = vld [vmem:[%s4658 + $0x60] sm:$0xff]
        %v4672 = vld [vmem:[%s4658 + $0x68] sm:$0xff]
        %v4673 = vld [vmem:[%s4658 + $0x70] sm:$0xff]
        %v4674 = vld [vmem:[%s4658 + $0x78] sm:$0xff]
        %v4675 = vld [vmem:[%s4658 + $0x80] sm:$0xff]
        %v4676 = vld [vmem:[%s4658 + $0x88] sm:$0xf]
        %v4678 = vsel %vm3538, %v3482, 0
        %v4681 = vsel %vm3569, %v4676, 0
        %4683 = vmatprep.subr.mxu0 0.0
        %4684 = vmatpush1.msra.mxu0 %v4674
        %4685 = vmatprep.subr.mxu0 0.0
        %4686 = vmatpush1.msra.mxu0 %v4673
        %4687 = vmatprep.subr.mxu0 0.0
        %4688 = vmatpush1.msra.mxu0 %v4672
        %4689 = vmatprep.subr.mxu0 0.0
        %4690 = vmatpush1.msra.mxu0 %v4671
        %4691 = vmatprep.subr.mxu0 0.0
        %4692 = vmatpush1.msra.mxu0 %v4670
        %4693 = vmatprep.subr.mxu0 0.0
        %4694 = vmatpush1.msra.mxu0 %v4669
        %4695 = vmatprep.subr.mxu0 0.0
        %4696 = vmatpush1.msra.mxu0 %v4668
        %4697 = vmatprep.subr.mxu0 0.0
        %4698 = vmatpush1.msra.mxu0 %v4667
        %4699 = vmatprep.subr.mxu0 0.0
        %4700 = vmatpush1.msra.mxu0 %v4666
        %4701 = vmatprep.subr.mxu0 0.0
        %4702 = vmatpush1.msra.mxu0 %v4665
        %4703 = vmatprep.subr.mxu0 0.0
        %4704 = vmatpush1.msra.mxu0 %v4664
        %4705 = vmatprep.subr.mxu0 0.0
        %4706 = vmatpush1.msra.mxu0 %v4663
        %4707 = vmatprep.subr.mxu0 0.0
        %4708 = vmatpush1.msra.mxu0 %v4662
        %4709 = vmatprep.subr.mxu0 0.0
        %4710 = vmatpush1.msra.mxu0 %v4661
        %4711 = vmatprep.subr.mxu0 0.0
        %4712 = vmatpush1.msra.mxu0 %v4660
        %4713 = vmatprep.subr.mxu0 0.0
        %4714 = vmatpush1.msra.mxu0 %v4659
        %4715 = vmatprep.subr.mxu0 0.0
        %4716 = vmatpush2.msra.mxu0 0.0
        %4717 = vmatprep.subr.mxu0 0.0
        %4718 = vmatpush2.msra.mxu0 0.0
        %4719 = vmatprep.subr.mxu0 0.0
        %4720 = vmatpush2.msra.mxu0 0.0
        %4721 = vmatprep.subr.mxu0 0.0
        %4722 = vmatpush2.msra.mxu0 0.0
        %4723 = vmatprep.subr.mxu0 0.0
        %4724 = vmatpush2.msra.mxu0 0.0
        %4725 = vmatprep.subr.mxu0 0.0
        %4726 = vmatpush2.msra.mxu0 0.0
        %4727 = vmatprep.subr.mxu0 0.0
        %4728 = vmatpush2.msra.mxu0 0.0
        %4729 = vmatprep.subr.mxu0 0.0
        %4730 = vmatpush2.msra.mxu0 0.0
        %4731 = vmatprep.subr.mxu0 0.0
        %4732 = vmatpush2.msra.mxu0 0.0
        %4733 = vmatprep.subr.mxu0 0.0
        %4734 = vmatpush2.msra.mxu0 0.0
        %4735 = vmatprep.subr.mxu0 0.0
        %4736 = vmatpush2.msra.mxu0 0.0
        %4737 = vmatprep.subr.mxu0 0.0
        %4738 = vmatpush2.msra.mxu0 0.0
        %4739 = vmatprep.subr.mxu0 0.0
        %4740 = vmatpush2.msra.mxu0 0.0
        %4741 = vmatprep.subr.mxu0 0.0
        %4742 = vmatpush2.msra.mxu0 0.0
        %4743 = vmatprep.subr.mxu0 0.0
        %4744 = vmatpush2.msra.mxu0 %v4681
        %4745 = vmatprep.subr.mxu0 0.0
        %4746 = vmatpush2.msra.mxu0 %v4675
        %4747 = vmatprep.mubr.f32.mxu0 %v3549
        %4748 = vmatmul.mubr.f32.gmra.mxu0 %v3463
        %v4749 = vpop.f32.mrf.mxu0
        %v4750 = vadd.f32 0.0, %v4749
        %v4751 = vpop.f32.mrf.mxu0
        %4752 = vmatprep.mubr.f32.mxu0 %v3552
        %4753 = vmatmul.mubr.f32.gmra.mxu0 %v3465
        %v4754 = vpop.f32.mrf.mxu0
        %v4755 = vadd.f32 0.0, %v4754
        %v4756 = vpop.f32.mrf.mxu0
        %4757 = vmatprep.mubr.f32.mxu0 %v3555
        %4758 = vmatmul.mubr.f32.gmra.mxu0 %v3467
        %v4759 = vpop.f32.mrf.mxu0
        %v4760 = vadd.f32 0.0, %v4759
        %v4761 = vpop.f32.mrf.mxu0
        %4762 = vmatprep.mubr.f32.mxu0 %v3558
        %4763 = vmatmul.mubr.f32.gmra.mxu0 %v3469
        %v4764 = vpop.f32.mrf.mxu0
        %v4765 = vadd.f32 0.0, %v4764
        %v4766 = vpop.f32.mrf.mxu0
        %4767 = vmatprep.mubr.f32.mxu0 %v3561
        %4768 = vmatmul.mubr.f32.gmra.mxu0 %v3471
        %v4769 = vpop.f32.mrf.mxu0
        %v4770 = vadd.f32 0.0, %v4769
        %v4771 = vpop.f32.mrf.mxu0
        %4772 = vmatprep.mubr.f32.mxu0 %v3564
        %4773 = vmatmul.mubr.f32.gmra.mxu0 %v3473
        %v4774 = vpop.f32.mrf.mxu0
        %v4775 = vadd.f32 0.0, %v4774
        %v4776 = vpop.f32.mrf.mxu0
        %4777 = vmatprep.mubr.f32.mxu0 %v3567
        %4778 = vmatmul.mubr.f32.gmra.mxu0 %v3475
        %v4779 = vpop.f32.mrf.mxu0
        %v4780 = vadd.f32 0.0, %v4779
        %v4781 = vpop.f32.mrf.mxu0
        %4782 = vmatprep.mubr.f32.mxu0 %v4084
        %4783 = vmatmul.mubr.f32.gmra.mxu0 %v3477
        %v4784 = vpop.f32.mrf.mxu0
        %v4785 = vadd.f32 0.0, %v4784
        %v4786 = vpop.f32.mrf.mxu0
        %4787 = vmatprep.mubr.f32.mxu0 %v4381
        %4788 = vmatmul.mubr.f32.gmra.mxu0 %v3479
        %v4789 = vpop.f32.mrf.mxu0
        %v4790 = vadd.f32 0.0, %v4789
        %v4791 = vpop.f32.mrf.mxu0
        %4792 = vmatprep.mubr.f32.mxu0 %v4678
        %4793 = vmatmul.mubr.f32.gmra.mxu0 %v3481
        %v4794 = vpop.f32.mrf.mxu0
        %v4795 = vadd.f32 0.0, %v4794
        %v4796 = vpop.f32.mrf.mxu0
        %4797 = vdwg.mxu0
        %v4798 = vadd.f32 %v4501, %v4750
        %v4799 = vadd.f32 %v4502, %v4755
        %v4800 = vadd.f32 %v4503, %v4760
        %v4801 = vadd.f32 %v4504, %v4765
        %v4802 = vadd.f32 %v4505, %v4770
        %v4803 = vadd.f32 %v4506, %v4775
        %v4804 = vadd.f32 %v4507, %v4780
        %v4805 = vadd.f32 %v4508, %v4785
        %v4806 = vadd.f32 %v4509, %v4790
        %v4807 = vadd.f32 %v4510, %v4795
        %s4808 = scalar_lea.vmem [#allocation8], 576
        %v4809 = vld [vmem:[%s4808] sm:$0xff]
        %v4810 = vld [vmem:[%s4808 + $0x8] sm:$0xff]
        %v4811 = vld [vmem:[%s4808 + $0x10] sm:$0xff]
        %v4812 = vld [vmem:[%s4808 + $0x18] sm:$0xff]
        %v4813 = vld [vmem:[%s4808 + $0x20] sm:$0xff]
        %v4814 = vld [vmem:[%s4808 + $0x28] sm:$0xff]
        %v4815 = vld [vmem:[%s4808 + $0x30] sm:$0xff]
        %v4816 = vld [vmem:[%s4808 + $0x38] sm:$0xff]
        %v4817 = vld [vmem:[%s4808 + $0x40] sm:$0xff]
        %v4818 = vld [vmem:[%s4808 + $0x48] sm:$0xff]
        %v4819 = vld [vmem:[%s4808 + $0x50] sm:$0xff]
        %v4820 = vld [vmem:[%s4808 + $0x58] sm:$0xff]
        %v4821 = vld [vmem:[%s4808 + $0x60] sm:$0xff]
        %v4822 = vld [vmem:[%s4808 + $0x68] sm:$0xff]
        %v4823 = vld [vmem:[%s4808 + $0x70] sm:$0xff]
        %v4824 = vld [vmem:[%s4808 + $0x78] sm:$0xff]
        %v4825 = vld [vmem:[%s4808 + $0x80] sm:$0xff]
        %v4826 = vld [vmem:[%s4808 + $0x88] sm:$0xf]
        %v4828 = vsel %vm3569, %v4826, 0
        %4830 = vmatprep.subr.mxu0 0.0
        %4831 = vmatpush1.msra.mxu0 %v4824
        %4832 = vmatprep.subr.mxu0 0.0
        %4833 = vmatpush1.msra.mxu0 %v4823
        %4834 = vmatprep.subr.mxu0 0.0
        %4835 = vmatpush1.msra.mxu0 %v4822
        %4836 = vmatprep.subr.mxu0 0.0
        %4837 = vmatpush1.msra.mxu0 %v4821
        %4838 = vmatprep.subr.mxu0 0.0
        %4839 = vmatpush1.msra.mxu0 %v4820
        %4840 = vmatprep.subr.mxu0 0.0
        %4841 = vmatpush1.msra.mxu0 %v4819
        %4842 = vmatprep.subr.mxu0 0.0
        %4843 = vmatpush1.msra.mxu0 %v4818
        %4844 = vmatprep.subr.mxu0 0.0
        %4845 = vmatpush1.msra.mxu0 %v4817
        %4846 = vmatprep.subr.mxu0 0.0
        %4847 = vmatpush1.msra.mxu0 %v4816
        %4848 = vmatprep.subr.mxu0 0.0
        %4849 = vmatpush1.msra.mxu0 %v4815
        %4850 = vmatprep.subr.mxu0 0.0
        %4851 = vmatpush1.msra.mxu0 %v4814
        %4852 = vmatprep.subr.mxu0 0.0
        %4853 = vmatpush1.msra.mxu0 %v4813
        %4854 = vmatprep.subr.mxu0 0.0
        %4855 = vmatpush1.msra.mxu0 %v4812
        %4856 = vmatprep.subr.mxu0 0.0
        %4857 = vmatpush1.msra.mxu0 %v4811
        %4858 = vmatprep.subr.mxu0 0.0
        %4859 = vmatpush1.msra.mxu0 %v4810
        %4860 = vmatprep.subr.mxu0 0.0
        %4861 = vmatpush1.msra.mxu0 %v4809
        %4862 = vmatprep.subr.mxu0 0.0
        %4863 = vmatpush2.msra.mxu0 0.0
        %4864 = vmatprep.subr.mxu0 0.0
        %4865 = vmatpush2.msra.mxu0 0.0
        %4866 = vmatprep.subr.mxu0 0.0
        %4867 = vmatpush2.msra.mxu0 0.0
        %4868 = vmatprep.subr.mxu0 0.0
        %4869 = vmatpush2.msra.mxu0 0.0
        %4870 = vmatprep.subr.mxu0 0.0
        %4871 = vmatpush2.msra.mxu0 0.0
        %4872 = vmatprep.subr.mxu0 0.0
        %4873 = vmatpush2.msra.mxu0 0.0
        %4874 = vmatprep.subr.mxu0 0.0
        %4875 = vmatpush2.msra.mxu0 0.0
        %4876 = vmatprep.subr.mxu0 0.0
        %4877 = vmatpush2.msra.mxu0 0.0
        %4878 = vmatprep.subr.mxu0 0.0
        %4879 = vmatpush2.msra.mxu0 0.0
        %4880 = vmatprep.subr.mxu0 0.0
        %4881 = vmatpush2.msra.mxu0 0.0
        %4882 = vmatprep.subr.mxu0 0.0
        %4883 = vmatpush2.msra.mxu0 0.0
        %4884 = vmatprep.subr.mxu0 0.0
        %4885 = vmatpush2.msra.mxu0 0.0
        %4886 = vmatprep.subr.mxu0 0.0
        %4887 = vmatpush2.msra.mxu0 0.0
        %4888 = vmatprep.subr.mxu0 0.0
        %4889 = vmatpush2.msra.mxu0 0.0
        %4890 = vmatprep.subr.mxu0 0.0
        %4891 = vmatpush2.msra.mxu0 %v4828
        %4892 = vmatprep.subr.mxu0 0.0
        %4893 = vmatpush2.msra.mxu0 %v4825
        %4894 = vmatprep.mubr.f32.mxu0 %v3549
        %4895 = vmatmul.mubr.f32.gmra.mxu0 %v3463
        %v4896 = vpop.f32.mrf.mxu0
        %v4897 = vadd.f32 0.0, %v4896
        %v4898 = vpop.f32.mrf.mxu0
        %4899 = vmatprep.mubr.f32.mxu0 %v3552
        %4900 = vmatmul.mubr.f32.gmra.mxu0 %v3465
        %v4901 = vpop.f32.mrf.mxu0
        %v4902 = vadd.f32 0.0, %v4901
        %v4903 = vpop.f32.mrf.mxu0
        %4904 = vmatprep.mubr.f32.mxu0 %v3555
        %4905 = vmatmul.mubr.f32.gmra.mxu0 %v3467
        %v4906 = vpop.f32.mrf.mxu0
        %v4907 = vadd.f32 0.0, %v4906
        %v4908 = vpop.f32.mrf.mxu0
        %4909 = vmatprep.mubr.f32.mxu0 %v3558
        %4910 = vmatmul.mubr.f32.gmra.mxu0 %v3469
        %v4911 = vpop.f32.mrf.mxu0
        %v4912 = vadd.f32 0.0, %v4911
        %v4913 = vpop.f32.mrf.mxu0
        %4914 = vmatprep.mubr.f32.mxu0 %v3561
        %4915 = vmatmul.mubr.f32.gmra.mxu0 %v3471
        %v4916 = vpop.f32.mrf.mxu0
        %v4917 = vadd.f32 0.0, %v4916
        %v4918 = vpop.f32.mrf.mxu0
        %4919 = vmatprep.mubr.f32.mxu0 %v3564
        %4920 = vmatmul.mubr.f32.gmra.mxu0 %v3473
        %v4921 = vpop.f32.mrf.mxu0
        %v4922 = vadd.f32 0.0, %v4921
        %v4923 = vpop.f32.mrf.mxu0
        %4924 = vmatprep.mubr.f32.mxu0 %v3567
        %4925 = vmatmul.mubr.f32.gmra.mxu0 %v3475
        %v4926 = vpop.f32.mrf.mxu0
        %v4927 = vadd.f32 0.0, %v4926
        %v4928 = vpop.f32.mrf.mxu0
        %4929 = vmatprep.mubr.f32.mxu0 %v4084
        %4930 = vmatmul.mubr.f32.gmra.mxu0 %v3477
        %v4931 = vpop.f32.mrf.mxu0
        %v4932 = vadd.f32 0.0, %v4931
        %v4933 = vpop.f32.mrf.mxu0
        %4934 = vmatprep.mubr.f32.mxu0 %v4381
        %4935 = vmatmul.mubr.f32.gmra.mxu0 %v3479
        %v4936 = vpop.f32.mrf.mxu0
        %v4937 = vadd.f32 0.0, %v4936
        %v4938 = vpop.f32.mrf.mxu0
        %4939 = vmatprep.mubr.f32.mxu0 %v4678
        %4940 = vmatmul.mubr.f32.gmra.mxu0 %v3481
        %v4941 = vpop.f32.mrf.mxu0
        %v4942 = vadd.f32 0.0, %v4941
        %v4943 = vpop.f32.mrf.mxu0
        %4944 = vdwg.mxu0
        %v4945 = vadd.f32 %v4648, %v4897
        %v4946 = vadd.f32 %v4649, %v4902
        %v4947 = vadd.f32 %v4650, %v4907
        %v4948 = vadd.f32 %v4651, %v4912
        %v4949 = vadd.f32 %v4652, %v4917
        %v4950 = vadd.f32 %v4653, %v4922
        %v4951 = vadd.f32 %v4654, %v4927
        %v4952 = vadd.f32 %v4655, %v4932
        %v4953 = vadd.f32 %v4656, %v4937
        %v4954 = vadd.f32 %v4657, %v4942
        %v4955 = vmax.f32 %v4798, %v4945
        %v4956 = vmax.f32 %v4799, %v4946
        %v4957 = vmax.f32 %v4800, %v4947
        %v4958 = vmax.f32 %v4801, %v4948
        %v4959 = vmax.f32 %v4802, %v4949
        %v4960 = vmax.f32 %v4803, %v4950
        %v4961 = vmax.f32 %v4804, %v4951
        %v4962 = vmax.f32 %v4805, %v4952
        %v4963 = vmax.f32 %v4806, %v4953
        %v4964 = vmax.f32 %v4807, %v4954
        %v4965 = vmax.f32 %v4955, %v4956
        %v4966 = vmax.f32 %v4957, %v4958
        %v4967 = vmax.f32 %v4959, %v4960
        %v4968 = vmax.f32 %v4961, %v4962
        %v4969 = vmax.f32 %v4963, %v4964
        %v4970 = vld [vmem:[%s6] sm:$0x1]
        %v4972 = vlaneseq
        %v4973 = vshrl.u32 %v4972, 7
        %v4974 = vsub.s32 0, %v4973
        %v4975 = vrot.slane %v4970, %v4974
        %v4977 = vadd.f32 %v4965, %v4975
        %v4978 = vadd.f32 %v4966, %v4975
        %v4979 = vadd.f32 %v4967, %v4975
        %v4980 = vadd.f32 %v4968, %v4975
        %v4981 = vadd.f32 %v4969, %v4975
        %v4982 = vmax.f32 %v4977, 0.0
        %v4983 = vmax.f32 %v4978, 0.0
        %v4984 = vmax.f32 %v4979, 0.0
        %v4985 = vmax.f32 %v4980, 0.0
        %v4986 = vmax.f32 %v4981, 0.0
        %v4987 = vld [vmem:[%s7] sm:$0xff]
        %v4988 = vld [vmem:[%s7 + $0x8] sm:$0xff]
        %v4989 = vld [vmem:[%s7 + $0x10] sm:$0xff]
        %v4990 = vld [vmem:[%s7 + $0x18] sm:$0xff]
        %v4991 = vld [vmem:[%s7 + $0x20] sm:$0xff]
        %v4992 = vld [vmem:[%s7 + $0x28] sm:$0xff]
        %v4993 = vld [vmem:[%s7 + $0x30] sm:$0xff]
        %v4994 = vld [vmem:[%s7 + $0x38] sm:$0xff]
        %v4995 = vld [vmem:[%s7 + $0x40] sm:$0xff]
        %v4996 = vld [vmem:[%s7 + $0x48] sm:$0xff]
        %v4997 = vld [vmem:[%s7 + $0x50] sm:$0xff]
        %v4998 = vld [vmem:[%s7 + $0x58] sm:$0xff]
        %v4999 = vld [vmem:[%s7 + $0x60] sm:$0xf]
        %s5000 = scalar_lea.vmem %s7, 104
        %v5001 = vld [vmem:[%s5000] sm:$0xff]
        %v5002 = vld [vmem:[%s5000 + $0x8] sm:$0xff]
        %v5003 = vld [vmem:[%s5000 + $0x10] sm:$0xff]
        %v5004 = vld [vmem:[%s5000 + $0x18] sm:$0xff]
        %v5005 = vld [vmem:[%s5000 + $0x20] sm:$0xff]
        %v5006 = vld [vmem:[%s5000 + $0x28] sm:$0xff]
        %v5007 = vld [vmem:[%s5000 + $0x30] sm:$0xff]
        %v5008 = vld [vmem:[%s5000 + $0x38] sm:$0xff]
        %v5009 = vld [vmem:[%s5000 + $0x40] sm:$0xff]
        %v5010 = vld [vmem:[%s5000 + $0x48] sm:$0xff]
        %v5011 = vld [vmem:[%s5000 + $0x50] sm:$0xff]
        %v5012 = vld [vmem:[%s5000 + $0x58] sm:$0xff]
        %v5013 = vld [vmem:[%s5000 + $0x60] sm:$0xf]
        %vm5014 = vcmask 818176
        %v5016 = vsel %vm5014, %v4983, 0
        %v5019 = vsel %vm3569, %v5013, 0
        %5021 = vmatprep.subr.mxu0 0.0
        %5022 = vmatpush1.msra.mxu0 0.0
        %5023 = vmatprep.subr.mxu0 0.0
        %5024 = vmatpush1.msra.mxu0 0.0
        %5025 = vmatprep.subr.mxu0 0.0
        %5026 = vmatpush1.msra.mxu0 0.0
        %5027 = vmatprep.subr.mxu0 0.0
        %5028 = vmatpush1.msra.mxu0 %v5019
        %5029 = vmatprep.subr.mxu0 0.0
        %5030 = vmatpush1.msra.mxu0 %v5012
        %5031 = vmatprep.subr.mxu0 0.0
        %5032 = vmatpush1.msra.mxu0 %v5011
        %5033 = vmatprep.subr.mxu0 0.0
        %5034 = vmatpush1.msra.mxu0 %v5010
        %5035 = vmatprep.subr.mxu0 0.0
        %5036 = vmatpush1.msra.mxu0 %v5009
        %5037 = vmatprep.subr.mxu0 0.0
        %5038 = vmatpush1.msra.mxu0 %v5008
        %5039 = vmatprep.subr.mxu0 0.0
        %5040 = vmatpush1.msra.mxu0 %v5007
        %5041 = vmatprep.subr.mxu0 0.0
        %5042 = vmatpush1.msra.mxu0 %v5006
        %5043 = vmatprep.subr.mxu0 0.0
        %5044 = vmatpush1.msra.mxu0 %v5005
        %5045 = vmatprep.subr.mxu0 0.0
        %5046 = vmatpush1.msra.mxu0 %v5004
        %5047 = vmatprep.subr.mxu0 0.0
        %5048 = vmatpush1.msra.mxu0 %v5003
        %5049 = vmatprep.subr.mxu0 0.0
        %5050 = vmatpush1.msra.mxu0 %v5002
        %5051 = vmatprep.subr.mxu0 0.0
        %5052 = vmatpush1.msra.mxu0 %v5001
        %5053 = vmatprep.subr.mxu0 0.0
        %5054 = vmatpush2.msra.mxu0 0.0
        %5055 = vmatprep.subr.mxu0 0.0
        %5056 = vmatpush2.msra.mxu0 0.0
        %5057 = vmatprep.subr.mxu0 0.0
        %5058 = vmatpush2.msra.mxu0 0.0
        %5059 = vmatprep.subr.mxu0 0.0
        %5060 = vmatpush2.msra.mxu0 0.0
        %5061 = vmatprep.subr.mxu0 0.0
        %5062 = vmatpush2.msra.mxu0 0.0
        %5063 = vmatprep.subr.mxu0 0.0
        %5064 = vmatpush2.msra.mxu0 0.0
        %5065 = vmatprep.subr.mxu0 0.0
        %5066 = vmatpush2.msra.mxu0 0.0
        %5067 = vmatprep.subr.mxu0 0.0
        %5068 = vmatpush2.msra.mxu0 0.0
        %5069 = vmatprep.subr.mxu0 0.0
        %5070 = vmatpush2.msra.mxu0 0.0
        %5071 = vmatprep.subr.mxu0 0.0
        %5072 = vmatpush2.msra.mxu0 0.0
        %5073 = vmatprep.subr.mxu0 0.0
        %5074 = vmatpush2.msra.mxu0 0.0
        %5075 = vmatprep.subr.mxu0 0.0
        %5076 = vmatpush2.msra.mxu0 0.0
        %5077 = vmatprep.subr.mxu0 0.0
        %5078 = vmatpush2.msra.mxu0 0.0
        %5079 = vmatprep.subr.mxu0 0.0
        %5080 = vmatpush2.msra.mxu0 0.0
        %5081 = vmatprep.subr.mxu0 0.0
        %5082 = vmatpush2.msra.mxu0 0.0
        %5083 = vmatprep.subr.mxu0 0.0
        %5084 = vmatpush2.msra.mxu0 0.0
        %5085 = vmatprep.mubr.f32.mxu0 0.0
        %5086 = vmatmul.mubr.f32.gmra.mxu0 %v5016
        %v5087 = vpop.f32.mrf.mxu0
        %v5088 = vadd.f32 0.0, %v5087
        %v5089 = vpop.f32.mrf.mxu0
        %5090 = vdwg.mxu0
        %v5092 = vsel %vm5014, %v4982, 0
        %v5095 = vsel %vm3569, %v4999, 0
        %5097 = vmatprep.subr.mxu0 0.0
        %5098 = vmatpush1.msra.mxu0 0.0
        %5099 = vmatprep.subr.mxu0 0.0
        %5100 = vmatpush1.msra.mxu0 0.0
        %5101 = vmatprep.subr.mxu0 0.0
        %5102 = vmatpush1.msra.mxu0 0.0
        %5103 = vmatprep.subr.mxu0 0.0
        %5104 = vmatpush1.msra.mxu0 %v5095
        %5105 = vmatprep.subr.mxu0 0.0
        %5106 = vmatpush1.msra.mxu0 %v4998
        %5107 = vmatprep.subr.mxu0 0.0
        %5108 = vmatpush1.msra.mxu0 %v4997
        %5109 = vmatprep.subr.mxu0 0.0
        %5110 = vmatpush1.msra.mxu0 %v4996
        %5111 = vmatprep.subr.mxu0 0.0
        %5112 = vmatpush1.msra.mxu0 %v4995
        %5113 = vmatprep.subr.mxu0 0.0
        %5114 = vmatpush1.msra.mxu0 %v4994
        %5115 = vmatprep.subr.mxu0 0.0
        %5116 = vmatpush1.msra.mxu0 %v4993
        %5117 = vmatprep.subr.mxu0 0.0
        %5118 = vmatpush1.msra.mxu0 %v4992
        %5119 = vmatprep.subr.mxu0 0.0
        %5120 = vmatpush1.msra.mxu0 %v4991
        %5121 = vmatprep.subr.mxu0 0.0
        %5122 = vmatpush1.msra.mxu0 %v4990
        %5123 = vmatprep.subr.mxu0 0.0
        %5124 = vmatpush1.msra.mxu0 %v4989
        %5125 = vmatprep.subr.mxu0 0.0
        %5126 = vmatpush1.msra.mxu0 %v4988
        %5127 = vmatprep.subr.mxu0 0.0
        %5128 = vmatpush1.msra.mxu0 %v4987
        %5129 = vmatprep.subr.mxu0 0.0
        %5130 = vmatpush2.msra.mxu0 0.0
        %5131 = vmatprep.subr.mxu0 0.0
        %5132 = vmatpush2.msra.mxu0 0.0
        %5133 = vmatprep.subr.mxu0 0.0
        %5134 = vmatpush2.msra.mxu0 0.0
        %5135 = vmatprep.subr.mxu0 0.0
        %5136 = vmatpush2.msra.mxu0 0.0
        %5137 = vmatprep.subr.mxu0 0.0
        %5138 = vmatpush2.msra.mxu0 0.0
        %5139 = vmatprep.subr.mxu0 0.0
        %5140 = vmatpush2.msra.mxu0 0.0
        %5141 = vmatprep.subr.mxu0 0.0
        %5142 = vmatpush2.msra.mxu0 0.0
        %5143 = vmatprep.subr.mxu0 0.0
        %5144 = vmatpush2.msra.mxu0 0.0
        %5145 = vmatprep.subr.mxu0 0.0
        %5146 = vmatpush2.msra.mxu0 0.0
        %5147 = vmatprep.subr.mxu0 0.0
        %5148 = vmatpush2.msra.mxu0 0.0
        %5149 = vmatprep.subr.mxu0 0.0
        %5150 = vmatpush2.msra.mxu0 0.0
        %5151 = vmatprep.subr.mxu0 0.0
        %5152 = vmatpush2.msra.mxu0 0.0
        %5153 = vmatprep.subr.mxu0 0.0
        %5154 = vmatpush2.msra.mxu0 0.0
        %5155 = vmatprep.subr.mxu0 0.0
        %5156 = vmatpush2.msra.mxu0 0.0
        %5157 = vmatprep.subr.mxu0 0.0
        %5158 = vmatpush2.msra.mxu0 0.0
        %5159 = vmatprep.subr.mxu0 0.0
        %5160 = vmatpush2.msra.mxu0 0.0
        %5161 = vmatprep.mubr.f32.mxu0 0.0
        %5162 = vmatmul.mubr.f32.gmra.mxu0 %v5092
        %v5163 = vpop.f32.mrf.mxu0
        %v5164 = vadd.f32 %v5088, %v5163
        %v5165 = vpop.f32.mrf.mxu0
        %5166 = vdwg.mxu0
        %s5167 = scalar_lea.vmem %s7, 208
        %v5168 = vld [vmem:[%s5167] sm:$0xff]
        %v5169 = vld [vmem:[%s5167 + $0x8] sm:$0xff]
        %v5170 = vld [vmem:[%s5167 + $0x10] sm:$0xff]
        %v5171 = vld [vmem:[%s5167 + $0x18] sm:$0xff]
        %v5172 = vld [vmem:[%s5167 + $0x20] sm:$0xff]
        %v5173 = vld [vmem:[%s5167 + $0x28] sm:$0xff]
        %v5174 = vld [vmem:[%s5167 + $0x30] sm:$0xff]
        %v5175 = vld [vmem:[%s5167 + $0x38] sm:$0xff]
        %v5176 = vld [vmem:[%s5167 + $0x40] sm:$0xff]
        %v5177 = vld [vmem:[%s5167 + $0x48] sm:$0xff]
        %v5178 = vld [vmem:[%s5167 + $0x50] sm:$0xff]
        %v5179 = vld [vmem:[%s5167 + $0x58] sm:$0xff]
        %v5180 = vld [vmem:[%s5167 + $0x60] sm:$0xf]
        %v5182 = vsel %vm5014, %v4984, 0
        %v5185 = vsel %vm3569, %v5180, 0
        %5187 = vmatprep.subr.mxu0 0.0
        %5188 = vmatpush1.msra.mxu0 0.0
        %5189 = vmatprep.subr.mxu0 0.0
        %5190 = vmatpush1.msra.mxu0 0.0
        %5191 = vmatprep.subr.mxu0 0.0
        %5192 = vmatpush1.msra.mxu0 0.0
        %5193 = vmatprep.subr.mxu0 0.0
        %5194 = vmatpush1.msra.mxu0 %v5185
        %5195 = vmatprep.subr.mxu0 0.0
        %5196 = vmatpush1.msra.mxu0 %v5179
        %5197 = vmatprep.subr.mxu0 0.0
        %5198 = vmatpush1.msra.mxu0 %v5178
        %5199 = vmatprep.subr.mxu0 0.0
        %5200 = vmatpush1.msra.mxu0 %v5177
        %5201 = vmatprep.subr.mxu0 0.0
        %5202 = vmatpush1.msra.mxu0 %v5176
        %5203 = vmatprep.subr.mxu0 0.0
        %5204 = vmatpush1.msra.mxu0 %v5175
        %5205 = vmatprep.subr.mxu0 0.0
        %5206 = vmatpush1.msra.mxu0 %v5174
        %5207 = vmatprep.subr.mxu0 0.0
        %5208 = vmatpush1.msra.mxu0 %v5173
        %5209 = vmatprep.subr.mxu0 0.0
        %5210 = vmatpush1.msra.mxu0 %v5172
        %5211 = vmatprep.subr.mxu0 0.0
        %5212 = vmatpush1.msra.mxu0 %v5171
        %5213 = vmatprep.subr.mxu0 0.0
        %5214 = vmatpush1.msra.mxu0 %v5170
        %5215 = vmatprep.subr.mxu0 0.0
        %5216 = vmatpush1.msra.mxu0 %v5169
        %5217 = vmatprep.subr.mxu0 0.0
        %5218 = vmatpush1.msra.mxu0 %v5168
        %5219 = vmatprep.subr.mxu0 0.0
        %5220 = vmatpush2.msra.mxu0 0.0
        %5221 = vmatprep.subr.mxu0 0.0
        %5222 = vmatpush2.msra.mxu0 0.0
        %5223 = vmatprep.subr.mxu0 0.0
        %5224 = vmatpush2.msra.mxu0 0.0
        %5225 = vmatprep.subr.mxu0 0.0
        %5226 = vmatpush2.msra.mxu0 0.0
        %5227 = vmatprep.subr.mxu0 0.0
        %5228 = vmatpush2.msra.mxu0 0.0
        %5229 = vmatprep.subr.mxu0 0.0
        %5230 = vmatpush2.msra.mxu0 0.0
        %5231 = vmatprep.subr.mxu0 0.0
        %5232 = vmatpush2.msra.mxu0 0.0
        %5233 = vmatprep.subr.mxu0 0.0
        %5234 = vmatpush2.msra.mxu0 0.0
        %5235 = vmatprep.subr.mxu0 0.0
        %5236 = vmatpush2.msra.mxu0 0.0
        %5237 = vmatprep.subr.mxu0 0.0
        %5238 = vmatpush2.msra.mxu0 0.0
        %5239 = vmatprep.subr.mxu0 0.0
        %5240 = vmatpush2.msra.mxu0 0.0
        %5241 = vmatprep.subr.mxu0 0.0
        %5242 = vmatpush2.msra.mxu0 0.0
        %5243 = vmatprep.subr.mxu0 0.0
        %5244 = vmatpush2.msra.mxu0 0.0
        %5245 = vmatprep.subr.mxu0 0.0
        %5246 = vmatpush2.msra.mxu0 0.0
        %5247 = vmatprep.subr.mxu0 0.0
        %5248 = vmatpush2.msra.mxu0 0.0
        %5249 = vmatprep.subr.mxu0 0.0
        %5250 = vmatpush2.msra.mxu0 0.0
        %5251 = vmatprep.mubr.f32.mxu0 0.0
        %5252 = vmatmul.mubr.f32.gmra.mxu0 %v5182
        %v5253 = vpop.f32.mrf.mxu0
        %v5254 = vadd.f32 0.0, %v5253
        %v5255 = vpop.f32.mrf.mxu0
        %5256 = vdwg.mxu0
        %v5257 = vadd.f32 %v5164, %v5254
        %s5258 = scalar_lea.vmem %s7, 312
        %v5259 = vld [vmem:[%s5258] sm:$0xff]
        %v5260 = vld [vmem:[%s5258 + $0x8] sm:$0xff]
        %v5261 = vld [vmem:[%s5258 + $0x10] sm:$0xff]
        %v5262 = vld [vmem:[%s5258 + $0x18] sm:$0xff]
        %v5263 = vld [vmem:[%s5258 + $0x20] sm:$0xff]
        %v5264 = vld [vmem:[%s5258 + $0x28] sm:$0xff]
        %v5265 = vld [vmem:[%s5258 + $0x30] sm:$0xff]
        %v5266 = vld [vmem:[%s5258 + $0x38] sm:$0xff]
        %v5267 = vld [vmem:[%s5258 + $0x40] sm:$0xff]
        %v5268 = vld [vmem:[%s5258 + $0x48] sm:$0xff]
        %v5269 = vld [vmem:[%s5258 + $0x50] sm:$0xff]
        %v5270 = vld [vmem:[%s5258 + $0x58] sm:$0xff]
        %v5271 = vld [vmem:[%s5258 + $0x60] sm:$0xf]
        %v5273 = vsel %vm5014, %v4985, 0
        %v5276 = vsel %vm3569, %v5271, 0
        %5278 = vmatprep.subr.mxu0 0.0
        %5279 = vmatpush1.msra.mxu0 0.0
        %5280 = vmatprep.subr.mxu0 0.0
        %5281 = vmatpush1.msra.mxu0 0.0
        %5282 = vmatprep.subr.mxu0 0.0
        %5283 = vmatpush1.msra.mxu0 0.0
        %5284 = vmatprep.subr.mxu0 0.0
        %5285 = vmatpush1.msra.mxu0 %v5276
        %5286 = vmatprep.subr.mxu0 0.0
        %5287 = vmatpush1.msra.mxu0 %v5270
        %5288 = vmatprep.subr.mxu0 0.0
        %5289 = vmatpush1.msra.mxu0 %v5269
        %5290 = vmatprep.subr.mxu0 0.0
        %5291 = vmatpush1.msra.mxu0 %v5268
        %5292 = vmatprep.subr.mxu0 0.0
        %5293 = vmatpush1.msra.mxu0 %v5267
        %5294 = vmatprep.subr.mxu0 0.0
        %5295 = vmatpush1.msra.mxu0 %v5266
        %5296 = vmatprep.subr.mxu0 0.0
        %5297 = vmatpush1.msra.mxu0 %v5265
        %5298 = vmatprep.subr.mxu0 0.0
        %5299 = vmatpush1.msra.mxu0 %v5264
        %5300 = vmatprep.subr.mxu0 0.0
        %5301 = vmatpush1.msra.mxu0 %v5263
        %5302 = vmatprep.subr.mxu0 0.0
        %5303 = vmatpush1.msra.mxu0 %v5262
        %5304 = vmatprep.subr.mxu0 0.0
        %5305 = vmatpush1.msra.mxu0 %v5261
        %5306 = vmatprep.subr.mxu0 0.0
        %5307 = vmatpush1.msra.mxu0 %v5260
        %5308 = vmatprep.subr.mxu0 0.0
        %5309 = vmatpush1.msra.mxu0 %v5259
        %5310 = vmatprep.subr.mxu0 0.0
        %5311 = vmatpush2.msra.mxu0 0.0
        %5312 = vmatprep.subr.mxu0 0.0
        %5313 = vmatpush2.msra.mxu0 0.0
        %5314 = vmatprep.subr.mxu0 0.0
        %5315 = vmatpush2.msra.mxu0 0.0
        %5316 = vmatprep.subr.mxu0 0.0
        %5317 = vmatpush2.msra.mxu0 0.0
        %5318 = vmatprep.subr.mxu0 0.0
        %5319 = vmatpush2.msra.mxu0 0.0
        %5320 = vmatprep.subr.mxu0 0.0
        %5321 = vmatpush2.msra.mxu0 0.0
        %5322 = vmatprep.subr.mxu0 0.0
        %5323 = vmatpush2.msra.mxu0 0.0
        %5324 = vmatprep.subr.mxu0 0.0
        %5325 = vmatpush2.msra.mxu0 0.0
        %5326 = vmatprep.subr.mxu0 0.0
        %5327 = vmatpush2.msra.mxu0 0.0
        %5328 = vmatprep.subr.mxu0 0.0
        %5329 = vmatpush2.msra.mxu0 0.0
        %5330 = vmatprep.subr.mxu0 0.0
        %5331 = vmatpush2.msra.mxu0 0.0
        %5332 = vmatprep.subr.mxu0 0.0
        %5333 = vmatpush2.msra.mxu0 0.0
        %5334 = vmatprep.subr.mxu0 0.0
        %5335 = vmatpush2.msra.mxu0 0.0
        %5336 = vmatprep.subr.mxu0 0.0
        %5337 = vmatpush2.msra.mxu0 0.0
        %5338 = vmatprep.subr.mxu0 0.0
        %5339 = vmatpush2.msra.mxu0 0.0
        %5340 = vmatprep.subr.mxu0 0.0
        %5341 = vmatpush2.msra.mxu0 0.0
        %5342 = vmatprep.mubr.f32.mxu0 0.0
        %5343 = vmatmul.mubr.f32.gmra.mxu0 %v5273
        %v5344 = vpop.f32.mrf.mxu0
        %v5345 = vadd.f32 0.0, %v5344
        %v5346 = vpop.f32.mrf.mxu0
        %5347 = vdwg.mxu0
        %v5348 = vadd.f32 %v5257, %v5345
        %s5349 = scalar_lea.vmem %s7, 416
        %v5350 = vld [vmem:[%s5349] sm:$0xff]
        %v5351 = vld [vmem:[%s5349 + $0x8] sm:$0xff]
        %v5352 = vld [vmem:[%s5349 + $0x10] sm:$0xff]
        %v5353 = vld [vmem:[%s5349 + $0x18] sm:$0xff]
        %v5354 = vld [vmem:[%s5349 + $0x20] sm:$0xff]
        %v5355 = vld [vmem:[%s5349 + $0x28] sm:$0xff]
        %v5356 = vld [vmem:[%s5349 + $0x30] sm:$0xff]
        %v5357 = vld [vmem:[%s5349 + $0x38] sm:$0xff]
        %v5358 = vld [vmem:[%s5349 + $0x40] sm:$0xff]
        %v5359 = vld [vmem:[%s5349 + $0x48] sm:$0xff]
        %v5360 = vld [vmem:[%s5349 + $0x50] sm:$0xff]
        %v5361 = vld [vmem:[%s5349 + $0x58] sm:$0xff]
        %v5362 = vld [vmem:[%s5349 + $0x60] sm:$0xf]
        %v5364 = vsel %vm5014, %v4986, 0
        %v5367 = vsel %vm3569, %v5362, 0
        %5369 = vmatprep.subr.mxu0 0.0
        %5370 = vmatpush1.msra.mxu0 0.0
        %5371 = vmatprep.subr.mxu0 0.0
        %5372 = vmatpush1.msra.mxu0 0.0
        %5373 = vmatprep.subr.mxu0 0.0
        %5374 = vmatpush1.msra.mxu0 0.0
        %5375 = vmatprep.subr.mxu0 0.0
        %5376 = vmatpush1.msra.mxu0 %v5367
        %5377 = vmatprep.subr.mxu0 0.0
        %5378 = vmatpush1.msra.mxu0 %v5361
        %5379 = vmatprep.subr.mxu0 0.0
        %5380 = vmatpush1.msra.mxu0 %v5360
        %5381 = vmatprep.subr.mxu0 0.0
        %5382 = vmatpush1.msra.mxu0 %v5359
        %5383 = vmatprep.subr.mxu0 0.0
        %5384 = vmatpush1.msra.mxu0 %v5358
        %5385 = vmatprep.subr.mxu0 0.0
        %5386 = vmatpush1.msra.mxu0 %v5357
        %5387 = vmatprep.subr.mxu0 0.0
        %5388 = vmatpush1.msra.mxu0 %v5356
        %5389 = vmatprep.subr.mxu0 0.0
        %5390 = vmatpush1.msra.mxu0 %v5355
        %5391 = vmatprep.subr.mxu0 0.0
        %5392 = vmatpush1.msra.mxu0 %v5354
        %5393 = vmatprep.subr.mxu0 0.0
        %5394 = vmatpush1.msra.mxu0 %v5353
        %5395 = vmatprep.subr.mxu0 0.0
        %5396 = vmatpush1.msra.mxu0 %v5352
        %5397 = vmatprep.subr.mxu0 0.0
        %5398 = vmatpush1.msra.mxu0 %v5351
        %5399 = vmatprep.subr.mxu0 0.0
        %5400 = vmatpush1.msra.mxu0 %v5350
        %5401 = vmatprep.subr.mxu0 0.0
        %5402 = vmatpush2.msra.mxu0 0.0
        %5403 = vmatprep.subr.mxu0 0.0
        %5404 = vmatpush2.msra.mxu0 0.0
        %5405 = vmatprep.subr.mxu0 0.0
        %5406 = vmatpush2.msra.mxu0 0.0
        %5407 = vmatprep.subr.mxu0 0.0
        %5408 = vmatpush2.msra.mxu0 0.0
        %5409 = vmatprep.subr.mxu0 0.0
        %5410 = vmatpush2.msra.mxu0 0.0
        %5411 = vmatprep.subr.mxu0 0.0
        %5412 = vmatpush2.msra.mxu0 0.0
        %5413 = vmatprep.subr.mxu0 0.0
        %5414 = vmatpush2.msra.mxu0 0.0
        %5415 = vmatprep.subr.mxu0 0.0
        %5416 = vmatpush2.msra.mxu0 0.0
        %5417 = vmatprep.subr.mxu0 0.0
        %5418 = vmatpush2.msra.mxu0 0.0
        %5419 = vmatprep.subr.mxu0 0.0
        %5420 = vmatpush2.msra.mxu0 0.0
        %5421 = vmatprep.subr.mxu0 0.0
        %5422 = vmatpush2.msra.mxu0 0.0
        %5423 = vmatprep.subr.mxu0 0.0
        %5424 = vmatpush2.msra.mxu0 0.0
        %5425 = vmatprep.subr.mxu0 0.0
        %5426 = vmatpush2.msra.mxu0 0.0
        %5427 = vmatprep.subr.mxu0 0.0
        %5428 = vmatpush2.msra.mxu0 0.0
        %5429 = vmatprep.subr.mxu0 0.0
        %5430 = vmatpush2.msra.mxu0 0.0
        %5431 = vmatprep.subr.mxu0 0.0
        %5432 = vmatpush2.msra.mxu0 0.0
        %5433 = vmatprep.mubr.f32.mxu0 0.0
        %5434 = vmatmul.mubr.f32.gmra.mxu0 %v5364
        %v5435 = vpop.f32.mrf.mxu0
        %v5436 = vadd.f32 0.0, %v5435
        %v5437 = vpop.f32.mrf.mxu0
        %5438 = vdwg.mxu0
        %v5439 = vadd.f32 %v5348, %v5436
        %v5440 = vld [vmem:[%s8] sm:$0x1]
        %v5442 = vlaneseq
        %v5443 = vshrl.u32 %v5442, 7
        %v5444 = vsub.s32 0, %v5443
        %v5445 = vrot.slane %v5440, %v5444
        %v5447 = vadd.f32 %v5439, %v5445
        %v5448 = vsub.f32 0.0, %v5447
        %v5449 = vmul.f32 %v5448, 1.442695
        %v5450 = vpow.pop %v5449
        %v5451 = vadd.f32 %v5450, 1.0
        %v5452 = vrcp.pop %v5451
        %v5453 = vmul.f32 1.0, %v5452
        %v5454 = vld [vmem:[%s9] sm:$0xff]
        %v5455 = vld [vmem:[%s9 + $0x8] sm:$0xff]
        %v5456 = vld [vmem:[%s9 + $0x10] sm:$0xff]
        %v5457 = vld [vmem:[%s9 + $0x18] sm:$0xff]
        %v5458 = vld [vmem:[%s9 + $0x20] sm:$0xff]
        %v5459 = vld [vmem:[%s9 + $0x28] sm:$0xff]
        %v5460 = vld [vmem:[%s9 + $0x30] sm:$0xff]
        %v5461 = vld [vmem:[%s9 + $0x38] sm:$0xff]
        %v5462 = vld [vmem:[%s10] sm:$0x1]
        %v5464 = vlaneseq
        %v5465 = vshrl.u32 %v5464, 7
        %v5466 = vsub.s32 0, %v5465
        %v5467 = vrot.slane %v5462, %v5466
        %vm5469 = vcmask 523264
        %v5471 = vsel %vm5469, %v5453, 0
        %5473 = vmatprep.subr.mxu0 0.0
        %5474 = vmatpush1.msra.mxu0 0.0
        %5475 = vmatprep.subr.mxu0 0.0
        %5476 = vmatpush1.msra.mxu0 0.0
        %5477 = vmatprep.subr.mxu0 0.0
        %5478 = vmatpush1.msra.mxu0 0.0
        %5479 = vmatprep.subr.mxu0 0.0
        %5480 = vmatpush1.msra.mxu0 0.0
        %5481 = vmatprep.subr.mxu0 0.0
        %5482 = vmatpush1.msra.mxu0 0.0
        %5483 = vmatprep.subr.mxu0 0.0
        %5484 = vmatpush1.msra.mxu0 0.0
        %5485 = vmatprep.subr.mxu0 0.0
        %5486 = vmatpush1.msra.mxu0 0.0
        %5487 = vmatprep.subr.mxu0 0.0
        %5488 = vmatpush1.msra.mxu0 0.0
        %5489 = vmatprep.subr.mxu0 0.0
        %5490 = vmatpush1.msra.mxu0 %v5461
        %5491 = vmatprep.subr.mxu0 0.0
        %5492 = vmatpush1.msra.mxu0 %v5460
        %5493 = vmatprep.subr.mxu0 0.0
        %5494 = vmatpush1.msra.mxu0 %v5459
        %5495 = vmatprep.subr.mxu0 0.0
        %5496 = vmatpush1.msra.mxu0 %v5458
        %5497 = vmatprep.subr.mxu0 0.0
        %5498 = vmatpush1.msra.mxu0 %v5457
        %5499 = vmatprep.subr.mxu0 0.0
        %5500 = vmatpush1.msra.mxu0 %v5456
        %5501 = vmatprep.subr.mxu0 0.0
        %5502 = vmatpush1.msra.mxu0 %v5455
        %5503 = vmatprep.subr.mxu0 0.0
        %5504 = vmatpush1.msra.mxu0 %v5454
        %5505 = vmatprep.subr.mxu0 0.0
        %5506 = vmatpush2.msra.mxu0 0.0
        %5507 = vmatprep.subr.mxu0 0.0
        %5508 = vmatpush2.msra.mxu0 0.0
        %5509 = vmatprep.subr.mxu0 0.0
        %5510 = vmatpush2.msra.mxu0 0.0
        %5511 = vmatprep.subr.mxu0 0.0
        %5512 = vmatpush2.msra.mxu0 0.0
        %5513 = vmatprep.subr.mxu0 0.0
        %5514 = vmatpush2.msra.mxu0 0.0
        %5515 = vmatprep.subr.mxu0 0.0
        %5516 = vmatpush2.msra.mxu0 0.0
        %5517 = vmatprep.subr.mxu0 0.0
        %5518 = vmatpush2.msra.mxu0 0.0
        %5519 = vmatprep.subr.mxu0 0.0
        %5520 = vmatpush2.msra.mxu0 0.0
        %5521 = vmatprep.subr.mxu0 0.0
        %5522 = vmatpush2.msra.mxu0 0.0
        %5523 = vmatprep.subr.mxu0 0.0
        %5524 = vmatpush2.msra.mxu0 0.0
        %5525 = vmatprep.subr.mxu0 0.0
        %5526 = vmatpush2.msra.mxu0 0.0
        %5527 = vmatprep.subr.mxu0 0.0
        %5528 = vmatpush2.msra.mxu0 0.0
        %5529 = vmatprep.subr.mxu0 0.0
        %5530 = vmatpush2.msra.mxu0 0.0
        %5531 = vmatprep.subr.mxu0 0.0
        %5532 = vmatpush2.msra.mxu0 0.0
        %5533 = vmatprep.subr.mxu0 0.0
        %5534 = vmatpush2.msra.mxu0 0.0
        %5535 = vmatprep.subr.mxu0 0.0
        %5536 = vmatpush2.msra.mxu0 0.0
        %5537 = vmatprep.mubr.f32.mxu0 0.0
        %5538 = vmatmul.mubr.f32.gmra.mxu0 %v5471
        %v5539 = vpop.f32.mrf.mxu0
        %v5540 = vadd.f32 %v5467, %v5539
        %v5541 = vpop.f32.mrf.mxu0
        %5542 = vdwg.mxu0
        %5543 = vst [vmem:[%s447] sm:$0xff] %v5540
        %s5544 = sand.u32 %s274, 1
        %s5545 = scalar_lea.sflag [#allocation4], %s5544
        %s5546 = sand.u32 %s274, 1
        %s5547 = smul.addr %s5546, 8
        %s5548 = scalar_lea.vmem [#allocation10], %s5547
        // Predicated region
        $region81: #{tpu_custom_call.1} parent=63 // pred_check
          %p5549 = pneg %p284
        $region82: #{tpu_custom_call.1} parent=63 // pred_check_branch
          %5551 = sbr.rel (%p5549) target = $region84
        $region83: #{tpu_custom_call.1} parent=63 // pred_region
          %s5553 = ssub.s32 128, 128
          %5554 = vsyncadd %s5545, %s5553
          %s5555 = smul.addr %s30, 128
          %s5556 = scalar_lea.hbm %s11, %s5555
          %s5558 = sshll.u32 %s5548, 4
          %s5559 = int_to_ptr.vmem [resolvable:$true] %s5558
          %5561 = dma.vmem_to_hbm [thread:$0]  %s5559, 128, %s5556, %s5545
        $region84: #{tpu_custom_call.1} parent=63 // pred_fallthru
          _
      $region64: #{tpu_custom_call.1} parent=5 // pred_fallthru
        _
      %p5562 = scmp.le.s32.totalorder 2, %s25
      // Predicated region
      $region85: #{tpu_custom_call.1} parent=5 // pred_check
        %p5563 = pneg %p5562
      $region86: #{tpu_custom_call.1} parent=5 // pred_check_branch
        %5565 = sbr.rel (%p5563) target = $region88
      $region87: #{tpu_custom_call.1} parent=5 // pred_region
        %s5566 = ssub.s32 %s25, 2
        // Predicated region
        $region89: #{tpu_custom_call.1} parent=87 // pred_check
          %p5567 = pneg %p290
        $region90: #{tpu_custom_call.1} parent=87 // pred_check_branch
          %5569 = sbr.rel (%p5567) target = $region92
        $region91: #{tpu_custom_call.1} parent=87 // pred_region
          %s5570 = sand.u32 %s275, 1
          %s5571 = scalar_lea.sflag [#allocation4], %s5570
          %s5572 = sand.u32 %s275, 1
          %s5573 = smul.addr %s5572, 8
          %s5574 = scalar_lea.vmem [#allocation10], %s5573
          %5575 = dma.done %s5571, 128
        $region92: #{tpu_custom_call.1} parent=87 // pred_fallthru
          _
      $region88: #{tpu_custom_call.1} parent=5 // pred_fallthru
        _
    $region6: #{tpu_custom_call.1} parent=1 // loop_footer
      %s29 = sadd.s32 1, %s25
    $region7: #{tpu_custom_call.1} parent=1 // loop_footer_branch
      %24 = sbr.rel target = $region3
    $region8: #{tpu_custom_call.1} parent=1 // loop_exit
      _
    %5576 = vsyncpa [#allocation3], 1
    %s5577 = scalar_lea.sflag [#allocation3], 1
    %5578 = vsyncpa %s5577, 1
    %5579 = vsyncpa [#allocation6], 1
    %5580 = vsyncpa [#allocation9], 1
    %5581 = vsyncpa [#allocation4], 1
    %s5582 = scalar_lea.sflag [#allocation4], 1
    %5583 = vsyncpa %s5582, 1

</llo_original>
